<compile_context>
chip_gen: v7x
topology: tpu7x:2x2x1
jax: 0.10.0
libtpu: 0.0.40
codegen_flags: <defaults>
</compile_context>

<pallas_src>
import jax
import jax.numpy as jnp
from jax.experimental import pallas as pl
from jax.experimental.pallas import tpu as pltpu

HIDDEN = 2048
TILE_H = 512       # tile over the hidden/output axis of layer 2 (= reduction axis of layer 3)
NUM_SPLITS = 2     # leading parallel axis: engages both TensorCores on v7x, harmless on v5e/v6e

_SELU_ALPHA = 1.6732632423543772
_SELU_SCALE = 1.0507009873554805


def _selu(x):
    return _SELU_SCALE * jnp.where(x > 0, x, _SELU_ALPHA * (jnp.exp(x) - 1.0))


def mlp_kernel(x_ref, w1_ref, b1_ref, w2_ref, b2_ref, w3_ref, out_ref, h1_scratch):
    # Grid = (NUM_SPLITS, hidden_tiles_per_split). Axis 0 is parallel (megacore),
    # axis 1 is the reduction over hidden tiles (output block constant along it).
    k = pl.program_id(1)

    # First reduction step (per core): compute layer-1 activations once, keep them
    # resident in VMEM scratch, and zero the output accumulator.
    @pl.when(k == 0)
    def _():
        h1 = jnp.dot(x_ref[...], w1_ref[...], preferred_element_type=jnp.float32)
        h1_scratch[...] = _selu(h1 + b1_ref[...])          # (B, H) + (1, H), f32
        out_ref[...] = jnp.zeros_like(out_ref)

    # Layer 2 for one hidden tile (bf16 MXU inputs, f32 accumulation) ...
    h2c = jnp.dot(h1_scratch[...].astype(jnp.bfloat16), w2_ref[...],
                  preferred_element_type=jnp.float32)
    h2c = _selu(h2c + b2_ref[...])                         # (B, TILE_H), f32

    # ... and layer-3 partial reduction as VPU multiply + lane reduce (w3 is a (1, TILE_H) row).
    partial = jnp.sum(h2c * w3_ref[...], axis=-1, keepdims=True)   # (B, 1)
    out_ref[...] += partial[None]                          # out block is (1, B, 1)


def mlp_forward(feats, w1, b1, w2, b2, w3):
    B, D = feats.shape
    H = w1.shape[1]
    assert H % (TILE_H * NUM_SPLITS) == 0
    kpc = H // TILE_H // NUM_SPLITS  # hidden tiles per split

    x_bf = feats.astype(jnp.bfloat16)
    w1_bf = w1.astype(jnp.bfloat16)
    w2_bf = w2.astype(jnp.bfloat16)
    b1_2d = b1.reshape(1, H).astype(jnp.float32)
    b2_2d = b2.reshape(1, H).astype(jnp.float32)
    w3_2d = w3.reshape(1, H).astype(jnp.float32)

    out = pl.pallas_call(
        mlp_kernel,
        out_shape=jax.ShapeDtypeStruct((NUM_SPLITS, B, 1), jnp.float32),
        grid_spec=pltpu.PrefetchScalarGridSpec(
            num_scalar_prefetch=0,
            grid=(NUM_SPLITS, kpc),
            in_specs=[
                pl.BlockSpec((B, D), lambda c, k: (0, 0)),                   # x (full, bf16)
                pl.BlockSpec((D, H), lambda c, k: (0, 0)),                   # W1 (full, bf16)
                pl.BlockSpec((1, H), lambda c, k: (0, 0)),                   # b1 (full, f32)
                pl.BlockSpec((H, TILE_H), lambda c, k: (0, c * kpc + k)),    # W2 tile (bf16)
                pl.BlockSpec((1, TILE_H), lambda c, k: (0, c * kpc + k)),    # b2 tile (f32)
                pl.BlockSpec((1, TILE_H), lambda c, k: (0, c * kpc + k)),    # w3 row tile (f32)
            ],
            out_specs=pl.BlockSpec((1, B, 1), lambda c, k: (c, 0, 0)),       # per-split partial sums
            scratch_shapes=[
                pltpu.VMEM((B, H), jnp.float32),   # layer-1 activations (resident per core)
            ],
        ),
        compiler_params=pltpu.CompilerParams(
            dimension_semantics=("parallel", "arbitrary"),
            vmem_limit_bytes=32 * 1024 * 1024,
        ),
    )(x_bf, w1_bf, b1_2d, w2_bf, b2_2d, w3_2d)

    # Sum the per-split partials and squeeze(-1).
    return out.sum(axis=0)[:, 0]


def mlp_reference(feats, w1, b1, w2, b2, w3):
    h1 = _selu(feats @ w1 + b1)
    h2 = _selu(h1 @ w2 + b2)
    return (h2 @ w3.reshape(-1, 1))[:, 0]


if __name__ == "__main__":
    key = jax.random.PRNGKey(0)
    B, D = 8, 128  # small batch, all_data.shape[-1] stand-in

    k_x, k_w1, k_b1, k_w2, k_b2, k_w3 = jax.random.split(key, 6)
    feats = jax.random.normal(k_x, (B, D), dtype=jnp.float32)
    # Deterministic parameter init (roughly PyTorch nn.Linear uniform bounds).
    w1 = jax.random.uniform(k_w1, (D, HIDDEN), jnp.float32, -1.0 / D**0.5, 1.0 / D**0.5)
    b1 = jax.random.uniform(k_b1, (HIDDEN,), jnp.float32, -1.0 / D**0.5, 1.0 / D**0.5)
    w2 = jax.random.uniform(k_w2, (HIDDEN, HIDDEN), jnp.float32,
                            -1.0 / HIDDEN**0.5, 1.0 / HIDDEN**0.5)
    b2 = jax.random.uniform(k_b2, (HIDDEN,), jnp.float32,
                            -1.0 / HIDDEN**0.5, 1.0 / HIDDEN**0.5)
    w3 = jax.random.uniform(k_w3, (HIDDEN,), jnp.float32,
                            -1.0 / HIDDEN**0.5, 1.0 / HIDDEN**0.5)

    out = jax.block_until_ready(mlp_forward(feats, w1, b1, w2, b2, w3))
    ref = mlp_reference(feats, w1, b1, w2, b2, w3)

    assert out.shape == (B,)
    # Tolerance loosened vs. the pure-f32 reference because the matmuls now run with
    # bf16 MXU inputs (f32 accumulation).
    assert jnp.allclose(out, ref, rtol=5e-2, atol=5e-2), (out, ref)
    print("KERNEL_OK")
</pallas_src>

<mosaic_0001>
module attributes {stable_mosaic.version = 11 : i64} {
  func.func @mlp_kernel(%arg0: i32, %arg1: i32, %arg2: memref<8x128xbf16, #tpu.memory_space<vmem>>, %arg3: memref<128x2048xbf16, #tpu.memory_space<vmem>>, %arg4: memref<1x2048xf32, #tpu.memory_space<vmem>>, %arg5: memref<2048x512xbf16, #tpu.memory_space<vmem>>, %arg6: memref<1x512xf32, #tpu.memory_space<vmem>>, %arg7: memref<1x512xf32, #tpu.memory_space<vmem>>, %arg8: memref<1x8x1xf32, #tpu.memory_space<vmem>>, %arg9: memref<8x2048xf32, #tpu.memory_space<vmem>>) attributes {dimension_semantics = [#tpu.dimension_semantics<parallel>, #tpu.dimension_semantics<arbitrary>], iteration_bounds = array<i64: 2, 2>, scalar_prefetch = 0 : i64, scratch_operands = 1 : i64, tpu.core_type = #tpu.core_type<tc>, window_params = [{pipeline_mode = #tpu.pipeline_mode<synchronous>, transform_indices = @transform_0, window_bounds = array<i64: 8, 128>}, {pipeline_mode = #tpu.pipeline_mode<synchronous>, transform_indices = @transform_1, window_bounds = array<i64: 128, 2048>}, {pipeline_mode = #tpu.pipeline_mode<synchronous>, transform_indices = @transform_2, window_bounds = array<i64: 1, 2048>}, {transform_indices = @transform_3, window_bounds = array<i64: 2048, 512>}, {transform_indices = @transform_4, window_bounds = array<i64: 1, 512>}, {transform_indices = @transform_5, window_bounds = array<i64: 1, 512>}, {transform_indices = @transform_6, window_bounds = array<i64: 1, 8, 1>}]} {
    %c0_i32 = arith.constant 0 : i32
    %0 = arith.cmpi eq, %arg1, %c0_i32 : i32
    %1 = arith.extui %0 : i1 to i32
    %c0_i32_0 = arith.constant 0 : i32
    %2 = arith.cmpi ne, %1, %c0_i32_0 : i32
    scf.if %2 {
      %c0_19 = arith.constant 0 : index
      %c0_20 = arith.constant 0 : index
      %29 = vector.load %arg2[%c0_19, %c0_20] : memref<8x128xbf16, #tpu.memory_space<vmem>>, vector<8x128xbf16>
      %c0_21 = arith.constant 0 : index
      %c0_22 = arith.constant 0 : index
      %30 = vector.load %arg3[%c0_21, %c0_22] : memref<128x2048xbf16, #tpu.memory_space<vmem>>, vector<128x2048xbf16>
      %cst_23 = arith.constant dense<0.000000e+00> : vector<8x2048xf32>
      %31 = tpu.matmul %29, %30, %cst_23 {dimension_numbers = #tpu.dot_dimension_numbers<[1], [0], [0], [1], [0, 0, 1, 1], [], []>} : vector<8x128xbf16>, vector<128x2048xbf16>, vector<8x2048xf32> -> vector<8x2048xf32>
      %c0_24 = arith.constant 0 : index
      %c0_25 = arith.constant 0 : index
      %32 = vector.load %arg4[%c0_24, %c0_25] : memref<1x2048xf32, #tpu.memory_space<vmem>>, vector<1x2048xf32>
      %33 = vector.broadcast %32 : vector<1x2048xf32> to vector<8x2048xf32>
      %34 = arith.addf %31, %33 : vector<8x2048xf32>
      %cst_26 = arith.constant 0.000000e+00 : f32
      %35 = vector.broadcast %cst_26 : f32 to vector<8x2048xf32>
      %36 = arith.cmpf ogt, %34, %35 : vector<8x2048xf32>
      %37 = math.exp %34 : vector<8x2048xf32>
      %cst_27 = arith.constant 1.000000e+00 : f32
      %38 = vector.broadcast %cst_27 : f32 to vector<8x2048xf32>
      %39 = arith.subf %37, %38 : vector<8x2048xf32>
      %cst_28 = arith.constant 1.67326319 : f32
      %40 = vector.broadcast %cst_28 : f32 to vector<8x2048xf32>
      %41 = arith.mulf %40, %39 : vector<8x2048xf32>
      %42 = arith.select %36, %34, %41 : vector<8x2048xi1>, vector<8x2048xf32>
      %cst_29 = arith.constant 1.05070102 : f32
      %43 = vector.broadcast %cst_29 : f32 to vector<8x2048xf32>
      %44 = arith.mulf %43, %42 : vector<8x2048xf32>
      %c0_30 = arith.constant 0 : index
      %c0_31 = arith.constant 0 : index
      %45 = vector.load %arg9[%c0_30, %c0_31] : memref<8x2048xf32, #tpu.memory_space<vmem>>, vector<8x2048xf32>
      tpu.vector_store %arg9[%c0_30, %c0_31], %44 {strides = array<i32>} : memref<8x2048xf32, #tpu.memory_space<vmem>>, vector<8x2048xf32>,
      %cst_32 = arith.constant 0.000000e+00 : f32
      %46 = vector.broadcast %cst_32 : f32 to vector<1x8x1xf32>
      %c0_33 = arith.constant 0 : index
      %c0_34 = arith.constant 0 : index
      %c0_35 = arith.constant 0 : index
      %47 = vector.load %arg8[%c0_33, %c0_34, %c0_35] : memref<1x8x1xf32, #tpu.memory_space<vmem>>, vector<1x8x1xf32>
      tpu.vector_store %arg8[%c0_33, %c0_34, %c0_35], %46 {strides = array<i32>} : memref<1x8x1xf32, #tpu.memory_space<vmem>>, vector<1x8x1xf32>,
    } else {
    }
    %c0 = arith.constant 0 : index
    %c0_1 = arith.constant 0 : index
    %3 = vector.load %arg9[%c0, %c0_1] : memref<8x2048xf32, #tpu.memory_space<vmem>>, vector<8x2048xf32>
    %4 = arith.truncf %3 : vector<8x2048xf32> to vector<8x2048xbf16>
    %c0_2 = arith.constant 0 : index
    %c0_3 = arith.constant 0 : index
    %5 = vector.load %arg5[%c0_2, %c0_3] : memref<2048x512xbf16, #tpu.memory_space<vmem>>, vector<2048x512xbf16>
    %cst = arith.constant dense<0.000000e+00> : vector<8x512xf32>
    %6 = tpu.matmul %4, %5, %cst {dimension_numbers = #tpu.dot_dimension_numbers<[1], [0], [0], [1], [0, 0, 1, 1], [], []>} : vector<8x2048xbf16>, vector<2048x512xbf16>, vector<8x512xf32> -> vector<8x512xf32>
    %c0_4 = arith.constant 0 : index
    %c0_5 = arith.constant 0 : index
    %7 = vector.load %arg6[%c0_4, %c0_5] : memref<1x512xf32, #tpu.memory_space<vmem>>, vector<1x512xf32>
    %8 = vector.broadcast %7 : vector<1x512xf32> to vector<8x512xf32>
    %9 = arith.addf %6, %8 : vector<8x512xf32>
    %cst_6 = arith.constant 0.000000e+00 : f32
    %10 = vector.broadcast %cst_6 : f32 to vector<8x512xf32>
    %11 = arith.cmpf ogt, %9, %10 : vector<8x512xf32>
    %12 = math.exp %9 : vector<8x512xf32>
    %cst_7 = arith.constant 1.000000e+00 : f32
    %13 = vector.broadcast %cst_7 : f32 to vector<8x512xf32>
    %14 = arith.subf %12, %13 : vector<8x512xf32>
    %cst_8 = arith.constant 1.67326319 : f32
    %15 = vector.broadcast %cst_8 : f32 to vector<8x512xf32>
    %16 = arith.mulf %15, %14 : vector<8x512xf32>
    %17 = arith.select %11, %9, %16 : vector<8x512xi1>, vector<8x512xf32>
    %cst_9 = arith.constant 1.05070102 : f32
    %18 = vector.broadcast %cst_9 : f32 to vector<8x512xf32>
    %19 = arith.mulf %18, %17 : vector<8x512xf32>
    %c0_10 = arith.constant 0 : index
    %c0_11 = arith.constant 0 : index
    %20 = vector.load %arg7[%c0_10, %c0_11] : memref<1x512xf32, #tpu.memory_space<vmem>>, vector<1x512xf32>
    %21 = vector.broadcast %20 : vector<1x512xf32> to vector<8x512xf32>
    %22 = arith.mulf %19, %21 : vector<8x512xf32>
    %cst_12 = arith.constant dense<0.000000e+00> : vector<8xf32>
    %23 = vector.multi_reduction <add>, %22, %cst_12 [1] : vector<8x512xf32> to vector<8xf32>
    %24 = vector.shape_cast %23 : vector<8xf32> to vector<8x1xf32>
    %c0_13 = arith.constant 0 : index
    %c0_14 = arith.constant 0 : index
    %c0_15 = arith.constant 0 : index
    %25 = vector.load %arg8[%c0_13, %c0_14, %c0_15] : memref<1x8x1xf32, #tpu.memory_space<vmem>>, vector<1x8x1xf32>
    %26 = vector.shape_cast %24 : vector<8x1xf32> to vector<1x8x1xf32>
    %27 = arith.addf %25, %26 : vector<1x8x1xf32>
    %c0_16 = arith.constant 0 : index
    %c0_17 = arith.constant 0 : index
    %c0_18 = arith.constant 0 : index
    %28 = vector.load %arg8[%c0_16, %c0_17, %c0_18] : memref<1x8x1xf32, #tpu.memory_space<vmem>>, vector<1x8x1xf32>
    tpu.vector_store %arg8[%c0_16, %c0_17, %c0_18], %27 {strides = array<i32>} : memref<1x8x1xf32, #tpu.memory_space<vmem>>, vector<1x8x1xf32>,
    return
  }
  func.func @transform_0(%arg0: i32, %arg1: i32) -> (i32, i32) {
    %c0_i32 = arith.constant 0 : i32
    %c0_i32_0 = arith.constant 0 : i32
    %c0_i32_1 = arith.constant 0 : i32
    return %c0_i32, %c0_i32_0 : i32, i32
  }
  func.func @transform_1(%arg0: i32, %arg1: i32) -> (i32, i32) {
    %c0_i32 = arith.constant 0 : i32
    %c0_i32_0 = arith.constant 0 : i32
    %c0_i32_1 = arith.constant 0 : i32
    return %c0_i32, %c0_i32_0 : i32, i32
  }
  func.func @transform_2(%arg0: i32, %arg1: i32) -> (i32, i32) {
    %c0_i32 = arith.constant 0 : i32
    %c0_i32_0 = arith.constant 0 : i32
    %c0_i32_1 = arith.constant 0 : i32
    return %c0_i32, %c0_i32_0 : i32, i32
  }
  func.func @transform_3(%arg0: i32, %arg1: i32) -> (i32, i32) {
    %c2_i32 = arith.constant 2 : i32
    %0 = arith.muli %arg0, %c2_i32 : i32
    %1 = arith.addi %0, %arg1 : i32
    %c0_i32 = arith.constant 0 : i32
    %c0_i32_0 = arith.constant 0 : i32
    return %c0_i32, %1 : i32, i32
  }
  func.func @transform_4(%arg0: i32, %arg1: i32) -> (i32, i32) {
    %c2_i32 = arith.constant 2 : i32
    %0 = arith.muli %arg0, %c2_i32 : i32
    %1 = arith.addi %0, %arg1 : i32
    %c0_i32 = arith.constant 0 : i32
    %c0_i32_0 = arith.constant 0 : i32
    return %c0_i32, %1 : i32, i32
  }
  func.func @transform_5(%arg0: i32, %arg1: i32) -> (i32, i32) {
    %c2_i32 = arith.constant 2 : i32
    %0 = arith.muli %arg0, %c2_i32 : i32
    %1 = arith.addi %0, %arg1 : i32
    %c0_i32 = arith.constant 0 : i32
    %c0_i32_0 = arith.constant 0 : i32
    return %c0_i32, %1 : i32, i32
  }
  func.func @transform_6(%arg0: i32, %arg1: i32) -> (i32, i32, i32) {
    %c0_i32 = arith.constant 0 : i32
    %c0_i32_0 = arith.constant 0 : i32
    %c0_i32_1 = arith.constant 0 : i32
    return %arg0, %c0_i32, %c0_i32_0 : i32, i32, i32
  }
}

</mosaic_0001>

<llo_original>
// kernel: tpu_custom_call.1
$region0: #{tpu_custom_call.1}
  #allocation0 [shape = 'u32[]', space=smem, size = 0x4, offset = 0x4, fixed_abs, tag = 'smem constant byte address 0x4 - core index']
  #allocation1 [shape = 'u32[144,128]{1,0:T(1,128)}', space=vmem, size = 0x12000, scoped, tag = 'internal scratch']
  #allocation2 [shape = 'f32[8,2048]{1,0:T(8,128)}', space=vmem, size = 0x10000, scoped, tag = 'scratch operand']
  %s0 = inlined_call_operand.hbm [shape: bf16[8,128], index: 0, kind: input, shape index: {}]
  %s1 = inlined_call_operand.hbm [shape: bf16[128,2048], index: 1, kind: input, shape index: {}]
  %s2 = inlined_call_operand.hbm [shape: f32[1,2048], index: 2, kind: input, shape index: {}]
  %s3 = inlined_call_operand.hbm [shape: bf16[2048,2048], index: 3, kind: input, shape index: {}]
  %s4 = inlined_call_operand.hbm [shape: f32[1,2048], index: 4, kind: input, shape index: {}]
  %s5 = inlined_call_operand.hbm [shape: f32[1,2048], index: 5, kind: input, shape index: {}]
  %s6 = inlined_call_operand.vmem [shape: f32[2,8,1], index: 6, kind: output, shape index: {}]
  %s7 = sld [smem:[#allocation0]]
  $region85: #{tpu_custom_call.1} parent=0
    _
  %s9 = ssub.s32 1, %s7
  %s10 = scalar_select 0, %s9, %s7
  $region1: #{tpu_custom_call.1} parent=0
    #allocation3 [shape = 'u8[2048]{0}', space=vmem, size = 0x800, scoped, tag = 'input window, operand 0, single buffered']
    #allocation4 [shape = 's32[2]{0}', space=sflag, size = 0x8, scoped, tag = 'scoped memory for tpu_custom_call.1']
    #allocation5 [shape = 'u8[524288]{0}', space=vmem, size = 0x80000, scoped, tag = 'input window, operand 1, single buffered']
    #allocation6 [shape = 's32[1]{0}', space=sflag, size = 0x4, scoped, tag = 'scoped memory for tpu_custom_call.1']
    #allocation7 [shape = 'u8[8192]{0}', space=vmem, size = 0x2000, scoped, tag = 'input window, operand 2, single buffered']
    #allocation8 [shape = 'u8[4194304]{0}', space=vmem, size = 0x400000, scoped, tag = 'input window, operand 3']
    #allocation9 [shape = 's32[2]{0}', space=sflag, size = 0x8, scoped, tag = 'scoped memory for tpu_custom_call.1']
    #allocation10 [shape = 'u8[4096]{0}', space=vmem, size = 0x1000, scoped, tag = 'input window, operand 4']
    #allocation11 [shape = 'u8[4096]{0}', space=vmem, size = 0x1000, scoped, tag = 'input window, operand 5']
    #allocation12 [shape = 's32[2]{0}', space=sflag, size = 0x8, scoped, tag = 'scoped memory for tpu_custom_call.1']
    %11 = vsyncpa [#allocation4], 0
    %12 = vsyncpa [#allocation6], 0
    %13 = vsyncpa [#allocation9], 0
    %s14 = scalar_lea.sflag [#allocation9], 1
    %15 = vsyncpa %s14, 0
    %16 = vsyncpa [#allocation12], 0
    %s17 = scalar_lea.sflag [#allocation12], 1
    %18 = vsyncpa %s17, 0
    loop: start=0, step=1, limit=6
    $region2: #{tpu_custom_call.1} parent=1 // loop_pre_header
      _
    $region3: #{tpu_custom_call.1} parent=1 // loop_header
      %s20 = sphi 0, %s24
      %p21 = scmp.ge.s32.totalorder %s20, 6
      %s27 = sphi 0, %s39
      %s28 = sphi 0, %s35
      %s29 = sphi 0, %s27
      %s30 = sphi 0, %s28
      %s31 = sphi 0, %s29
      %s32 = sphi 0, %s30
      %s40 = sphi 0, %s40
      %s42 = sphi 0, %s40
      %s43 = sphi 0, %s42
      %s57 = sphi 0, %s43
      %s61 = sphi 0, %s61
      %s63 = sphi 0, %s61
      %s64 = sphi 0, %s63
      %s78 = sphi 0, %s64
      %s82 = sphi 0, %s82
      %s84 = sphi 0, %s82
      %s85 = sphi 0, %s84
      %s99 = sphi 0, %s85
      %s109 = sphi 0, %s111
      %s112 = sphi 0, %s109
      %s113 = sphi 0, %s112
      %s129 = sphi 0, %s113
      %s139 = sphi 0, %s141
      %s142 = sphi 0, %s139
      %s143 = sphi 0, %s142
      %s159 = sphi 0, %s143
      %s169 = sphi 0, %s171
      %s172 = sphi 0, %s169
      %s173 = sphi 0, %s172
      %s189 = sphi 0, %s173
      %s195 = sphi 0, %s197
      %s198 = sphi 0, %s195
      %s199 = sphi 0, %s198
      %s215 = sphi 0, %s199
    $region4: #{tpu_custom_call.1} parent=1 // loop_header_branch
      %23 = sbr.rel (%p21) target = $region8
    $region5: #{tpu_custom_call.1} parent=1 // loop_body
      %s25 = ssub.s32 %s20, 1
      %s26 = ssub.s32 %s20, 2
      %s33 = sadd.s32 1, %s28
      %p34 = scmp.ge.s32.totalorder %s33, 2
      %s35 = scalar_select %p34, 0, %s33
      %s36 = sadd.s32 1, %s27
      %s37 = scalar_select %p34, %s36, %s27
      %p38 = scmp.ge.s32.totalorder %s37, 2
      %s39 = scalar_select %p38, 0, %s37
      %s41 = sadd.s32 %s40, 1
      %p44 = scmp.eq.s32.totalorder %s20, 3
      %p45 = scmp.ne.s32.totalorder %s40, %s42
      %p46 = scmp.eq.s32.totalorder %s20, 0
      %p47 = por %p45, %p46
      %p48 = scmp.ne.s32.totalorder %s40, %s42
      %p49 = scmp.eq.s32.totalorder %s25, 3
      %p50 = por %p48, %p49
      %p51 = scmp.ne.s32.totalorder %s42, %s43
      %p52 = scmp.eq.s32.totalorder %s25, 0
      %p53 = por %p51, %p52
      %p54 = scmp.ne.s32.totalorder %s42, %s43
      %p55 = scmp.eq.s32.totalorder %s26, 3
      %p56 = por %p54, %p55
      %p58 = scmp.ne.s32.totalorder %s43, %s57
      %p59 = scmp.eq.s32.totalorder %s26, 0
      %p60 = por %p58, %p59
      %s62 = sadd.s32 %s61, 1
      %p65 = scmp.eq.s32.totalorder %s20, 3
      %p66 = scmp.ne.s32.totalorder %s61, %s63
      %p67 = scmp.eq.s32.totalorder %s20, 0
      %p68 = por %p66, %p67
      %p69 = scmp.ne.s32.totalorder %s61, %s63
      %p70 = scmp.eq.s32.totalorder %s25, 3
      %p71 = por %p69, %p70
      %p72 = scmp.ne.s32.totalorder %s63, %s64
      %p73 = scmp.eq.s32.totalorder %s25, 0
      %p74 = por %p72, %p73
      %p75 = scmp.ne.s32.totalorder %s63, %s64
      %p76 = scmp.eq.s32.totalorder %s26, 3
      %p77 = por %p75, %p76
      %p79 = scmp.ne.s32.totalorder %s64, %s78
      %p80 = scmp.eq.s32.totalorder %s26, 0
      %p81 = por %p79, %p80
      %s83 = sadd.s32 %s82, 1
      %p86 = scmp.eq.s32.totalorder %s20, 3
      %p87 = scmp.ne.s32.totalorder %s82, %s84
      %p88 = scmp.eq.s32.totalorder %s20, 0
      %p89 = por %p87, %p88
      %p90 = scmp.ne.s32.totalorder %s82, %s84
      %p91 = scmp.eq.s32.totalorder %s25, 3
      %p92 = por %p90, %p91
      %p93 = scmp.ne.s32.totalorder %s84, %s85
      %p94 = scmp.eq.s32.totalorder %s25, 0
      %p95 = por %p93, %p94
      %p96 = scmp.ne.s32.totalorder %s84, %s85
      %p97 = scmp.eq.s32.totalorder %s26, 3
      %p98 = por %p96, %p97
      %p100 = scmp.ne.s32.totalorder %s85, %s99
      %p101 = scmp.eq.s32.totalorder %s26, 0
      %p102 = por %p100, %p101
      %s103 = smul.u32 %s27, 2
      %s104 = sadd.s32 %s103, %s28
      %s105 = smul.u32 %s39, 2
      %s106 = sadd.s32 %s105, %s35
      %s107 = ssub.s32 %s104, %s106
      %p108 = scmp.eq.s32.totalorder %s107, 0
      %s110 = sadd.s32 %s109, 1
      %s111 = scalar_select %p108, %s109, %s110
      %p114 = pneg %p108
      %p115 = scmp.eq.s32.totalorder %s20, 3
      %p116 = por %p114, %p115
      %p117 = scmp.ne.s32.totalorder %s109, %s112
      %p118 = scmp.eq.s32.totalorder %s20, 0
      %p119 = por %p117, %p118
      %p120 = scmp.ne.s32.totalorder %s109, %s112
      %p121 = scmp.eq.s32.totalorder %s25, 3
      %p122 = por %p120, %p121
      %p123 = scmp.ne.s32.totalorder %s112, %s113
      %p124 = scmp.eq.s32.totalorder %s25, 0
      %p125 = por %p123, %p124
      %p126 = scmp.ne.s32.totalorder %s112, %s113
      %p127 = scmp.eq.s32.totalorder %s26, 3
      %p128 = por %p126, %p127
      %p130 = scmp.ne.s32.totalorder %s113, %s129
      %p131 = scmp.eq.s32.totalorder %s26, 0
      %p132 = por %p130, %p131
      %s133 = smul.u32 %s27, 2
      %s134 = sadd.s32 %s133, %s28
      %s135 = smul.u32 %s39, 2
      %s136 = sadd.s32 %s135, %s35
      %s137 = ssub.s32 %s134, %s136
      %p138 = scmp.eq.s32.totalorder %s137, 0
      %s140 = sadd.s32 %s139, 1
      %s141 = scalar_select %p138, %s139, %s140
      %p144 = pneg %p138
      %p145 = scmp.eq.s32.totalorder %s20, 3
      %p146 = por %p144, %p145
      %p147 = scmp.ne.s32.totalorder %s139, %s142
      %p148 = scmp.eq.s32.totalorder %s20, 0
      %p149 = por %p147, %p148
      %p150 = scmp.ne.s32.totalorder %s139, %s142
      %p151 = scmp.eq.s32.totalorder %s25, 3
      %p152 = por %p150, %p151
      %p153 = scmp.ne.s32.totalorder %s142, %s143
      %p154 = scmp.eq.s32.totalorder %s25, 0
      %p155 = por %p153, %p154
      %p156 = scmp.ne.s32.totalorder %s142, %s143
      %p157 = scmp.eq.s32.totalorder %s26, 3
      %p158 = por %p156, %p157
      %p160 = scmp.ne.s32.totalorder %s143, %s159
      %p161 = scmp.eq.s32.totalorder %s26, 0
      %p162 = por %p160, %p161
      %s163 = smul.u32 %s27, 2
      %s164 = sadd.s32 %s163, %s28
      %s165 = smul.u32 %s39, 2
      %s166 = sadd.s32 %s165, %s35
      %s167 = ssub.s32 %s164, %s166
      %p168 = scmp.eq.s32.totalorder %s167, 0
      %s170 = sadd.s32 %s169, 1
      %s171 = scalar_select %p168, %s169, %s170
      %p174 = pneg %p168
      %p175 = scmp.eq.s32.totalorder %s20, 3
      %p176 = por %p174, %p175
      %p177 = scmp.ne.s32.totalorder %s169, %s172
      %p178 = scmp.eq.s32.totalorder %s20, 0
      %p179 = por %p177, %p178
      %p180 = scmp.ne.s32.totalorder %s169, %s172
      %p181 = scmp.eq.s32.totalorder %s25, 3
      %p182 = por %p180, %p181
      %p183 = scmp.ne.s32.totalorder %s172, %s173
      %p184 = scmp.eq.s32.totalorder %s25, 0
      %p185 = por %p183, %p184
      %p186 = scmp.ne.s32.totalorder %s172, %s173
      %p187 = scmp.eq.s32.totalorder %s26, 3
      %p188 = por %p186, %p187
      %p190 = scmp.ne.s32.totalorder %s173, %s189
      %p191 = scmp.eq.s32.totalorder %s26, 0
      %p192 = por %p190, %p191
      %s193 = ssub.s32 %s27, %s39
      %p194 = scmp.eq.s32.totalorder %s193, 0
      %s196 = sadd.s32 %s195, 1
      %s197 = scalar_select %p194, %s195, %s196
      %p200 = pneg %p194
      %p201 = scmp.eq.s32.totalorder %s20, 3
      %p202 = por %p200, %p201
      %p203 = scmp.ne.s32.totalorder %s195, %s198
      %p204 = scmp.eq.s32.totalorder %s20, 0
      %p205 = por %p203, %p204
      %p206 = scmp.ne.s32.totalorder %s195, %s198
      %p207 = scmp.eq.s32.totalorder %s25, 3
      %p208 = por %p206, %p207
      %p209 = scmp.ne.s32.totalorder %s198, %s199
      %p210 = scmp.eq.s32.totalorder %s25, 0
      %p211 = por %p209, %p210
      %p212 = scmp.ne.s32.totalorder %s198, %s199
      %p213 = scmp.eq.s32.totalorder %s26, 3
      %p214 = por %p212, %p213
      %p216 = scmp.ne.s32.totalorder %s199, %s215
      %p217 = scmp.eq.s32.totalorder %s26, 0
      %p218 = por %p216, %p217
      %p219 = scmp.le.s32.totalorder 1, %s20
      %p220 = scmp.lt.s32.totalorder %s20, 5
      %p221 = pnand %p219, %p220
      %p222 = pneg %p221
      // Predicated region
      $region9: #{tpu_custom_call.1} parent=5 // pred_check
        _
      $region10: #{tpu_custom_call.1} parent=5 // pred_check_branch
        %224 = sbr.rel (%p221) target = $region12
      $region11: #{tpu_custom_call.1} parent=5 // pred_region
        %s225 = ssub.s32 %s20, 1
        // Predicated region
        $region13: #{tpu_custom_call.1} parent=11 // pred_check
          %p226 = pneg %p53
        $region14: #{tpu_custom_call.1} parent=11 // pred_check_branch
          %228 = sbr.rel (%p226) target = $region16
        $region15: #{tpu_custom_call.1} parent=11 // pred_region
          %s230 = ssub.s32 64, 64
          %231 = vsyncadd [#allocation4], %s230
          %s233 = sshll.u32 [#allocation3], 4
          %s234 = int_to_ptr.vmem [resolvable:$true] %s233
          %236 = dma.hbm_to_vmem [thread:$0]  %s0, 64, %s234, [#allocation4]
        $region16: #{tpu_custom_call.1} parent=11 // pred_fallthru
          _
        // Predicated region
        $region17: #{tpu_custom_call.1} parent=11 // pred_check
          %p237 = pneg %p74
        $region18: #{tpu_custom_call.1} parent=11 // pred_check_branch
          %239 = sbr.rel (%p237) target = $region20
        $region19: #{tpu_custom_call.1} parent=11 // pred_region
          %s241 = ssub.s32 16384, 16384
          %242 = vsyncadd [#allocation6], %s241
          %s243 = sshll.u32 [#allocation5], 4
          %s244 = int_to_ptr.vmem [resolvable:$true] %s243
          %249 = dma.hbm_to_vmem [thread:$0]  %s1, 16384, %s244, [#allocation6], 1024, 1024, 64
        $region20: #{tpu_custom_call.1} parent=11 // pred_fallthru
          _
        // Predicated region
        $region21: #{tpu_custom_call.1} parent=11 // pred_check
          %p250 = pneg %p95
        $region22: #{tpu_custom_call.1} parent=11 // pred_check_branch
          %252 = sbr.rel (%p250) target = $region24
        $region23: #{tpu_custom_call.1} parent=11 // pred_region
          %s254 = ssub.s32 256, 256
          %255 = vsyncadd [#allocation6], %s254
          %s257 = sshll.u32 [#allocation7], 4
          %s258 = int_to_ptr.vmem [resolvable:$true] %s257
          %260 = dma.hbm_to_vmem [thread:$0]  %s2, 256, %s258, [#allocation6]
        $region24: #{tpu_custom_call.1} parent=11 // pred_fallthru
          _
      $region12: #{tpu_custom_call.1} parent=5 // pred_fallthru
        _
      %p261 = scmp.lt.s32.totalorder %s20, 4
      // Predicated region
      $region25: #{tpu_custom_call.1} parent=5 // pred_check
        %p262 = pneg %p261
      $region26: #{tpu_custom_call.1} parent=5 // pred_check_branch
        %264 = sbr.rel (%p262) target = $region28
      $region27: #{tpu_custom_call.1} parent=5 // pred_region
        // Predicated region
        $region29: #{tpu_custom_call.1} parent=27 // pred_check
          %p265 = pneg %p119
        $region30: #{tpu_custom_call.1} parent=27 // pred_check_branch
          %267 = sbr.rel (%p265) target = $region32
        $region31: #{tpu_custom_call.1} parent=27 // pred_region
          %s268 = sand.u32 %s20, 1
          %s269 = scalar_lea.sflag [#allocation9], %s268
          %s270 = sand.u32 %s109, 1
          %s271 = smul.addr %s270, 4096
          %s272 = scalar_lea.vmem [#allocation8], %s271
          %s273 = smul.u32 %s27, 2
          %s274 = sadd.s32 %s273, %s28
          %s275 = smul.u32 4, %s274
          %s277 = ssub.s32 65536, 65536
          %278 = vsyncadd %s269, %s277
          %s279 = smul.addr %s275, 64
          %s280 = scalar_lea.hbm %s3, %s279
          %s281 = sshll.u32 %s272, 4
          %s282 = int_to_ptr.vmem [resolvable:$true] %s281
          %287 = dma.hbm_to_vmem [thread:$0]  %s280, 65536, %s282, %s269, 1024, 256, 16
        $region32: #{tpu_custom_call.1} parent=27 // pred_fallthru
          _
        // Predicated region
        $region33: #{tpu_custom_call.1} parent=27 // pred_check
          %p288 = pneg %p149
        $region34: #{tpu_custom_call.1} parent=27 // pred_check_branch
          %290 = sbr.rel (%p288) target = $region36
        $region35: #{tpu_custom_call.1} parent=27 // pred_region
          %s291 = sand.u32 %s20, 1
          %s292 = scalar_lea.sflag [#allocation9], %s291
          %s293 = sand.u32 %s139, 1
          %s294 = smul.addr %s293, 4
          %s295 = scalar_lea.vmem [#allocation10], %s294
          %s296 = smul.u32 %s27, 2
          %s297 = sadd.s32 %s296, %s28
          %s298 = smul.u32 4, %s297
          %s300 = ssub.s32 64, 64
          %301 = vsyncadd %s292, %s300
          %s302 = smul.addr %s298, 16
          %s303 = scalar_lea.hbm %s4, %s302
          %s305 = sshll.u32 %s295, 4
          %s306 = int_to_ptr.vmem [resolvable:$true] %s305
          %308 = dma.hbm_to_vmem [thread:$0]  %s303, 64, %s306, %s292
        $region36: #{tpu_custom_call.1} parent=27 // pred_fallthru
          _
        // Predicated region
        $region37: #{tpu_custom_call.1} parent=27 // pred_check
          %p309 = pneg %p179
        $region38: #{tpu_custom_call.1} parent=27 // pred_check_branch
          %311 = sbr.rel (%p309) target = $region40
        $region39: #{tpu_custom_call.1} parent=27 // pred_region
          %s312 = sand.u32 %s169, 1
          %s313 = scalar_lea.sflag [#allocation12], %s312
          %s314 = sand.u32 %s169, 1
          %s315 = smul.addr %s314, 4
          %s316 = scalar_lea.vmem [#allocation11], %s315
          %s317 = smul.u32 %s27, 2
          %s318 = sadd.s32 %s317, %s28
          %s319 = smul.u32 4, %s318
          %s321 = ssub.s32 64, 64
          %322 = vsyncadd %s313, %s321
          %s323 = smul.addr %s319, 16
          %s324 = scalar_lea.hbm %s5, %s323
          %s326 = sshll.u32 %s316, 4
          %s327 = int_to_ptr.vmem [resolvable:$true] %s326
          %329 = dma.hbm_to_vmem [thread:$0]  %s324, 64, %s327, %s313
        $region40: #{tpu_custom_call.1} parent=27 // pred_fallthru
          _
      $region28: #{tpu_custom_call.1} parent=5 // pred_fallthru
        _
      %p330 = scmp.le.s32.totalorder 1, %s20
      %p331 = scmp.lt.s32.totalorder %s20, 5
      %p332 = pnand %p330, %p331
      %p333 = pneg %p332
      // Predicated region
      $region41: #{tpu_custom_call.1} parent=5 // pred_check
        _
      $region42: #{tpu_custom_call.1} parent=5 // pred_check_branch
        %335 = sbr.rel (%p332) target = $region44
      $region43: #{tpu_custom_call.1} parent=5 // pred_region
        %s336 = ssub.s32 %s20, 1
        // Predicated region
        $region45: #{tpu_custom_call.1} parent=43 // pred_check
          %p337 = pneg %p53
        $region46: #{tpu_custom_call.1} parent=43 // pred_check_branch
          %339 = sbr.rel (%p337) target = $region48
        $region47: #{tpu_custom_call.1} parent=43 // pred_region
          %340 = dma.done [#allocation4], 64
        $region48: #{tpu_custom_call.1} parent=43 // pred_fallthru
          _
        // Predicated region
        $region49: #{tpu_custom_call.1} parent=43 // pred_check
          %p341 = pneg %p74
        $region50: #{tpu_custom_call.1} parent=43 // pred_check_branch
          %343 = sbr.rel (%p341) target = $region52
        $region51: #{tpu_custom_call.1} parent=43 // pred_region
          %344 = dma.done [#allocation6], 16384
        $region52: #{tpu_custom_call.1} parent=43 // pred_fallthru
          _
        // Predicated region
        $region53: #{tpu_custom_call.1} parent=43 // pred_check
          %p345 = pneg %p95
        $region54: #{tpu_custom_call.1} parent=43 // pred_check_branch
          %347 = sbr.rel (%p345) target = $region56
        $region55: #{tpu_custom_call.1} parent=43 // pred_region
          %348 = dma.done [#allocation6], 256
        $region56: #{tpu_custom_call.1} parent=43 // pred_fallthru
          _
        %s349 = sand.u32 %s25, 1
        %s350 = scalar_lea.sflag [#allocation9], %s349
        %s351 = sand.u32 %s112, 1
        %s352 = smul.addr %s351, 4096
        %s353 = scalar_lea.vmem [#allocation8], %s352
        // Predicated region
        $region57: #{tpu_custom_call.1} parent=43 // pred_check
          %p354 = pneg %p125
        $region58: #{tpu_custom_call.1} parent=43 // pred_check_branch
          %356 = sbr.rel (%p354) target = $region60
        $region59: #{tpu_custom_call.1} parent=43 // pred_region
          %357 = dma.done %s350, 65536
        $region60: #{tpu_custom_call.1} parent=43 // pred_fallthru
          _
        %s358 = sand.u32 %s25, 1
        %s359 = scalar_lea.sflag [#allocation9], %s358
        %s360 = sand.u32 %s142, 1
        %s361 = smul.addr %s360, 4
        %s362 = scalar_lea.vmem [#allocation10], %s361
        // Predicated region
        $region61: #{tpu_custom_call.1} parent=43 // pred_check
          %p363 = pneg %p155
        $region62: #{tpu_custom_call.1} parent=43 // pred_check_branch
          %365 = sbr.rel (%p363) target = $region64
        $region63: #{tpu_custom_call.1} parent=43 // pred_region
          %366 = dma.done %s359, 64
        $region64: #{tpu_custom_call.1} parent=43 // pred_fallthru
          _
        %s367 = sand.u32 %s172, 1
        %s368 = scalar_lea.sflag [#allocation12], %s367
        %s369 = sand.u32 %s172, 1
        %s370 = smul.addr %s369, 4
        %s371 = scalar_lea.vmem [#allocation11], %s370
        // Predicated region
        $region65: #{tpu_custom_call.1} parent=43 // pred_check
          %p372 = pneg %p185
        $region66: #{tpu_custom_call.1} parent=43 // pred_check_branch
          %374 = sbr.rel (%p372) target = $region68
        $region67: #{tpu_custom_call.1} parent=43 // pred_region
          %375 = dma.done %s368, 64
        $region68: #{tpu_custom_call.1} parent=43 // pred_fallthru
          _
        %p376 = pneg %p53
        %p377 = pneg %p50
        %p378 = pneg %p74
        %p379 = pneg %p71
        %p380 = pneg %p95
        %p381 = pneg %p92
        %s382 = sand.u32 %s25, 1
        %s383 = scalar_lea.sflag [#allocation9], %s382
        %s384 = sand.u32 %s112, 1
        %s385 = smul.addr %s384, 4096
        %s386 = scalar_lea.vmem [#allocation8], %s385
        %p387 = pneg %p125
        %p388 = pneg %p122
        %s389 = sand.u32 %s25, 1
        %s390 = scalar_lea.sflag [#allocation9], %s389
        %s391 = sand.u32 %s142, 1
        %s392 = smul.addr %s391, 4
        %s393 = scalar_lea.vmem [#allocation10], %s392
        %p394 = pneg %p155
        %p395 = pneg %p152
        %s396 = sand.u32 %s172, 1
        %s397 = scalar_lea.sflag [#allocation12], %s396
        %s398 = sand.u32 %s172, 1
        %s399 = smul.addr %s398, 4
        %s400 = scalar_lea.vmem [#allocation11], %s399
        %p401 = pneg %p185
        %p402 = pneg %p182
        %p403 = pneg %p211
        %p404 = pneg %p208
        %p405 = scmp.lt.s32.totalorder %s29, 1
        %s406 = scalar_select %p405, %s29, 1
        %s407 = smul.addr %s406, 8
        %s408 = scalar_lea.vmem %s6, %s407
        %s409 = smul.u32 %s29, 2
        %s410 = sadd.s32 %s409, %s30
        %s411 = smul.u32 4, %s410
        %s412 = smul.u32 %s29, 2
        %s413 = sadd.s32 %s412, %s30
        %s414 = smul.u32 4, %s413
        %s415 = smul.u32 %s29, 2
        %s416 = sadd.s32 %s415, %s30
        %s417 = smul.u32 4, %s416
        %p418 = scmp.lt.s32.totalorder %s29, 1
        %s419 = scalar_select %p418, %s29, 1
        %s420 = smul.addr %s419, 8
        %s421 = scalar_lea.vmem %s6, %s420
        %p423 = scmp.eq.s32.totalorder %s30, 0
        // Predicated region
        $region69: #{tpu_custom_call.1} parent=43 // pred_check
          %p424 = pneg %p423
        $region70: #{tpu_custom_call.1} parent=43 // pred_check_branch
          %426 = sbr.rel (%p424) target = $region72
        $region71: #{tpu_custom_call.1} parent=43 // pred_region
          %v427 = vld [vmem:[#allocation3] sm:$0xf]
          %v428 = vld [vmem:[#allocation5] sm:$0xff]
          %v429 = vld [vmem:[#allocation5 + $0x8] sm:$0xff]
          %v430 = vld [vmem:[#allocation5 + $0x10] sm:$0xff]
          %v431 = vld [vmem:[#allocation5 + $0x18] sm:$0xff]
          %v432 = vld [vmem:[#allocation5 + $0x20] sm:$0xff]
          %v433 = vld [vmem:[#allocation5 + $0x28] sm:$0xff]
          %v434 = vld [vmem:[#allocation5 + $0x30] sm:$0xff]
          %v435 = vld [vmem:[#allocation5 + $0x38] sm:$0xff]
          %v436 = vld [vmem:[#allocation5 + $0x40] sm:$0xff]
          %v437 = vld [vmem:[#allocation5 + $0x48] sm:$0xff]
          %v438 = vld [vmem:[#allocation5 + $0x50] sm:$0xff]
          %v439 = vld [vmem:[#allocation5 + $0x58] sm:$0xff]
          %v440 = vld [vmem:[#allocation5 + $0x60] sm:$0xff]
          %v441 = vld [vmem:[#allocation5 + $0x68] sm:$0xff]
          %v442 = vld [vmem:[#allocation5 + $0x70] sm:$0xff]
          %v443 = vld [vmem:[#allocation5 + $0x78] sm:$0xff]
          %v444 = vld [vmem:[#allocation5 + $0x80] sm:$0xff]
          %v445 = vld [vmem:[#allocation5 + $0x88] sm:$0xff]
          %v446 = vld [vmem:[#allocation5 + $0x90] sm:$0xff]
          %v447 = vld [vmem:[#allocation5 + $0x98] sm:$0xff]
          %v448 = vld [vmem:[#allocation5 + $0xa0] sm:$0xff]
          %v449 = vld [vmem:[#allocation5 + $0xa8] sm:$0xff]
          %v450 = vld [vmem:[#allocation5 + $0xb0] sm:$0xff]
          %v451 = vld [vmem:[#allocation5 + $0xb8] sm:$0xff]
          %v452 = vld [vmem:[#allocation5 + $0xc0] sm:$0xff]
          %v453 = vld [vmem:[#allocation5 + $0xc8] sm:$0xff]
          %v454 = vld [vmem:[#allocation5 + $0xd0] sm:$0xff]
          %v455 = vld [vmem:[#allocation5 + $0xd8] sm:$0xff]
          %v456 = vld [vmem:[#allocation5 + $0xe0] sm:$0xff]
          %v457 = vld [vmem:[#allocation5 + $0xe8] sm:$0xff]
          %v458 = vld [vmem:[#allocation5 + $0xf0] sm:$0xff]
          %v459 = vld [vmem:[#allocation5 + $0xf8] sm:$0xff]
          %v460 = vld [vmem:[#allocation5 + $0x100] sm:$0xff]
          %v461 = vld [vmem:[#allocation5 + $0x108] sm:$0xff]
          %v462 = vld [vmem:[#allocation5 + $0x110] sm:$0xff]
          %v463 = vld [vmem:[#allocation5 + $0x118] sm:$0xff]
          %v464 = vld [vmem:[#allocation5 + $0x120] sm:$0xff]
          %v465 = vld [vmem:[#allocation5 + $0x128] sm:$0xff]
          %v466 = vld [vmem:[#allocation5 + $0x130] sm:$0xff]
          %v467 = vld [vmem:[#allocation5 + $0x138] sm:$0xff]
          %v468 = vld [vmem:[#allocation5 + $0x140] sm:$0xff]
          %v469 = vld [vmem:[#allocation5 + $0x148] sm:$0xff]
          %v470 = vld [vmem:[#allocation5 + $0x150] sm:$0xff]
          %v471 = vld [vmem:[#allocation5 + $0x158] sm:$0xff]
          %v472 = vld [vmem:[#allocation5 + $0x160] sm:$0xff]
          %v473 = vld [vmem:[#allocation5 + $0x168] sm:$0xff]
          %v474 = vld [vmem:[#allocation5 + $0x170] sm:$0xff]
          %v475 = vld [vmem:[#allocation5 + $0x178] sm:$0xff]
          %v476 = vld [vmem:[#allocation5 + $0x180] sm:$0xff]
          %v477 = vld [vmem:[#allocation5 + $0x188] sm:$0xff]
          %v478 = vld [vmem:[#allocation5 + $0x190] sm:$0xff]
          %v479 = vld [vmem:[#allocation5 + $0x198] sm:$0xff]
          %v480 = vld [vmem:[#allocation5 + $0x1a0] sm:$0xff]
          %v481 = vld [vmem:[#allocation5 + $0x1a8] sm:$0xff]
          %v482 = vld [vmem:[#allocation5 + $0x1b0] sm:$0xff]
          %v483 = vld [vmem:[#allocation5 + $0x1b8] sm:$0xff]
          %v484 = vld [vmem:[#allocation5 + $0x1c0] sm:$0xff]
          %v485 = vld [vmem:[#allocation5 + $0x1c8] sm:$0xff]
          %v486 = vld [vmem:[#allocation5 + $0x1d0] sm:$0xff]
          %v487 = vld [vmem:[#allocation5 + $0x1d8] sm:$0xff]
          %v488 = vld [vmem:[#allocation5 + $0x1e0] sm:$0xff]
          %v489 = vld [vmem:[#allocation5 + $0x1e8] sm:$0xff]
          %v490 = vld [vmem:[#allocation5 + $0x1f0] sm:$0xff]
          %v491 = vld [vmem:[#allocation5 + $0x1f8] sm:$0xff]
          %v492 = vld [vmem:[#allocation5 + $0x200] sm:$0xff]
          %v493 = vld [vmem:[#allocation5 + $0x208] sm:$0xff]
          %v494 = vld [vmem:[#allocation5 + $0x210] sm:$0xff]
          %v495 = vld [vmem:[#allocation5 + $0x218] sm:$0xff]
          %v496 = vld [vmem:[#allocation5 + $0x220] sm:$0xff]
          %v497 = vld [vmem:[#allocation5 + $0x228] sm:$0xff]
          %v498 = vld [vmem:[#allocation5 + $0x230] sm:$0xff]
          %v499 = vld [vmem:[#allocation5 + $0x238] sm:$0xff]
          %v500 = vld [vmem:[#allocation5 + $0x240] sm:$0xff]
          %v501 = vld [vmem:[#allocation5 + $0x248] sm:$0xff]
          %v502 = vld [vmem:[#allocation5 + $0x250] sm:$0xff]
          %v503 = vld [vmem:[#allocation5 + $0x258] sm:$0xff]
          %v504 = vld [vmem:[#allocation5 + $0x260] sm:$0xff]
          %v505 = vld [vmem:[#allocation5 + $0x268] sm:$0xff]
          %v506 = vld [vmem:[#allocation5 + $0x270] sm:$0xff]
          %v507 = vld [vmem:[#allocation5 + $0x278] sm:$0xff]
          %v508 = vld [vmem:[#allocation5 + $0x280] sm:$0xff]
          %v509 = vld [vmem:[#allocation5 + $0x288] sm:$0xff]
          %v510 = vld [vmem:[#allocation5 + $0x290] sm:$0xff]
          %v511 = vld [vmem:[#allocation5 + $0x298] sm:$0xff]
          %v512 = vld [vmem:[#allocation5 + $0x2a0] sm:$0xff]
          %v513 = vld [vmem:[#allocation5 + $0x2a8] sm:$0xff]
          %v514 = vld [vmem:[#allocation5 + $0x2b0] sm:$0xff]
          %v515 = vld [vmem:[#allocation5 + $0x2b8] sm:$0xff]
          %v516 = vld [vmem:[#allocation5 + $0x2c0] sm:$0xff]
          %v517 = vld [vmem:[#allocation5 + $0x2c8] sm:$0xff]
          %v518 = vld [vmem:[#allocation5 + $0x2d0] sm:$0xff]
          %v519 = vld [vmem:[#allocation5 + $0x2d8] sm:$0xff]
          %v520 = vld [vmem:[#allocation5 + $0x2e0] sm:$0xff]
          %v521 = vld [vmem:[#allocation5 + $0x2e8] sm:$0xff]
          %v522 = vld [vmem:[#allocation5 + $0x2f0] sm:$0xff]
          %v523 = vld [vmem:[#allocation5 + $0x2f8] sm:$0xff]
          %v524 = vld [vmem:[#allocation5 + $0x300] sm:$0xff]
          %v525 = vld [vmem:[#allocation5 + $0x308] sm:$0xff]
          %v526 = vld [vmem:[#allocation5 + $0x310] sm:$0xff]
          %v527 = vld [vmem:[#allocation5 + $0x318] sm:$0xff]
          %v528 = vld [vmem:[#allocation5 + $0x320] sm:$0xff]
          %v529 = vld [vmem:[#allocation5 + $0x328] sm:$0xff]
          %v530 = vld [vmem:[#allocation5 + $0x330] sm:$0xff]
          %v531 = vld [vmem:[#allocation5 + $0x338] sm:$0xff]
          %v532 = vld [vmem:[#allocation5 + $0x340] sm:$0xff]
          %v533 = vld [vmem:[#allocation5 + $0x348] sm:$0xff]
          %v534 = vld [vmem:[#allocation5 + $0x350] sm:$0xff]
          %v535 = vld [vmem:[#allocation5 + $0x358] sm:$0xff]
          %v536 = vld [vmem:[#allocation5 + $0x360] sm:$0xff]
          %v537 = vld [vmem:[#allocation5 + $0x368] sm:$0xff]
          %v538 = vld [vmem:[#allocation5 + $0x370] sm:$0xff]
          %v539 = vld [vmem:[#allocation5 + $0x378] sm:$0xff]
          %v540 = vld [vmem:[#allocation5 + $0x380] sm:$0xff]
          %v541 = vld [vmem:[#allocation5 + $0x388] sm:$0xff]
          %v542 = vld [vmem:[#allocation5 + $0x390] sm:$0xff]
          %v543 = vld [vmem:[#allocation5 + $0x398] sm:$0xff]
          %v544 = vld [vmem:[#allocation5 + $0x3a0] sm:$0xff]
          %v545 = vld [vmem:[#allocation5 + $0x3a8] sm:$0xff]
          %v546 = vld [vmem:[#allocation5 + $0x3b0] sm:$0xff]
          %v547 = vld [vmem:[#allocation5 + $0x3b8] sm:$0xff]
          %v548 = vld [vmem:[#allocation5 + $0x3c0] sm:$0xff]
          %v549 = vld [vmem:[#allocation5 + $0x3c8] sm:$0xff]
          %v550 = vld [vmem:[#allocation5 + $0x3d0] sm:$0xff]
          %v551 = vld [vmem:[#allocation5 + $0x3d8] sm:$0xff]
          %v552 = vld [vmem:[#allocation5 + $0x3e0] sm:$0xff]
          %v553 = vld [vmem:[#allocation5 + $0x3e8] sm:$0xff]
          %v554 = vld [vmem:[#allocation5 + $0x3f0] sm:$0xff]
          %v555 = vld [vmem:[#allocation5 + $0x3f8] sm:$0xff]
          %v556 = vld [vmem:[#allocation7] sm:$0xff]
          %v557 = vld [vmem:[#allocation7 + $0x8] sm:$0xff]
          %v560 = vlaneseq
          %v561 = vshrl.u32 %v560, 7
          %v562 = vsub.s32 0, %v561
          %v563 = vrot.slane %v556, %v562
          %v564 = vlaneseq
          %v565 = vshrl.u32 %v564, 7
          %v566 = vsub.s32 1, %v565
          %v567 = vrot.slane %v556, %v566
          %v568 = vlaneseq
          %v569 = vshrl.u32 %v568, 7
          %v570 = vsub.s32 2, %v569
          %v571 = vrot.slane %v556, %v570
          %v572 = vlaneseq
          %v573 = vshrl.u32 %v572, 7
          %v574 = vsub.s32 3, %v573
          %v575 = vrot.slane %v556, %v574
          %v576 = vlaneseq
          %v577 = vshrl.u32 %v576, 7
          %v578 = vsub.s32 4, %v577
          %v579 = vrot.slane %v556, %v578
          %v580 = vlaneseq
          %v581 = vshrl.u32 %v580, 7
          %v582 = vsub.s32 5, %v581
          %v583 = vrot.slane %v556, %v582
          %v584 = vlaneseq
          %v585 = vshrl.u32 %v584, 7
          %v586 = vsub.s32 6, %v585
          %v587 = vrot.slane %v556, %v586
          %v588 = vlaneseq
          %v589 = vshrl.u32 %v588, 7
          %v590 = vsub.s32 7, %v589
          %v591 = vrot.slane %v556, %v590
          %v592 = vlaneseq
          %v593 = vshrl.u32 %v592, 7
          %v594 = vsub.s32 0, %v593
          %v595 = vrot.slane %v557, %v594
          %v596 = vlaneseq
          %v597 = vshrl.u32 %v596, 7
          %v598 = vsub.s32 1, %v597
          %v599 = vrot.slane %v557, %v598
          %v600 = vlaneseq
          %v601 = vshrl.u32 %v600, 7
          %v602 = vsub.s32 2, %v601
          %v603 = vrot.slane %v557, %v602
          %v604 = vlaneseq
          %v605 = vshrl.u32 %v604, 7
          %v606 = vsub.s32 3, %v605
          %v607 = vrot.slane %v557, %v606
          %v608 = vlaneseq
          %v609 = vshrl.u32 %v608, 7
          %v610 = vsub.s32 4, %v609
          %v611 = vrot.slane %v557, %v610
          %v612 = vlaneseq
          %v613 = vshrl.u32 %v612, 7
          %v614 = vsub.s32 5, %v613
          %v615 = vrot.slane %v557, %v614
          %v616 = vlaneseq
          %v617 = vshrl.u32 %v616, 7
          %v618 = vsub.s32 6, %v617
          %v619 = vrot.slane %v557, %v618
          %v620 = vlaneseq
          %v621 = vshrl.u32 %v620, 7
          %v622 = vsub.s32 7, %v621
          %v623 = vrot.slane %v557, %v622
          %v768 = vunpack.c.l.b16 %v428
          %v769 = vunpack.c.h.b16 %v428
          %v770 = vunpack.c.l.b16 %v429
          %v771 = vunpack.c.h.b16 %v429
          %v772 = vunpack.c.l.b16 %v430
          %v773 = vunpack.c.h.b16 %v430
          %v774 = vunpack.c.l.b16 %v431
          %v775 = vunpack.c.h.b16 %v431
          %v776 = vunpack.c.l.b16 %v432
          %v777 = vunpack.c.h.b16 %v432
          %v778 = vunpack.c.l.b16 %v433
          %v779 = vunpack.c.h.b16 %v433
          %v780 = vunpack.c.l.b16 %v434
          %v781 = vunpack.c.h.b16 %v434
          %v782 = vunpack.c.l.b16 %v435
          %v783 = vunpack.c.h.b16 %v435
          %v784 = vunpack.c.l.b16 %v436
          %v785 = vunpack.c.h.b16 %v436
          %v786 = vunpack.c.l.b16 %v437
          %v787 = vunpack.c.h.b16 %v437
          %v788 = vunpack.c.l.b16 %v438
          %v789 = vunpack.c.h.b16 %v438
          %v790 = vunpack.c.l.b16 %v439
          %v791 = vunpack.c.h.b16 %v439
          %v792 = vunpack.c.l.b16 %v440
          %v793 = vunpack.c.h.b16 %v440
          %v794 = vunpack.c.l.b16 %v441
          %v795 = vunpack.c.h.b16 %v441
          %v796 = vunpack.c.l.b16 %v442
          %v797 = vunpack.c.h.b16 %v442
          %v798 = vunpack.c.l.b16 %v443
          %v799 = vunpack.c.h.b16 %v443
          %v800 = vunpack.c.l.b16 %v444
          %v801 = vunpack.c.h.b16 %v444
          %v802 = vunpack.c.l.b16 %v445
          %v803 = vunpack.c.h.b16 %v445
          %v804 = vunpack.c.l.b16 %v446
          %v805 = vunpack.c.h.b16 %v446
          %v806 = vunpack.c.l.b16 %v447
          %v807 = vunpack.c.h.b16 %v447
          %v808 = vunpack.c.l.b16 %v448
          %v809 = vunpack.c.h.b16 %v448
          %v810 = vunpack.c.l.b16 %v449
          %v811 = vunpack.c.h.b16 %v449
          %v812 = vunpack.c.l.b16 %v450
          %v813 = vunpack.c.h.b16 %v450
          %v814 = vunpack.c.l.b16 %v451
          %v815 = vunpack.c.h.b16 %v451
          %v816 = vunpack.c.l.b16 %v452
          %v817 = vunpack.c.h.b16 %v452
          %v818 = vunpack.c.l.b16 %v453
          %v819 = vunpack.c.h.b16 %v453
          %v820 = vunpack.c.l.b16 %v454
          %v821 = vunpack.c.h.b16 %v454
          %v822 = vunpack.c.l.b16 %v455
          %v823 = vunpack.c.h.b16 %v455
          %v824 = vunpack.c.l.b16 %v456
          %v825 = vunpack.c.h.b16 %v456
          %v826 = vunpack.c.l.b16 %v457
          %v827 = vunpack.c.h.b16 %v457
          %v828 = vunpack.c.l.b16 %v458
          %v829 = vunpack.c.h.b16 %v458
          %v830 = vunpack.c.l.b16 %v459
          %v831 = vunpack.c.h.b16 %v459
          %v832 = vunpack.c.l.b16 %v460
          %v833 = vunpack.c.h.b16 %v460
          %v834 = vunpack.c.l.b16 %v461
          %v835 = vunpack.c.h.b16 %v461
          %v836 = vunpack.c.l.b16 %v462
          %v837 = vunpack.c.h.b16 %v462
          %v838 = vunpack.c.l.b16 %v463
          %v839 = vunpack.c.h.b16 %v463
          %v840 = vunpack.c.l.b16 %v464
          %v841 = vunpack.c.h.b16 %v464
          %v842 = vunpack.c.l.b16 %v465
          %v843 = vunpack.c.h.b16 %v465
          %v844 = vunpack.c.l.b16 %v466
          %v845 = vunpack.c.h.b16 %v466
          %v846 = vunpack.c.l.b16 %v467
          %v847 = vunpack.c.h.b16 %v467
          %v848 = vunpack.c.l.b16 %v468
          %v849 = vunpack.c.h.b16 %v468
          %v850 = vunpack.c.l.b16 %v469
          %v851 = vunpack.c.h.b16 %v469
          %v852 = vunpack.c.l.b16 %v470
          %v853 = vunpack.c.h.b16 %v470
          %v854 = vunpack.c.l.b16 %v471
          %v855 = vunpack.c.h.b16 %v471
          %v856 = vunpack.c.l.b16 %v472
          %v857 = vunpack.c.h.b16 %v472
          %v858 = vunpack.c.l.b16 %v473
          %v859 = vunpack.c.h.b16 %v473
          %v860 = vunpack.c.l.b16 %v474
          %v861 = vunpack.c.h.b16 %v474
          %v862 = vunpack.c.l.b16 %v475
          %v863 = vunpack.c.h.b16 %v475
          %v864 = vunpack.c.l.b16 %v476
          %v865 = vunpack.c.h.b16 %v476
          %v866 = vunpack.c.l.b16 %v477
          %v867 = vunpack.c.h.b16 %v477
          %v868 = vunpack.c.l.b16 %v478
          %v869 = vunpack.c.h.b16 %v478
          %v870 = vunpack.c.l.b16 %v479
          %v871 = vunpack.c.h.b16 %v479
          %v872 = vunpack.c.l.b16 %v480
          %v873 = vunpack.c.h.b16 %v480
          %v874 = vunpack.c.l.b16 %v481
          %v875 = vunpack.c.h.b16 %v481
          %v876 = vunpack.c.l.b16 %v482
          %v877 = vunpack.c.h.b16 %v482
          %v878 = vunpack.c.l.b16 %v483
          %v879 = vunpack.c.h.b16 %v483
          %v880 = vunpack.c.l.b16 %v484
          %v881 = vunpack.c.h.b16 %v484
          %v882 = vunpack.c.l.b16 %v485
          %v883 = vunpack.c.h.b16 %v485
          %v884 = vunpack.c.l.b16 %v486
          %v885 = vunpack.c.h.b16 %v486
          %v886 = vunpack.c.l.b16 %v487
          %v887 = vunpack.c.h.b16 %v487
          %v888 = vunpack.c.l.b16 %v488
          %v889 = vunpack.c.h.b16 %v488
          %v890 = vunpack.c.l.b16 %v489
          %v891 = vunpack.c.h.b16 %v489
          %v892 = vunpack.c.l.b16 %v490
          %v893 = vunpack.c.h.b16 %v490
          %v894 = vunpack.c.l.b16 %v491
          %v895 = vunpack.c.h.b16 %v491
          %v896 = vunpack.c.l.b16 %v492
          %v897 = vunpack.c.h.b16 %v492
          %v898 = vunpack.c.l.b16 %v493
          %v899 = vunpack.c.h.b16 %v493
          %v900 = vunpack.c.l.b16 %v494
          %v901 = vunpack.c.h.b16 %v494
          %v902 = vunpack.c.l.b16 %v495
          %v903 = vunpack.c.h.b16 %v495
          %v904 = vunpack.c.l.b16 %v496
          %v905 = vunpack.c.h.b16 %v496
          %v906 = vunpack.c.l.b16 %v497
          %v907 = vunpack.c.h.b16 %v497
          %v908 = vunpack.c.l.b16 %v498
          %v909 = vunpack.c.h.b16 %v498
          %v910 = vunpack.c.l.b16 %v499
          %v911 = vunpack.c.h.b16 %v499
          %v912 = vunpack.c.l.b16 %v500
          %v913 = vunpack.c.h.b16 %v500
          %v914 = vunpack.c.l.b16 %v501
          %v915 = vunpack.c.h.b16 %v501
          %v916 = vunpack.c.l.b16 %v502
          %v917 = vunpack.c.h.b16 %v502
          %v918 = vunpack.c.l.b16 %v503
          %v919 = vunpack.c.h.b16 %v503
          %v920 = vunpack.c.l.b16 %v504
          %v921 = vunpack.c.h.b16 %v504
          %v922 = vunpack.c.l.b16 %v505
          %v923 = vunpack.c.h.b16 %v505
          %v924 = vunpack.c.l.b16 %v506
          %v925 = vunpack.c.h.b16 %v506
          %v926 = vunpack.c.l.b16 %v507
          %v927 = vunpack.c.h.b16 %v507
          %v928 = vunpack.c.l.b16 %v508
          %v929 = vunpack.c.h.b16 %v508
          %v930 = vunpack.c.l.b16 %v509
          %v931 = vunpack.c.h.b16 %v509
          %v932 = vunpack.c.l.b16 %v510
          %v933 = vunpack.c.h.b16 %v510
          %v934 = vunpack.c.l.b16 %v511
          %v935 = vunpack.c.h.b16 %v511
          %v936 = vunpack.c.l.b16 %v512
          %v937 = vunpack.c.h.b16 %v512
          %v938 = vunpack.c.l.b16 %v513
          %v939 = vunpack.c.h.b16 %v513
          %v940 = vunpack.c.l.b16 %v514
          %v941 = vunpack.c.h.b16 %v514
          %v942 = vunpack.c.l.b16 %v515
          %v943 = vunpack.c.h.b16 %v515
          %v944 = vunpack.c.l.b16 %v516
          %v945 = vunpack.c.h.b16 %v516
          %v946 = vunpack.c.l.b16 %v517
          %v947 = vunpack.c.h.b16 %v517
          %v948 = vunpack.c.l.b16 %v518
          %v949 = vunpack.c.h.b16 %v518
          %v950 = vunpack.c.l.b16 %v519
          %v951 = vunpack.c.h.b16 %v519
          %v952 = vunpack.c.l.b16 %v520
          %v953 = vunpack.c.h.b16 %v520
          %v954 = vunpack.c.l.b16 %v521
          %v955 = vunpack.c.h.b16 %v521
          %v956 = vunpack.c.l.b16 %v522
          %v957 = vunpack.c.h.b16 %v522
          %v958 = vunpack.c.l.b16 %v523
          %v959 = vunpack.c.h.b16 %v523
          %v960 = vunpack.c.l.b16 %v524
          %v961 = vunpack.c.h.b16 %v524
          %v962 = vunpack.c.l.b16 %v525
          %v963 = vunpack.c.h.b16 %v525
          %v964 = vunpack.c.l.b16 %v526
          %v965 = vunpack.c.h.b16 %v526
          %v966 = vunpack.c.l.b16 %v527
          %v967 = vunpack.c.h.b16 %v527
          %v968 = vunpack.c.l.b16 %v528
          %v969 = vunpack.c.h.b16 %v528
          %v970 = vunpack.c.l.b16 %v529
          %v971 = vunpack.c.h.b16 %v529
          %v972 = vunpack.c.l.b16 %v530
          %v973 = vunpack.c.h.b16 %v530
          %v974 = vunpack.c.l.b16 %v531
          %v975 = vunpack.c.h.b16 %v531
          %v976 = vunpack.c.l.b16 %v532
          %v977 = vunpack.c.h.b16 %v532
          %v978 = vunpack.c.l.b16 %v533
          %v979 = vunpack.c.h.b16 %v533
          %v980 = vunpack.c.l.b16 %v534
          %v981 = vunpack.c.h.b16 %v534
          %v982 = vunpack.c.l.b16 %v535
          %v983 = vunpack.c.h.b16 %v535
          %v984 = vunpack.c.l.b16 %v536
          %v985 = vunpack.c.h.b16 %v536
          %v986 = vunpack.c.l.b16 %v537
          %v987 = vunpack.c.h.b16 %v537
          %v988 = vunpack.c.l.b16 %v538
          %v989 = vunpack.c.h.b16 %v538
          %v990 = vunpack.c.l.b16 %v539
          %v991 = vunpack.c.h.b16 %v539
          %v992 = vunpack.c.l.b16 %v540
          %v993 = vunpack.c.h.b16 %v540
          %v994 = vunpack.c.l.b16 %v541
          %v995 = vunpack.c.h.b16 %v541
          %v996 = vunpack.c.l.b16 %v542
          %v997 = vunpack.c.h.b16 %v542
          %v998 = vunpack.c.l.b16 %v543
          %v999 = vunpack.c.h.b16 %v543
          %v1000 = vunpack.c.l.b16 %v544
          %v1001 = vunpack.c.h.b16 %v544
          %v1002 = vunpack.c.l.b16 %v545
          %v1003 = vunpack.c.h.b16 %v545
          %v1004 = vunpack.c.l.b16 %v546
          %v1005 = vunpack.c.h.b16 %v546
          %v1006 = vunpack.c.l.b16 %v547
          %v1007 = vunpack.c.h.b16 %v547
          %v1008 = vunpack.c.l.b16 %v548
          %v1009 = vunpack.c.h.b16 %v548
          %v1010 = vunpack.c.l.b16 %v549
          %v1011 = vunpack.c.h.b16 %v549
          %v1012 = vunpack.c.l.b16 %v550
          %v1013 = vunpack.c.h.b16 %v550
          %v1014 = vunpack.c.l.b16 %v551
          %v1015 = vunpack.c.h.b16 %v551
          %v1016 = vunpack.c.l.b16 %v552
          %v1017 = vunpack.c.h.b16 %v552
          %v1018 = vunpack.c.l.b16 %v553
          %v1019 = vunpack.c.h.b16 %v553
          %v1020 = vunpack.c.l.b16 %v554
          %v1021 = vunpack.c.h.b16 %v554
          %v1022 = vunpack.c.l.b16 %v555
          %v1023 = vunpack.c.h.b16 %v555
          %v1024 = vpack.c.b16 %v784, %v768
          %v1025 = vpack.c.b16 %v785, %v769
          %v1026 = vpack.c.b16 %v786, %v770
          %v1027 = vpack.c.b16 %v787, %v771
          %v1028 = vpack.c.b16 %v788, %v772
          %v1029 = vpack.c.b16 %v789, %v773
          %v1030 = vpack.c.b16 %v790, %v774
          %v1031 = vpack.c.b16 %v791, %v775
          %v1032 = vpack.c.b16 %v792, %v776
          %v1033 = vpack.c.b16 %v793, %v777
          %v1034 = vpack.c.b16 %v794, %v778
          %v1035 = vpack.c.b16 %v795, %v779
          %v1036 = vpack.c.b16 %v796, %v780
          %v1037 = vpack.c.b16 %v797, %v781
          %v1038 = vpack.c.b16 %v798, %v782
          %v1039 = vpack.c.b16 %v799, %v783
          %v1040 = vpack.c.b16 %v816, %v800
          %v1041 = vpack.c.b16 %v817, %v801
          %v1042 = vpack.c.b16 %v818, %v802
          %v1043 = vpack.c.b16 %v819, %v803
          %v1044 = vpack.c.b16 %v820, %v804
          %v1045 = vpack.c.b16 %v821, %v805
          %v1046 = vpack.c.b16 %v822, %v806
          %v1047 = vpack.c.b16 %v823, %v807
          %v1048 = vpack.c.b16 %v824, %v808
          %v1049 = vpack.c.b16 %v825, %v809
          %v1050 = vpack.c.b16 %v826, %v810
          %v1051 = vpack.c.b16 %v827, %v811
          %v1052 = vpack.c.b16 %v828, %v812
          %v1053 = vpack.c.b16 %v829, %v813
          %v1054 = vpack.c.b16 %v830, %v814
          %v1055 = vpack.c.b16 %v831, %v815
          %v1056 = vpack.c.b16 %v848, %v832
          %v1057 = vpack.c.b16 %v849, %v833
          %v1058 = vpack.c.b16 %v850, %v834
          %v1059 = vpack.c.b16 %v851, %v835
          %v1060 = vpack.c.b16 %v852, %v836
          %v1061 = vpack.c.b16 %v853, %v837
          %v1062 = vpack.c.b16 %v854, %v838
          %v1063 = vpack.c.b16 %v855, %v839
          %v1064 = vpack.c.b16 %v856, %v840
          %v1065 = vpack.c.b16 %v857, %v841
          %v1066 = vpack.c.b16 %v858, %v842
          %v1067 = vpack.c.b16 %v859, %v843
          %v1068 = vpack.c.b16 %v860, %v844
          %v1069 = vpack.c.b16 %v861, %v845
          %v1070 = vpack.c.b16 %v862, %v846
          %v1071 = vpack.c.b16 %v863, %v847
          %v1072 = vpack.c.b16 %v880, %v864
          %v1073 = vpack.c.b16 %v881, %v865
          %v1074 = vpack.c.b16 %v882, %v866
          %v1075 = vpack.c.b16 %v883, %v867
          %v1076 = vpack.c.b16 %v884, %v868
          %v1077 = vpack.c.b16 %v885, %v869
          %v1078 = vpack.c.b16 %v886, %v870
          %v1079 = vpack.c.b16 %v887, %v871
          %v1080 = vpack.c.b16 %v888, %v872
          %v1081 = vpack.c.b16 %v889, %v873
          %v1082 = vpack.c.b16 %v890, %v874
          %v1083 = vpack.c.b16 %v891, %v875
          %v1084 = vpack.c.b16 %v892, %v876
          %v1085 = vpack.c.b16 %v893, %v877
          %v1086 = vpack.c.b16 %v894, %v878
          %v1087 = vpack.c.b16 %v895, %v879
          %v1088 = vpack.c.b16 %v912, %v896
          %v1089 = vpack.c.b16 %v913, %v897
          %v1090 = vpack.c.b16 %v914, %v898
          %v1091 = vpack.c.b16 %v915, %v899
          %v1092 = vpack.c.b16 %v916, %v900
          %v1093 = vpack.c.b16 %v917, %v901
          %v1094 = vpack.c.b16 %v918, %v902
          %v1095 = vpack.c.b16 %v919, %v903
          %v1096 = vpack.c.b16 %v920, %v904
          %v1097 = vpack.c.b16 %v921, %v905
          %v1098 = vpack.c.b16 %v922, %v906
          %v1099 = vpack.c.b16 %v923, %v907
          %v1100 = vpack.c.b16 %v924, %v908
          %v1101 = vpack.c.b16 %v925, %v909
          %v1102 = vpack.c.b16 %v926, %v910
          %v1103 = vpack.c.b16 %v927, %v911
          %v1104 = vpack.c.b16 %v944, %v928
          %v1105 = vpack.c.b16 %v945, %v929
          %v1106 = vpack.c.b16 %v946, %v930
          %v1107 = vpack.c.b16 %v947, %v931
          %v1108 = vpack.c.b16 %v948, %v932
          %v1109 = vpack.c.b16 %v949, %v933
          %v1110 = vpack.c.b16 %v950, %v934
          %v1111 = vpack.c.b16 %v951, %v935
          %v1112 = vpack.c.b16 %v952, %v936
          %v1113 = vpack.c.b16 %v953, %v937
          %v1114 = vpack.c.b16 %v954, %v938
          %v1115 = vpack.c.b16 %v955, %v939
          %v1116 = vpack.c.b16 %v956, %v940
          %v1117 = vpack.c.b16 %v957, %v941
          %v1118 = vpack.c.b16 %v958, %v942
          %v1119 = vpack.c.b16 %v959, %v943
          %v1120 = vpack.c.b16 %v976, %v960
          %v1121 = vpack.c.b16 %v977, %v961
          %v1122 = vpack.c.b16 %v978, %v962
          %v1123 = vpack.c.b16 %v979, %v963
          %v1124 = vpack.c.b16 %v980, %v964
          %v1125 = vpack.c.b16 %v981, %v965
          %v1126 = vpack.c.b16 %v982, %v966
          %v1127 = vpack.c.b16 %v983, %v967
          %v1128 = vpack.c.b16 %v984, %v968
          %v1129 = vpack.c.b16 %v985, %v969
          %v1130 = vpack.c.b16 %v986, %v970
          %v1131 = vpack.c.b16 %v987, %v971
          %v1132 = vpack.c.b16 %v988, %v972
          %v1133 = vpack.c.b16 %v989, %v973
          %v1134 = vpack.c.b16 %v990, %v974
          %v1135 = vpack.c.b16 %v991, %v975
          %v1136 = vpack.c.b16 %v1008, %v992
          %v1137 = vpack.c.b16 %v1009, %v993
          %v1138 = vpack.c.b16 %v1010, %v994
          %v1139 = vpack.c.b16 %v1011, %v995
          %v1140 = vpack.c.b16 %v1012, %v996
          %v1141 = vpack.c.b16 %v1013, %v997
          %v1142 = vpack.c.b16 %v1014, %v998
          %v1143 = vpack.c.b16 %v1015, %v999
          %v1144 = vpack.c.b16 %v1016, %v1000
          %v1145 = vpack.c.b16 %v1017, %v1001
          %v1146 = vpack.c.b16 %v1018, %v1002
          %v1147 = vpack.c.b16 %v1019, %v1003
          %v1148 = vpack.c.b16 %v1020, %v1004
          %v1149 = vpack.c.b16 %v1021, %v1005
          %v1150 = vpack.c.b16 %v1022, %v1006
          %v1151 = vpack.c.b16 %v1023, %v1007
          %1280 = vmatprep.subr.bf16.mxu0 %v1025
          %1281 = vmatpush1.bf16.msra.mxu0 %v1024
          %1282 = vmatprep.subr.bf16.mxu0 %v1041
          %1283 = vmatpush1.bf16.msra.mxu0 %v1040
          %1284 = vmatprep.subr.bf16.mxu0 %v1057
          %1285 = vmatpush1.bf16.msra.mxu0 %v1056
          %1286 = vmatprep.subr.bf16.mxu0 %v1073
          %1287 = vmatpush1.bf16.msra.mxu0 %v1072
          %1288 = vmatprep.subr.bf16.mxu0 %v1089
          %1289 = vmatpush1.bf16.msra.mxu0 %v1088
          %1290 = vmatprep.subr.bf16.mxu0 %v1105
          %1291 = vmatpush1.bf16.msra.mxu0 %v1104
          %1292 = vmatprep.subr.bf16.mxu0 %v1121
          %1293 = vmatpush1.bf16.msra.mxu0 %v1120
          %1294 = vmatprep.subr.bf16.mxu0 %v1137
          %1295 = vmatpush1.bf16.msra.mxu0 %v1136
          %1296 = vmatprep.subr.bf16.mxu0 0
          %1297 = vmatpush1.bf16.msra.mxu0 0
          %1298 = vmatprep.subr.bf16.mxu0 0
          %1299 = vmatpush1.bf16.msra.mxu0 0
          %1300 = vmatprep.subr.bf16.mxu0 0
          %1301 = vmatpush1.bf16.msra.mxu0 0
          %1302 = vmatprep.subr.bf16.mxu0 0
          %1303 = vmatpush1.bf16.msra.mxu0 0
          %1304 = vmatprep.subr.bf16.mxu0 0
          %1305 = vmatpush1.bf16.msra.mxu0 0
          %1306 = vmatprep.subr.bf16.mxu0 0
          %1307 = vmatpush1.bf16.msra.mxu0 0
          %1308 = vmatprep.subr.bf16.mxu0 0
          %1309 = vmatpush1.bf16.msra.mxu0 0
          %1310 = vmatprep.subr.bf16.mxu0 0
          %1311 = vmatpush1.bf16.msra.mxu0 0
          %1312 = vmatprep.mubr.bf16.mxu0 0
          %1313 = vmatmul.mubr.bf16.gmra.mrb[0].mxu0 %v427
          %v1314 = vpop.f32.mrb[0].mxu0
          %v1315 = vadd.f32 %v563, %v1314
          %v1316 = vpop.f32.mrb[0].mxu0
          %v1317 = vadd.f32 %v567, %v1316
          %v1318 = vpop.f32.mrb[0].mxu0
          %v1319 = vpop.f32.mrb[0].mxu0
          %1320 = vdwg.mxu0
          %1321 = vmatprep.subr.bf16.mxu0 %v1027
          %1322 = vmatpush1.bf16.msra.mxu0 %v1026
          %1323 = vmatprep.subr.bf16.mxu0 %v1043
          %1324 = vmatpush1.bf16.msra.mxu0 %v1042
          %1325 = vmatprep.subr.bf16.mxu0 %v1059
          %1326 = vmatpush1.bf16.msra.mxu0 %v1058
          %1327 = vmatprep.subr.bf16.mxu0 %v1075
          %1328 = vmatpush1.bf16.msra.mxu0 %v1074
          %1329 = vmatprep.subr.bf16.mxu0 %v1091
          %1330 = vmatpush1.bf16.msra.mxu0 %v1090
          %1331 = vmatprep.subr.bf16.mxu0 %v1107
          %1332 = vmatpush1.bf16.msra.mxu0 %v1106
          %1333 = vmatprep.subr.bf16.mxu0 %v1123
          %1334 = vmatpush1.bf16.msra.mxu0 %v1122
          %1335 = vmatprep.subr.bf16.mxu0 %v1139
          %1336 = vmatpush1.bf16.msra.mxu0 %v1138
          %1337 = vmatprep.subr.bf16.mxu0 0
          %1338 = vmatpush1.bf16.msra.mxu0 0
          %1339 = vmatprep.subr.bf16.mxu0 0
          %1340 = vmatpush1.bf16.msra.mxu0 0
          %1341 = vmatprep.subr.bf16.mxu0 0
          %1342 = vmatpush1.bf16.msra.mxu0 0
          %1343 = vmatprep.subr.bf16.mxu0 0
          %1344 = vmatpush1.bf16.msra.mxu0 0
          %1345 = vmatprep.subr.bf16.mxu0 0
          %1346 = vmatpush1.bf16.msra.mxu0 0
          %1347 = vmatprep.subr.bf16.mxu0 0
          %1348 = vmatpush1.bf16.msra.mxu0 0
          %1349 = vmatprep.subr.bf16.mxu0 0
          %1350 = vmatpush1.bf16.msra.mxu0 0
          %1351 = vmatprep.subr.bf16.mxu0 0
          %1352 = vmatpush1.bf16.msra.mxu0 0
          %1353 = vmatprep.mubr.bf16.mxu0 0
          %1354 = vmatmul.mubr.bf16.gmra.mrb[0].mxu0 %v427
          %v1355 = vpop.f32.mrb[0].mxu0
          %v1356 = vadd.f32 %v571, %v1355
          %v1357 = vpop.f32.mrb[0].mxu0
          %v1358 = vadd.f32 %v575, %v1357
          %v1359 = vpop.f32.mrb[0].mxu0
          %v1360 = vpop.f32.mrb[0].mxu0
          %1361 = vdwg.mxu0
          %1362 = vmatprep.subr.bf16.mxu0 %v1029
          %1363 = vmatpush1.bf16.msra.mxu0 %v1028
          %1364 = vmatprep.subr.bf16.mxu0 %v1045
          %1365 = vmatpush1.bf16.msra.mxu0 %v1044
          %1366 = vmatprep.subr.bf16.mxu0 %v1061
          %1367 = vmatpush1.bf16.msra.mxu0 %v1060
          %1368 = vmatprep.subr.bf16.mxu0 %v1077
          %1369 = vmatpush1.bf16.msra.mxu0 %v1076
          %1370 = vmatprep.subr.bf16.mxu0 %v1093
          %1371 = vmatpush1.bf16.msra.mxu0 %v1092
          %1372 = vmatprep.subr.bf16.mxu0 %v1109
          %1373 = vmatpush1.bf16.msra.mxu0 %v1108
          %1374 = vmatprep.subr.bf16.mxu0 %v1125
          %1375 = vmatpush1.bf16.msra.mxu0 %v1124
          %1376 = vmatprep.subr.bf16.mxu0 %v1141
          %1377 = vmatpush1.bf16.msra.mxu0 %v1140
          %1378 = vmatprep.subr.bf16.mxu0 0
          %1379 = vmatpush1.bf16.msra.mxu0 0
          %1380 = vmatprep.subr.bf16.mxu0 0
          %1381 = vmatpush1.bf16.msra.mxu0 0
          %1382 = vmatprep.subr.bf16.mxu0 0
          %1383 = vmatpush1.bf16.msra.mxu0 0
          %1384 = vmatprep.subr.bf16.mxu0 0
          %1385 = vmatpush1.bf16.msra.mxu0 0
          %1386 = vmatprep.subr.bf16.mxu0 0
          %1387 = vmatpush1.bf16.msra.mxu0 0
          %1388 = vmatprep.subr.bf16.mxu0 0
          %1389 = vmatpush1.bf16.msra.mxu0 0
          %1390 = vmatprep.subr.bf16.mxu0 0
          %1391 = vmatpush1.bf16.msra.mxu0 0
          %1392 = vmatprep.subr.bf16.mxu0 0
          %1393 = vmatpush1.bf16.msra.mxu0 0
          %1394 = vmatprep.mubr.bf16.mxu0 0
          %1395 = vmatmul.mubr.bf16.gmra.mrb[0].mxu0 %v427
          %v1396 = vpop.f32.mrb[0].mxu0
          %v1397 = vadd.f32 %v579, %v1396
          %v1398 = vpop.f32.mrb[0].mxu0
          %v1399 = vadd.f32 %v583, %v1398
          %v1400 = vpop.f32.mrb[0].mxu0
          %v1401 = vpop.f32.mrb[0].mxu0
          %1402 = vdwg.mxu0
          %1403 = vmatprep.subr.bf16.mxu0 %v1031
          %1404 = vmatpush1.bf16.msra.mxu0 %v1030
          %1405 = vmatprep.subr.bf16.mxu0 %v1047
          %1406 = vmatpush1.bf16.msra.mxu0 %v1046
          %1407 = vmatprep.subr.bf16.mxu0 %v1063
          %1408 = vmatpush1.bf16.msra.mxu0 %v1062
          %1409 = vmatprep.subr.bf16.mxu0 %v1079
          %1410 = vmatpush1.bf16.msra.mxu0 %v1078
          %1411 = vmatprep.subr.bf16.mxu0 %v1095
          %1412 = vmatpush1.bf16.msra.mxu0 %v1094
          %1413 = vmatprep.subr.bf16.mxu0 %v1111
          %1414 = vmatpush1.bf16.msra.mxu0 %v1110
          %1415 = vmatprep.subr.bf16.mxu0 %v1127
          %1416 = vmatpush1.bf16.msra.mxu0 %v1126
          %1417 = vmatprep.subr.bf16.mxu0 %v1143
          %1418 = vmatpush1.bf16.msra.mxu0 %v1142
          %1419 = vmatprep.subr.bf16.mxu0 0
          %1420 = vmatpush1.bf16.msra.mxu0 0
          %1421 = vmatprep.subr.bf16.mxu0 0
          %1422 = vmatpush1.bf16.msra.mxu0 0
          %1423 = vmatprep.subr.bf16.mxu0 0
          %1424 = vmatpush1.bf16.msra.mxu0 0
          %1425 = vmatprep.subr.bf16.mxu0 0
          %1426 = vmatpush1.bf16.msra.mxu0 0
          %1427 = vmatprep.subr.bf16.mxu0 0
          %1428 = vmatpush1.bf16.msra.mxu0 0
          %1429 = vmatprep.subr.bf16.mxu0 0
          %1430 = vmatpush1.bf16.msra.mxu0 0
          %1431 = vmatprep.subr.bf16.mxu0 0
          %1432 = vmatpush1.bf16.msra.mxu0 0
          %1433 = vmatprep.subr.bf16.mxu0 0
          %1434 = vmatpush1.bf16.msra.mxu0 0
          %1435 = vmatprep.mubr.bf16.mxu0 0
          %1436 = vmatmul.mubr.bf16.gmra.mrb[0].mxu0 %v427
          %v1437 = vpop.f32.mrb[0].mxu0
          %v1438 = vadd.f32 %v587, %v1437
          %v1439 = vpop.f32.mrb[0].mxu0
          %v1440 = vadd.f32 %v591, %v1439
          %v1441 = vpop.f32.mrb[0].mxu0
          %v1442 = vpop.f32.mrb[0].mxu0
          %1443 = vdwg.mxu0
          %1444 = vmatprep.subr.bf16.mxu0 %v1033
          %1445 = vmatpush1.bf16.msra.mxu0 %v1032
          %1446 = vmatprep.subr.bf16.mxu0 %v1049
          %1447 = vmatpush1.bf16.msra.mxu0 %v1048
          %1448 = vmatprep.subr.bf16.mxu0 %v1065
          %1449 = vmatpush1.bf16.msra.mxu0 %v1064
          %1450 = vmatprep.subr.bf16.mxu0 %v1081
          %1451 = vmatpush1.bf16.msra.mxu0 %v1080
          %1452 = vmatprep.subr.bf16.mxu0 %v1097
          %1453 = vmatpush1.bf16.msra.mxu0 %v1096
          %1454 = vmatprep.subr.bf16.mxu0 %v1113
          %1455 = vmatpush1.bf16.msra.mxu0 %v1112
          %1456 = vmatprep.subr.bf16.mxu0 %v1129
          %1457 = vmatpush1.bf16.msra.mxu0 %v1128
          %1458 = vmatprep.subr.bf16.mxu0 %v1145
          %1459 = vmatpush1.bf16.msra.mxu0 %v1144
          %1460 = vmatprep.subr.bf16.mxu0 0
          %1461 = vmatpush1.bf16.msra.mxu0 0
          %1462 = vmatprep.subr.bf16.mxu0 0
          %1463 = vmatpush1.bf16.msra.mxu0 0
          %1464 = vmatprep.subr.bf16.mxu0 0
          %1465 = vmatpush1.bf16.msra.mxu0 0
          %1466 = vmatprep.subr.bf16.mxu0 0
          %1467 = vmatpush1.bf16.msra.mxu0 0
          %1468 = vmatprep.subr.bf16.mxu0 0
          %1469 = vmatpush1.bf16.msra.mxu0 0
          %1470 = vmatprep.subr.bf16.mxu0 0
          %1471 = vmatpush1.bf16.msra.mxu0 0
          %1472 = vmatprep.subr.bf16.mxu0 0
          %1473 = vmatpush1.bf16.msra.mxu0 0
          %1474 = vmatprep.subr.bf16.mxu0 0
          %1475 = vmatpush1.bf16.msra.mxu0 0
          %1476 = vmatprep.mubr.bf16.mxu0 0
          %1477 = vmatmul.mubr.bf16.gmra.mrb[0].mxu0 %v427
          %v1478 = vpop.f32.mrb[0].mxu0
          %v1479 = vadd.f32 %v595, %v1478
          %v1480 = vpop.f32.mrb[0].mxu0
          %v1481 = vadd.f32 %v599, %v1480
          %v1482 = vpop.f32.mrb[0].mxu0
          %v1483 = vpop.f32.mrb[0].mxu0
          %1484 = vdwg.mxu0
          %1485 = vmatprep.subr.bf16.mxu0 %v1035
          %1486 = vmatpush1.bf16.msra.mxu0 %v1034
          %1487 = vmatprep.subr.bf16.mxu0 %v1051
          %1488 = vmatpush1.bf16.msra.mxu0 %v1050
          %1489 = vmatprep.subr.bf16.mxu0 %v1067
          %1490 = vmatpush1.bf16.msra.mxu0 %v1066
          %1491 = vmatprep.subr.bf16.mxu0 %v1083
          %1492 = vmatpush1.bf16.msra.mxu0 %v1082
          %1493 = vmatprep.subr.bf16.mxu0 %v1099
          %1494 = vmatpush1.bf16.msra.mxu0 %v1098
          %1495 = vmatprep.subr.bf16.mxu0 %v1115
          %1496 = vmatpush1.bf16.msra.mxu0 %v1114
          %1497 = vmatprep.subr.bf16.mxu0 %v1131
          %1498 = vmatpush1.bf16.msra.mxu0 %v1130
          %1499 = vmatprep.subr.bf16.mxu0 %v1147
          %1500 = vmatpush1.bf16.msra.mxu0 %v1146
          %1501 = vmatprep.subr.bf16.mxu0 0
          %1502 = vmatpush1.bf16.msra.mxu0 0
          %1503 = vmatprep.subr.bf16.mxu0 0
          %1504 = vmatpush1.bf16.msra.mxu0 0
          %1505 = vmatprep.subr.bf16.mxu0 0
          %1506 = vmatpush1.bf16.msra.mxu0 0
          %1507 = vmatprep.subr.bf16.mxu0 0
          %1508 = vmatpush1.bf16.msra.mxu0 0
          %1509 = vmatprep.subr.bf16.mxu0 0
          %1510 = vmatpush1.bf16.msra.mxu0 0
          %1511 = vmatprep.subr.bf16.mxu0 0
          %1512 = vmatpush1.bf16.msra.mxu0 0
          %1513 = vmatprep.subr.bf16.mxu0 0
          %1514 = vmatpush1.bf16.msra.mxu0 0
          %1515 = vmatprep.subr.bf16.mxu0 0
          %1516 = vmatpush1.bf16.msra.mxu0 0
          %1517 = vmatprep.mubr.bf16.mxu0 0
          %1518 = vmatmul.mubr.bf16.gmra.mrb[0].mxu0 %v427
          %v1519 = vpop.f32.mrb[0].mxu0
          %v1520 = vadd.f32 %v603, %v1519
          %v1521 = vpop.f32.mrb[0].mxu0
          %v1522 = vadd.f32 %v607, %v1521
          %v1523 = vpop.f32.mrb[0].mxu0
          %v1524 = vpop.f32.mrb[0].mxu0
          %1525 = vdwg.mxu0
          %1526 = vmatprep.subr.bf16.mxu0 %v1037
          %1527 = vmatpush1.bf16.msra.mxu0 %v1036
          %1528 = vmatprep.subr.bf16.mxu0 %v1053
          %1529 = vmatpush1.bf16.msra.mxu0 %v1052
          %1530 = vmatprep.subr.bf16.mxu0 %v1069
          %1531 = vmatpush1.bf16.msra.mxu0 %v1068
          %1532 = vmatprep.subr.bf16.mxu0 %v1085
          %1533 = vmatpush1.bf16.msra.mxu0 %v1084
          %1534 = vmatprep.subr.bf16.mxu0 %v1101
          %1535 = vmatpush1.bf16.msra.mxu0 %v1100
          %1536 = vmatprep.subr.bf16.mxu0 %v1117
          %1537 = vmatpush1.bf16.msra.mxu0 %v1116
          %1538 = vmatprep.subr.bf16.mxu0 %v1133
          %1539 = vmatpush1.bf16.msra.mxu0 %v1132
          %1540 = vmatprep.subr.bf16.mxu0 %v1149
          %1541 = vmatpush1.bf16.msra.mxu0 %v1148
          %1542 = vmatprep.subr.bf16.mxu0 0
          %1543 = vmatpush1.bf16.msra.mxu0 0
          %1544 = vmatprep.subr.bf16.mxu0 0
          %1545 = vmatpush1.bf16.msra.mxu0 0
          %1546 = vmatprep.subr.bf16.mxu0 0
          %1547 = vmatpush1.bf16.msra.mxu0 0
          %1548 = vmatprep.subr.bf16.mxu0 0
          %1549 = vmatpush1.bf16.msra.mxu0 0
          %1550 = vmatprep.subr.bf16.mxu0 0
          %1551 = vmatpush1.bf16.msra.mxu0 0
          %1552 = vmatprep.subr.bf16.mxu0 0
          %1553 = vmatpush1.bf16.msra.mxu0 0
          %1554 = vmatprep.subr.bf16.mxu0 0
          %1555 = vmatpush1.bf16.msra.mxu0 0
          %1556 = vmatprep.subr.bf16.mxu0 0
          %1557 = vmatpush1.bf16.msra.mxu0 0
          %1558 = vmatprep.mubr.bf16.mxu0 0
          %1559 = vmatmul.mubr.bf16.gmra.mrb[0].mxu0 %v427
          %v1560 = vpop.f32.mrb[0].mxu0
          %v1561 = vadd.f32 %v611, %v1560
          %v1562 = vpop.f32.mrb[0].mxu0
          %v1563 = vadd.f32 %v615, %v1562
          %v1564 = vpop.f32.mrb[0].mxu0
          %v1565 = vpop.f32.mrb[0].mxu0
          %1566 = vdwg.mxu0
          %1567 = vmatprep.subr.bf16.mxu0 %v1039
          %1568 = vmatpush1.bf16.msra.mxu0 %v1038
          %1569 = vmatprep.subr.bf16.mxu0 %v1055
          %1570 = vmatpush1.bf16.msra.mxu0 %v1054
          %1571 = vmatprep.subr.bf16.mxu0 %v1071
          %1572 = vmatpush1.bf16.msra.mxu0 %v1070
          %1573 = vmatprep.subr.bf16.mxu0 %v1087
          %1574 = vmatpush1.bf16.msra.mxu0 %v1086
          %1575 = vmatprep.subr.bf16.mxu0 %v1103
          %1576 = vmatpush1.bf16.msra.mxu0 %v1102
          %1577 = vmatprep.subr.bf16.mxu0 %v1119
          %1578 = vmatpush1.bf16.msra.mxu0 %v1118
          %1579 = vmatprep.subr.bf16.mxu0 %v1135
          %1580 = vmatpush1.bf16.msra.mxu0 %v1134
          %1581 = vmatprep.subr.bf16.mxu0 %v1151
          %1582 = vmatpush1.bf16.msra.mxu0 %v1150
          %1583 = vmatprep.subr.bf16.mxu0 0
          %1584 = vmatpush1.bf16.msra.mxu0 0
          %1585 = vmatprep.subr.bf16.mxu0 0
          %1586 = vmatpush1.bf16.msra.mxu0 0
          %1587 = vmatprep.subr.bf16.mxu0 0
          %1588 = vmatpush1.bf16.msra.mxu0 0
          %1589 = vmatprep.subr.bf16.mxu0 0
          %1590 = vmatpush1.bf16.msra.mxu0 0
          %1591 = vmatprep.subr.bf16.mxu0 0
          %1592 = vmatpush1.bf16.msra.mxu0 0
          %1593 = vmatprep.subr.bf16.mxu0 0
          %1594 = vmatpush1.bf16.msra.mxu0 0
          %1595 = vmatprep.subr.bf16.mxu0 0
          %1596 = vmatpush1.bf16.msra.mxu0 0
          %1597 = vmatprep.subr.bf16.mxu0 0
          %1598 = vmatpush1.bf16.msra.mxu0 0
          %1599 = vmatprep.mubr.bf16.mxu0 0
          %1600 = vmatmul.mubr.bf16.gmra.mrb[0].mxu0 %v427
          %v1601 = vpop.f32.mrb[0].mxu0
          %v1602 = vadd.f32 %v619, %v1601
          %v1603 = vpop.f32.mrb[0].mxu0
          %v1604 = vadd.f32 %v623, %v1603
          %v1605 = vpop.f32.mrb[0].mxu0
          %v1606 = vpop.f32.mrb[0].mxu0
          %1607 = vdwg.mxu0
          %vm1608 = vcmp.gt.f32.partialorder %v1315, 0.0
          %vm1609 = vcmp.gt.f32.partialorder %v1317, 0.0
          %vm1610 = vcmp.gt.f32.partialorder %v1356, 0.0
          %vm1611 = vcmp.gt.f32.partialorder %v1358, 0.0
          %vm1612 = vcmp.gt.f32.partialorder %v1397, 0.0
          %vm1613 = vcmp.gt.f32.partialorder %v1399, 0.0
          %vm1614 = vcmp.gt.f32.partialorder %v1438, 0.0
          %vm1615 = vcmp.gt.f32.partialorder %v1440, 0.0
          %vm1616 = vcmp.gt.f32.partialorder %v1479, 0.0
          %vm1617 = vcmp.gt.f32.partialorder %v1481, 0.0
          %vm1618 = vcmp.gt.f32.partialorder %v1520, 0.0
          %vm1619 = vcmp.gt.f32.partialorder %v1522, 0.0
          %vm1620 = vcmp.gt.f32.partialorder %v1561, 0.0
          %vm1621 = vcmp.gt.f32.partialorder %v1563, 0.0
          %vm1622 = vcmp.gt.f32.partialorder %v1602, 0.0
          %vm1623 = vcmp.gt.f32.partialorder %v1604, 0.0
          %v1624 = vmul.f32 %v1315, 1.442695
          %v1625 = vpow.pop %v1624
          %v1626 = vmul.f32 %v1317, 1.442695
          %v1627 = vpow.pop %v1626
          %v1628 = vmul.f32 %v1356, 1.442695
          %v1629 = vpow.pop %v1628
          %v1630 = vmul.f32 %v1358, 1.442695
          %v1631 = vpow.pop %v1630
          %v1632 = vmul.f32 %v1397, 1.442695
          %v1633 = vpow.pop %v1632
          %v1634 = vmul.f32 %v1399, 1.442695
          %v1635 = vpow.pop %v1634
          %v1636 = vmul.f32 %v1438, 1.442695
          %v1637 = vpow.pop %v1636
          %v1638 = vmul.f32 %v1440, 1.442695
          %v1639 = vpow.pop %v1638
          %v1640 = vmul.f32 %v1479, 1.442695
          %v1641 = vpow.pop %v1640
          %v1642 = vmul.f32 %v1481, 1.442695
          %v1643 = vpow.pop %v1642
          %v1644 = vmul.f32 %v1520, 1.442695
          %v1645 = vpow.pop %v1644
          %v1646 = vmul.f32 %v1522, 1.442695
          %v1647 = vpow.pop %v1646
          %v1648 = vmul.f32 %v1561, 1.442695
          %v1649 = vpow.pop %v1648
          %v1650 = vmul.f32 %v1563, 1.442695
          %v1651 = vpow.pop %v1650
          %v1652 = vmul.f32 %v1602, 1.442695
          %v1653 = vpow.pop %v1652
          %v1654 = vmul.f32 %v1604, 1.442695
          %v1655 = vpow.pop %v1654
          %v1656 = vsub.f32 %v1625, 1.0
          %v1657 = vsub.f32 %v1627, 1.0
          %v1658 = vsub.f32 %v1629, 1.0
          %v1659 = vsub.f32 %v1631, 1.0
          %v1660 = vsub.f32 %v1633, 1.0
          %v1661 = vsub.f32 %v1635, 1.0
          %v1662 = vsub.f32 %v1637, 1.0
          %v1663 = vsub.f32 %v1639, 1.0
          %v1664 = vsub.f32 %v1641, 1.0
          %v1665 = vsub.f32 %v1643, 1.0
          %v1666 = vsub.f32 %v1645, 1.0
          %v1667 = vsub.f32 %v1647, 1.0
          %v1668 = vsub.f32 %v1649, 1.0
          %v1669 = vsub.f32 %v1651, 1.0
          %v1670 = vsub.f32 %v1653, 1.0
          %v1671 = vsub.f32 %v1655, 1.0
          %v1672 = vmul.f32 %v1656, 1.6732632
          %v1673 = vmul.f32 %v1657, 1.6732632
          %v1674 = vmul.f32 %v1658, 1.6732632
          %v1675 = vmul.f32 %v1659, 1.6732632
          %v1676 = vmul.f32 %v1660, 1.6732632
          %v1677 = vmul.f32 %v1661, 1.6732632
          %v1678 = vmul.f32 %v1662, 1.6732632
          %v1679 = vmul.f32 %v1663, 1.6732632
          %v1680 = vmul.f32 %v1664, 1.6732632
          %v1681 = vmul.f32 %v1665, 1.6732632
          %v1682 = vmul.f32 %v1666, 1.6732632
          %v1683 = vmul.f32 %v1667, 1.6732632
          %v1684 = vmul.f32 %v1668, 1.6732632
          %v1685 = vmul.f32 %v1669, 1.6732632
          %v1686 = vmul.f32 %v1670, 1.6732632
          %v1687 = vmul.f32 %v1671, 1.6732632
          %v1688 = vsel %vm1608, %v1315, %v1672
          %v1689 = vsel %vm1609, %v1317, %v1673
          %v1690 = vsel %vm1610, %v1356, %v1674
          %v1691 = vsel %vm1611, %v1358, %v1675
          %v1692 = vsel %vm1612, %v1397, %v1676
          %v1693 = vsel %vm1613, %v1399, %v1677
          %v1694 = vsel %vm1614, %v1438, %v1678
          %v1695 = vsel %vm1615, %v1440, %v1679
          %v1696 = vsel %vm1616, %v1479, %v1680
          %v1697 = vsel %vm1617, %v1481, %v1681
          %v1698 = vsel %vm1618, %v1520, %v1682
          %v1699 = vsel %vm1619, %v1522, %v1683
          %v1700 = vsel %vm1620, %v1561, %v1684
          %v1701 = vsel %vm1621, %v1563, %v1685
          %v1702 = vsel %vm1622, %v1602, %v1686
          %v1703 = vsel %vm1623, %v1604, %v1687
          %v1704 = vmul.f32 %v1688, 1.050701
          %v1705 = vmul.f32 %v1689, 1.050701
          %v1706 = vmul.f32 %v1690, 1.050701
          %v1707 = vmul.f32 %v1691, 1.050701
          %v1708 = vmul.f32 %v1692, 1.050701
          %v1709 = vmul.f32 %v1693, 1.050701
          %v1710 = vmul.f32 %v1694, 1.050701
          %v1711 = vmul.f32 %v1695, 1.050701
          %v1712 = vmul.f32 %v1696, 1.050701
          %v1713 = vmul.f32 %v1697, 1.050701
          %v1714 = vmul.f32 %v1698, 1.050701
          %v1715 = vmul.f32 %v1699, 1.050701
          %v1716 = vmul.f32 %v1700, 1.050701
          %v1717 = vmul.f32 %v1701, 1.050701
          %v1718 = vmul.f32 %v1702, 1.050701
          %v1719 = vmul.f32 %v1703, 1.050701
          %1720 = vst [vmem:[#allocation2] sm:$0xff] %v1704
          %1721 = vst [vmem:[#allocation2 + $0x8] sm:$0xff] %v1705
          %1722 = vst [vmem:[#allocation2 + $0x10] sm:$0xff] %v1706
          %1723 = vst [vmem:[#allocation2 + $0x18] sm:$0xff] %v1707
          %1724 = vst [vmem:[#allocation2 + $0x20] sm:$0xff] %v1708
          %1725 = vst [vmem:[#allocation2 + $0x28] sm:$0xff] %v1709
          %1726 = vst [vmem:[#allocation2 + $0x30] sm:$0xff] %v1710
          %1727 = vst [vmem:[#allocation2 + $0x38] sm:$0xff] %v1711
          %1728 = vst [vmem:[#allocation2 + $0x40] sm:$0xff] %v1712
          %1729 = vst [vmem:[#allocation2 + $0x48] sm:$0xff] %v1713
          %1730 = vst [vmem:[#allocation2 + $0x50] sm:$0xff] %v1714
          %1731 = vst [vmem:[#allocation2 + $0x58] sm:$0xff] %v1715
          %1732 = vst [vmem:[#allocation2 + $0x60] sm:$0xff] %v1716
          %1733 = vst [vmem:[#allocation2 + $0x68] sm:$0xff] %v1717
          %1734 = vst [vmem:[#allocation2 + $0x70] sm:$0xff] %v1718
          %1735 = vst [vmem:[#allocation2 + $0x78] sm:$0xff] %v1719
          %vm1736 = vcmask 7168
          %1737 = vst.msk [vmem:[%s421] sm:$0xff] %vm1736, 0.0
        $region72: #{tpu_custom_call.1} parent=43 // pred_fallthru
          _
        %v1738 = vld [vmem:[#allocation2] sm:$0xff]
        %v1739 = vld [vmem:[#allocation2 + $0x8] sm:$0xff]
        %v1740 = vld [vmem:[#allocation2 + $0x10] sm:$0xff]
        %v1741 = vld [vmem:[#allocation2 + $0x18] sm:$0xff]
        %v1742 = vld [vmem:[#allocation2 + $0x20] sm:$0xff]
        %v1743 = vld [vmem:[#allocation2 + $0x28] sm:$0xff]
        %v1744 = vld [vmem:[#allocation2 + $0x30] sm:$0xff]
        %v1745 = vld [vmem:[#allocation2 + $0x38] sm:$0xff]
        %v1746 = vld [vmem:[#allocation2 + $0x40] sm:$0xff]
        %v1747 = vld [vmem:[#allocation2 + $0x48] sm:$0xff]
        %v1748 = vld [vmem:[#allocation2 + $0x50] sm:$0xff]
        %v1749 = vld [vmem:[#allocation2 + $0x58] sm:$0xff]
        %v1750 = vld [vmem:[#allocation2 + $0x60] sm:$0xff]
        %v1751 = vld [vmem:[#allocation2 + $0x68] sm:$0xff]
        %v1752 = vld [vmem:[#allocation2 + $0x70] sm:$0xff]
        %v1753 = vld [vmem:[#allocation2 + $0x78] sm:$0xff]
        %v1754 = vpack.c.bf16 %v1738, %v1738
        %v1755 = vpack.c.bf16 %v1739, %v1739
        %v1756 = vpack.c.bf16 %v1740, %v1740
        %v1757 = vpack.c.bf16 %v1741, %v1741
        %v1758 = vpack.c.bf16 %v1742, %v1742
        %v1759 = vpack.c.bf16 %v1743, %v1743
        %v1760 = vpack.c.bf16 %v1744, %v1744
        %v1761 = vpack.c.bf16 %v1745, %v1745
        %v1762 = vpack.c.bf16 %v1746, %v1746
        %v1763 = vpack.c.bf16 %v1747, %v1747
        %v1764 = vpack.c.bf16 %v1748, %v1748
        %v1765 = vpack.c.bf16 %v1749, %v1749
        %v1766 = vpack.c.bf16 %v1750, %v1750
        %v1767 = vpack.c.bf16 %v1751, %v1751
        %v1768 = vpack.c.bf16 %v1752, %v1752
        %v1769 = vpack.c.bf16 %v1753, %v1753
        %v1770 = vld [vmem:[%s353] sm:$0xff]
        %v1771 = vld [vmem:[%s353 + $0x8] sm:$0xff]
        %v1772 = vld [vmem:[%s353 + $0x10] sm:$0xff]
        %v1773 = vld [vmem:[%s353 + $0x18] sm:$0xff]
        %v1774 = vld [vmem:[%s353 + $0x20] sm:$0xff]
        %v1775 = vld [vmem:[%s353 + $0x28] sm:$0xff]
        %v1776 = vld [vmem:[%s353 + $0x30] sm:$0xff]
        %v1777 = vld [vmem:[%s353 + $0x38] sm:$0xff]
        %v1778 = vld [vmem:[%s353 + $0x40] sm:$0xff]
        %v1779 = vld [vmem:[%s353 + $0x48] sm:$0xff]
        %v1780 = vld [vmem:[%s353 + $0x50] sm:$0xff]
        %v1781 = vld [vmem:[%s353 + $0x58] sm:$0xff]
        %v1782 = vld [vmem:[%s353 + $0x60] sm:$0xff]
        %v1783 = vld [vmem:[%s353 + $0x68] sm:$0xff]
        %v1784 = vld [vmem:[%s353 + $0x70] sm:$0xff]
        %v1785 = vld [vmem:[%s353 + $0x78] sm:$0xff]
        %v1786 = vld [vmem:[%s353 + $0x80] sm:$0xff]
        %v1787 = vld [vmem:[%s353 + $0x88] sm:$0xff]
        %v1788 = vld [vmem:[%s353 + $0x90] sm:$0xff]
        %v1789 = vld [vmem:[%s353 + $0x98] sm:$0xff]
        %v1790 = vld [vmem:[%s353 + $0xa0] sm:$0xff]
        %v1791 = vld [vmem:[%s353 + $0xa8] sm:$0xff]
        %v1792 = vld [vmem:[%s353 + $0xb0] sm:$0xff]
        %v1793 = vld [vmem:[%s353 + $0xb8] sm:$0xff]
        %v1794 = vld [vmem:[%s353 + $0xc0] sm:$0xff]
        %v1795 = vld [vmem:[%s353 + $0xc8] sm:$0xff]
        %v1796 = vld [vmem:[%s353 + $0xd0] sm:$0xff]
        %v1797 = vld [vmem:[%s353 + $0xd8] sm:$0xff]
        %v1798 = vld [vmem:[%s353 + $0xe0] sm:$0xff]
        %v1799 = vld [vmem:[%s353 + $0xe8] sm:$0xff]
        %v1800 = vld [vmem:[%s353 + $0xf0] sm:$0xff]
        %v1801 = vld [vmem:[%s353 + $0xf8] sm:$0xff]
        %v1802 = vld [vmem:[%s353 + $0x100] sm:$0xff]
        %v1803 = vld [vmem:[%s353 + $0x108] sm:$0xff]
        %v1804 = vld [vmem:[%s353 + $0x110] sm:$0xff]
        %v1805 = vld [vmem:[%s353 + $0x118] sm:$0xff]
        %v1806 = vld [vmem:[%s353 + $0x120] sm:$0xff]
        %v1807 = vld [vmem:[%s353 + $0x128] sm:$0xff]
        %v1808 = vld [vmem:[%s353 + $0x130] sm:$0xff]
        %v1809 = vld [vmem:[%s353 + $0x138] sm:$0xff]
        %v1810 = vld [vmem:[%s353 + $0x140] sm:$0xff]
        %v1811 = vld [vmem:[%s353 + $0x148] sm:$0xff]
        %v1812 = vld [vmem:[%s353 + $0x150] sm:$0xff]
        %v1813 = vld [vmem:[%s353 + $0x158] sm:$0xff]
        %v1814 = vld [vmem:[%s353 + $0x160] sm:$0xff]
        %v1815 = vld [vmem:[%s353 + $0x168] sm:$0xff]
        %v1816 = vld [vmem:[%s353 + $0x170] sm:$0xff]
        %v1817 = vld [vmem:[%s353 + $0x178] sm:$0xff]
        %v1818 = vld [vmem:[%s353 + $0x180] sm:$0xff]
        %v1819 = vld [vmem:[%s353 + $0x188] sm:$0xff]
        %v1820 = vld [vmem:[%s353 + $0x190] sm:$0xff]
        %v1821 = vld [vmem:[%s353 + $0x198] sm:$0xff]
        %v1822 = vld [vmem:[%s353 + $0x1a0] sm:$0xff]
        %v1823 = vld [vmem:[%s353 + $0x1a8] sm:$0xff]
        %v1824 = vld [vmem:[%s353 + $0x1b0] sm:$0xff]
        %v1825 = vld [vmem:[%s353 + $0x1b8] sm:$0xff]
        %v1826 = vld [vmem:[%s353 + $0x1c0] sm:$0xff]
        %v1827 = vld [vmem:[%s353 + $0x1c8] sm:$0xff]
        %v1828 = vld [vmem:[%s353 + $0x1d0] sm:$0xff]
        %v1829 = vld [vmem:[%s353 + $0x1d8] sm:$0xff]
        %v1830 = vld [vmem:[%s353 + $0x1e0] sm:$0xff]
        %v1831 = vld [vmem:[%s353 + $0x1e8] sm:$0xff]
        %v1832 = vld [vmem:[%s353 + $0x1f0] sm:$0xff]
        %v1833 = vld [vmem:[%s353 + $0x1f8] sm:$0xff]
        %v1834 = vld [vmem:[%s353 + $0x200] sm:$0xff]
        %v1835 = vld [vmem:[%s353 + $0x208] sm:$0xff]
        %v1836 = vld [vmem:[%s353 + $0x210] sm:$0xff]
        %v1837 = vld [vmem:[%s353 + $0x218] sm:$0xff]
        %v1838 = vld [vmem:[%s353 + $0x220] sm:$0xff]
        %v1839 = vld [vmem:[%s353 + $0x228] sm:$0xff]
        %v1840 = vld [vmem:[%s353 + $0x230] sm:$0xff]
        %v1841 = vld [vmem:[%s353 + $0x238] sm:$0xff]
        %v1842 = vld [vmem:[%s353 + $0x240] sm:$0xff]
        %v1843 = vld [vmem:[%s353 + $0x248] sm:$0xff]
        %v1844 = vld [vmem:[%s353 + $0x250] sm:$0xff]
        %v1845 = vld [vmem:[%s353 + $0x258] sm:$0xff]
        %v1846 = vld [vmem:[%s353 + $0x260] sm:$0xff]
        %v1847 = vld [vmem:[%s353 + $0x268] sm:$0xff]
        %v1848 = vld [vmem:[%s353 + $0x270] sm:$0xff]
        %v1849 = vld [vmem:[%s353 + $0x278] sm:$0xff]
        %v1850 = vld [vmem:[%s353 + $0x280] sm:$0xff]
        %v1851 = vld [vmem:[%s353 + $0x288] sm:$0xff]
        %v1852 = vld [vmem:[%s353 + $0x290] sm:$0xff]
        %v1853 = vld [vmem:[%s353 + $0x298] sm:$0xff]
        %v1854 = vld [vmem:[%s353 + $0x2a0] sm:$0xff]
        %v1855 = vld [vmem:[%s353 + $0x2a8] sm:$0xff]
        %v1856 = vld [vmem:[%s353 + $0x2b0] sm:$0xff]
        %v1857 = vld [vmem:[%s353 + $0x2b8] sm:$0xff]
        %v1858 = vld [vmem:[%s353 + $0x2c0] sm:$0xff]
        %v1859 = vld [vmem:[%s353 + $0x2c8] sm:$0xff]
        %v1860 = vld [vmem:[%s353 + $0x2d0] sm:$0xff]
        %v1861 = vld [vmem:[%s353 + $0x2d8] sm:$0xff]
        %v1862 = vld [vmem:[%s353 + $0x2e0] sm:$0xff]
        %v1863 = vld [vmem:[%s353 + $0x2e8] sm:$0xff]
        %v1864 = vld [vmem:[%s353 + $0x2f0] sm:$0xff]
        %v1865 = vld [vmem:[%s353 + $0x2f8] sm:$0xff]
        %v1866 = vld [vmem:[%s353 + $0x300] sm:$0xff]
        %v1867 = vld [vmem:[%s353 + $0x308] sm:$0xff]
        %v1868 = vld [vmem:[%s353 + $0x310] sm:$0xff]
        %v1869 = vld [vmem:[%s353 + $0x318] sm:$0xff]
        %v1870 = vld [vmem:[%s353 + $0x320] sm:$0xff]
        %v1871 = vld [vmem:[%s353 + $0x328] sm:$0xff]
        %v1872 = vld [vmem:[%s353 + $0x330] sm:$0xff]
        %v1873 = vld [vmem:[%s353 + $0x338] sm:$0xff]
        %v1874 = vld [vmem:[%s353 + $0x340] sm:$0xff]
        %v1875 = vld [vmem:[%s353 + $0x348] sm:$0xff]
        %v1876 = vld [vmem:[%s353 + $0x350] sm:$0xff]
        %v1877 = vld [vmem:[%s353 + $0x358] sm:$0xff]
        %v1878 = vld [vmem:[%s353 + $0x360] sm:$0xff]
        %v1879 = vld [vmem:[%s353 + $0x368] sm:$0xff]
        %v1880 = vld [vmem:[%s353 + $0x370] sm:$0xff]
        %v1881 = vld [vmem:[%s353 + $0x378] sm:$0xff]
        %v1882 = vld [vmem:[%s353 + $0x380] sm:$0xff]
        %v1883 = vld [vmem:[%s353 + $0x388] sm:$0xff]
        %v1884 = vld [vmem:[%s353 + $0x390] sm:$0xff]
        %v1885 = vld [vmem:[%s353 + $0x398] sm:$0xff]
        %v1886 = vld [vmem:[%s353 + $0x3a0] sm:$0xff]
        %v1887 = vld [vmem:[%s353 + $0x3a8] sm:$0xff]
        %v1888 = vld [vmem:[%s353 + $0x3b0] sm:$0xff]
        %v1889 = vld [vmem:[%s353 + $0x3b8] sm:$0xff]
        %v1890 = vld [vmem:[%s353 + $0x3c0] sm:$0xff]
        %v1891 = vld [vmem:[%s353 + $0x3c8] sm:$0xff]
        %v1892 = vld [vmem:[%s353 + $0x3d0] sm:$0xff]
        %v1893 = vld [vmem:[%s353 + $0x3d8] sm:$0xff]
        %v1894 = vld [vmem:[%s353 + $0x3e0] sm:$0xff]
        %v1895 = vld [vmem:[%s353 + $0x3e8] sm:$0xff]
        %v1896 = vld [vmem:[%s353 + $0x3f0] sm:$0xff]
        %v1897 = vld [vmem:[%s353 + $0x3f8] sm:$0xff]
        %v1898 = vld [vmem:[%s353 + $0x400] sm:$0xff]
        %v1899 = vld [vmem:[%s353 + $0x408] sm:$0xff]
        %v1900 = vld [vmem:[%s353 + $0x410] sm:$0xff]
        %v1901 = vld [vmem:[%s353 + $0x418] sm:$0xff]
        %v1902 = vld [vmem:[%s353 + $0x420] sm:$0xff]
        %v1903 = vld [vmem:[%s353 + $0x428] sm:$0xff]
        %v1904 = vld [vmem:[%s353 + $0x430] sm:$0xff]
        %v1905 = vld [vmem:[%s353 + $0x438] sm:$0xff]
        %v1906 = vld [vmem:[%s353 + $0x440] sm:$0xff]
        %v1907 = vld [vmem:[%s353 + $0x448] sm:$0xff]
        %v1908 = vld [vmem:[%s353 + $0x450] sm:$0xff]
        %v1909 = vld [vmem:[%s353 + $0x458] sm:$0xff]
        %v1910 = vld [vmem:[%s353 + $0x460] sm:$0xff]
        %v1911 = vld [vmem:[%s353 + $0x468] sm:$0xff]
        %v1912 = vld [vmem:[%s353 + $0x470] sm:$0xff]
        %v1913 = vld [vmem:[%s353 + $0x478] sm:$0xff]
        %v1914 = vld [vmem:[%s353 + $0x480] sm:$0xff]
        %v1915 = vld [vmem:[%s353 + $0x488] sm:$0xff]
        %v1916 = vld [vmem:[%s353 + $0x490] sm:$0xff]
        %v1917 = vld [vmem:[%s353 + $0x498] sm:$0xff]
        %v1918 = vld [vmem:[%s353 + $0x4a0] sm:$0xff]
        %v1919 = vld [vmem:[%s353 + $0x4a8] sm:$0xff]
        %v1920 = vld [vmem:[%s353 + $0x4b0] sm:$0xff]
        %v1921 = vld [vmem:[%s353 + $0x4b8] sm:$0xff]
        %v1922 = vld [vmem:[%s353 + $0x4c0] sm:$0xff]
        %v1923 = vld [vmem:[%s353 + $0x4c8] sm:$0xff]
        %v1924 = vld [vmem:[%s353 + $0x4d0] sm:$0xff]
        %v1925 = vld [vmem:[%s353 + $0x4d8] sm:$0xff]
        %v1926 = vld [vmem:[%s353 + $0x4e0] sm:$0xff]
        %v1927 = vld [vmem:[%s353 + $0x4e8] sm:$0xff]
        %v1928 = vld [vmem:[%s353 + $0x4f0] sm:$0xff]
        %v1929 = vld [vmem:[%s353 + $0x4f8] sm:$0xff]
        %v1930 = vld [vmem:[%s353 + $0x500] sm:$0xff]
        %v1931 = vld [vmem:[%s353 + $0x508] sm:$0xff]
        %v1932 = vld [vmem:[%s353 + $0x510] sm:$0xff]
        %v1933 = vld [vmem:[%s353 + $0x518] sm:$0xff]
        %v1934 = vld [vmem:[%s353 + $0x520] sm:$0xff]
        %v1935 = vld [vmem:[%s353 + $0x528] sm:$0xff]
        %v1936 = vld [vmem:[%s353 + $0x530] sm:$0xff]
        %v1937 = vld [vmem:[%s353 + $0x538] sm:$0xff]
        %v1938 = vld [vmem:[%s353 + $0x540] sm:$0xff]
        %v1939 = vld [vmem:[%s353 + $0x548] sm:$0xff]
        %v1940 = vld [vmem:[%s353 + $0x550] sm:$0xff]
        %v1941 = vld [vmem:[%s353 + $0x558] sm:$0xff]
        %v1942 = vld [vmem:[%s353 + $0x560] sm:$0xff]
        %v1943 = vld [vmem:[%s353 + $0x568] sm:$0xff]
        %v1944 = vld [vmem:[%s353 + $0x570] sm:$0xff]
        %v1945 = vld [vmem:[%s353 + $0x578] sm:$0xff]
        %v1946 = vld [vmem:[%s353 + $0x580] sm:$0xff]
        %v1947 = vld [vmem:[%s353 + $0x588] sm:$0xff]
        %v1948 = vld [vmem:[%s353 + $0x590] sm:$0xff]
        %v1949 = vld [vmem:[%s353 + $0x598] sm:$0xff]
        %v1950 = vld [vmem:[%s353 + $0x5a0] sm:$0xff]
        %v1951 = vld [vmem:[%s353 + $0x5a8] sm:$0xff]
        %v1952 = vld [vmem:[%s353 + $0x5b0] sm:$0xff]
        %v1953 = vld [vmem:[%s353 + $0x5b8] sm:$0xff]
        %v1954 = vld [vmem:[%s353 + $0x5c0] sm:$0xff]
        %v1955 = vld [vmem:[%s353 + $0x5c8] sm:$0xff]
        %v1956 = vld [vmem:[%s353 + $0x5d0] sm:$0xff]
        %v1957 = vld [vmem:[%s353 + $0x5d8] sm:$0xff]
        %v1958 = vld [vmem:[%s353 + $0x5e0] sm:$0xff]
        %v1959 = vld [vmem:[%s353 + $0x5e8] sm:$0xff]
        %v1960 = vld [vmem:[%s353 + $0x5f0] sm:$0xff]
        %v1961 = vld [vmem:[%s353 + $0x5f8] sm:$0xff]
        %v1962 = vld [vmem:[%s353 + $0x600] sm:$0xff]
        %v1963 = vld [vmem:[%s353 + $0x608] sm:$0xff]
        %v1964 = vld [vmem:[%s353 + $0x610] sm:$0xff]
        %v1965 = vld [vmem:[%s353 + $0x618] sm:$0xff]
        %v1966 = vld [vmem:[%s353 + $0x620] sm:$0xff]
        %v1967 = vld [vmem:[%s353 + $0x628] sm:$0xff]
        %v1968 = vld [vmem:[%s353 + $0x630] sm:$0xff]
        %v1969 = vld [vmem:[%s353 + $0x638] sm:$0xff]
        %v1970 = vld [vmem:[%s353 + $0x640] sm:$0xff]
        %v1971 = vld [vmem:[%s353 + $0x648] sm:$0xff]
        %v1972 = vld [vmem:[%s353 + $0x650] sm:$0xff]
        %v1973 = vld [vmem:[%s353 + $0x658] sm:$0xff]
        %v1974 = vld [vmem:[%s353 + $0x660] sm:$0xff]
        %v1975 = vld [vmem:[%s353 + $0x668] sm:$0xff]
        %v1976 = vld [vmem:[%s353 + $0x670] sm:$0xff]
        %v1977 = vld [vmem:[%s353 + $0x678] sm:$0xff]
        %v1978 = vld [vmem:[%s353 + $0x680] sm:$0xff]
        %v1979 = vld [vmem:[%s353 + $0x688] sm:$0xff]
        %v1980 = vld [vmem:[%s353 + $0x690] sm:$0xff]
        %v1981 = vld [vmem:[%s353 + $0x698] sm:$0xff]
        %v1982 = vld [vmem:[%s353 + $0x6a0] sm:$0xff]
        %v1983 = vld [vmem:[%s353 + $0x6a8] sm:$0xff]
        %v1984 = vld [vmem:[%s353 + $0x6b0] sm:$0xff]
        %v1985 = vld [vmem:[%s353 + $0x6b8] sm:$0xff]
        %v1986 = vld [vmem:[%s353 + $0x6c0] sm:$0xff]
        %v1987 = vld [vmem:[%s353 + $0x6c8] sm:$0xff]
        %v1988 = vld [vmem:[%s353 + $0x6d0] sm:$0xff]
        %v1989 = vld [vmem:[%s353 + $0x6d8] sm:$0xff]
        %v1990 = vld [vmem:[%s353 + $0x6e0] sm:$0xff]
        %v1991 = vld [vmem:[%s353 + $0x6e8] sm:$0xff]
        %v1992 = vld [vmem:[%s353 + $0x6f0] sm:$0xff]
        %v1993 = vld [vmem:[%s353 + $0x6f8] sm:$0xff]
        %v1994 = vld [vmem:[%s353 + $0x700] sm:$0xff]
        %v1995 = vld [vmem:[%s353 + $0x708] sm:$0xff]
        %v1996 = vld [vmem:[%s353 + $0x710] sm:$0xff]
        %v1997 = vld [vmem:[%s353 + $0x718] sm:$0xff]
        %v1998 = vld [vmem:[%s353 + $0x720] sm:$0xff]
        %v1999 = vld [vmem:[%s353 + $0x728] sm:$0xff]
        %v2000 = vld [vmem:[%s353 + $0x730] sm:$0xff]
        %v2001 = vld [vmem:[%s353 + $0x738] sm:$0xff]
        %v2002 = vld [vmem:[%s353 + $0x740] sm:$0xff]
        %v2003 = vld [vmem:[%s353 + $0x748] sm:$0xff]
        %v2004 = vld [vmem:[%s353 + $0x750] sm:$0xff]
        %v2005 = vld [vmem:[%s353 + $0x758] sm:$0xff]
        %v2006 = vld [vmem:[%s353 + $0x760] sm:$0xff]
        %v2007 = vld [vmem:[%s353 + $0x768] sm:$0xff]
        %v2008 = vld [vmem:[%s353 + $0x770] sm:$0xff]
        %v2009 = vld [vmem:[%s353 + $0x778] sm:$0xff]
        %v2010 = vld [vmem:[%s353 + $0x780] sm:$0xff]
        %v2011 = vld [vmem:[%s353 + $0x788] sm:$0xff]
        %v2012 = vld [vmem:[%s353 + $0x790] sm:$0xff]
        %v2013 = vld [vmem:[%s353 + $0x798] sm:$0xff]
        %v2014 = vld [vmem:[%s353 + $0x7a0] sm:$0xff]
        %v2015 = vld [vmem:[%s353 + $0x7a8] sm:$0xff]
        %v2016 = vld [vmem:[%s353 + $0x7b0] sm:$0xff]
        %v2017 = vld [vmem:[%s353 + $0x7b8] sm:$0xff]
        %v2018 = vld [vmem:[%s353 + $0x7c0] sm:$0xff]
        %v2019 = vld [vmem:[%s353 + $0x7c8] sm:$0xff]
        %v2020 = vld [vmem:[%s353 + $0x7d0] sm:$0xff]
        %v2021 = vld [vmem:[%s353 + $0x7d8] sm:$0xff]
        %v2022 = vld [vmem:[%s353 + $0x7e0] sm:$0xff]
        %v2023 = vld [vmem:[%s353 + $0x7e8] sm:$0xff]
        %v2024 = vld [vmem:[%s353 + $0x7f0] sm:$0xff]
        %v2025 = vld [vmem:[%s353 + $0x7f8] sm:$0xff]
        %v2026 = vld [vmem:[%s353 + $0x800] sm:$0xff]
        %v2027 = vld [vmem:[%s353 + $0x808] sm:$0xff]
        %v2028 = vld [vmem:[%s353 + $0x810] sm:$0xff]
        %v2029 = vld [vmem:[%s353 + $0x818] sm:$0xff]
        %v2030 = vld [vmem:[%s353 + $0x820] sm:$0xff]
        %v2031 = vld [vmem:[%s353 + $0x828] sm:$0xff]
        %v2032 = vld [vmem:[%s353 + $0x830] sm:$0xff]
        %v2033 = vld [vmem:[%s353 + $0x838] sm:$0xff]
        %v2034 = vld [vmem:[%s353 + $0x840] sm:$0xff]
        %v2035 = vld [vmem:[%s353 + $0x848] sm:$0xff]
        %v2036 = vld [vmem:[%s353 + $0x850] sm:$0xff]
        %v2037 = vld [vmem:[%s353 + $0x858] sm:$0xff]
        %v2038 = vld [vmem:[%s353 + $0x860] sm:$0xff]
        %v2039 = vld [vmem:[%s353 + $0x868] sm:$0xff]
        %v2040 = vld [vmem:[%s353 + $0x870] sm:$0xff]
        %v2041 = vld [vmem:[%s353 + $0x878] sm:$0xff]
        %v2042 = vld [vmem:[%s353 + $0x880] sm:$0xff]
        %v2043 = vld [vmem:[%s353 + $0x888] sm:$0xff]
        %v2044 = vld [vmem:[%s353 + $0x890] sm:$0xff]
        %v2045 = vld [vmem:[%s353 + $0x898] sm:$0xff]
        %v2046 = vld [vmem:[%s353 + $0x8a0] sm:$0xff]
        %v2047 = vld [vmem:[%s353 + $0x8a8] sm:$0xff]
        %v2048 = vld [vmem:[%s353 + $0x8b0] sm:$0xff]
        %v2049 = vld [vmem:[%s353 + $0x8b8] sm:$0xff]
        %v2050 = vld [vmem:[%s353 + $0x8c0] sm:$0xff]
        %v2051 = vld [vmem:[%s353 + $0x8c8] sm:$0xff]
        %v2052 = vld [vmem:[%s353 + $0x8d0] sm:$0xff]
        %v2053 = vld [vmem:[%s353 + $0x8d8] sm:$0xff]
        %v2054 = vld [vmem:[%s353 + $0x8e0] sm:$0xff]
        %v2055 = vld [vmem:[%s353 + $0x8e8] sm:$0xff]
        %v2056 = vld [vmem:[%s353 + $0x8f0] sm:$0xff]
        %v2057 = vld [vmem:[%s353 + $0x8f8] sm:$0xff]
        %v2058 = vld [vmem:[%s353 + $0x900] sm:$0xff]
        %v2059 = vld [vmem:[%s353 + $0x908] sm:$0xff]
        %v2060 = vld [vmem:[%s353 + $0x910] sm:$0xff]
        %v2061 = vld [vmem:[%s353 + $0x918] sm:$0xff]
        %v2062 = vld [vmem:[%s353 + $0x920] sm:$0xff]
        %v2063 = vld [vmem:[%s353 + $0x928] sm:$0xff]
        %v2064 = vld [vmem:[%s353 + $0x930] sm:$0xff]
        %v2065 = vld [vmem:[%s353 + $0x938] sm:$0xff]
        %v2066 = vld [vmem:[%s353 + $0x940] sm:$0xff]
        %v2067 = vld [vmem:[%s353 + $0x948] sm:$0xff]
        %v2068 = vld [vmem:[%s353 + $0x950] sm:$0xff]
        %v2069 = vld [vmem:[%s353 + $0x958] sm:$0xff]
        %v2070 = vld [vmem:[%s353 + $0x960] sm:$0xff]
        %v2071 = vld [vmem:[%s353 + $0x968] sm:$0xff]
        %v2072 = vld [vmem:[%s353 + $0x970] sm:$0xff]
        %v2073 = vld [vmem:[%s353 + $0x978] sm:$0xff]
        %v2074 = vld [vmem:[%s353 + $0x980] sm:$0xff]
        %v2075 = vld [vmem:[%s353 + $0x988] sm:$0xff]
        %v2076 = vld [vmem:[%s353 + $0x990] sm:$0xff]
        %v2077 = vld [vmem:[%s353 + $0x998] sm:$0xff]
        %v2078 = vld [vmem:[%s353 + $0x9a0] sm:$0xff]
        %v2079 = vld [vmem:[%s353 + $0x9a8] sm:$0xff]
        %v2080 = vld [vmem:[%s353 + $0x9b0] sm:$0xff]
        %v2081 = vld [vmem:[%s353 + $0x9b8] sm:$0xff]
        %v2082 = vld [vmem:[%s353 + $0x9c0] sm:$0xff]
        %v2083 = vld [vmem:[%s353 + $0x9c8] sm:$0xff]
        %v2084 = vld [vmem:[%s353 + $0x9d0] sm:$0xff]
        %v2085 = vld [vmem:[%s353 + $0x9d8] sm:$0xff]
        %v2086 = vld [vmem:[%s353 + $0x9e0] sm:$0xff]
        %v2087 = vld [vmem:[%s353 + $0x9e8] sm:$0xff]
        %v2088 = vld [vmem:[%s353 + $0x9f0] sm:$0xff]
        %v2089 = vld [vmem:[%s353 + $0x9f8] sm:$0xff]
        %v2090 = vld [vmem:[%s353 + $0xa00] sm:$0xff]
        %v2091 = vld [vmem:[%s353 + $0xa08] sm:$0xff]
        %v2092 = vld [vmem:[%s353 + $0xa10] sm:$0xff]
        %v2093 = vld [vmem:[%s353 + $0xa18] sm:$0xff]
        %v2094 = vld [vmem:[%s353 + $0xa20] sm:$0xff]
        %v2095 = vld [vmem:[%s353 + $0xa28] sm:$0xff]
        %v2096 = vld [vmem:[%s353 + $0xa30] sm:$0xff]
        %v2097 = vld [vmem:[%s353 + $0xa38] sm:$0xff]
        %v2098 = vld [vmem:[%s353 + $0xa40] sm:$0xff]
        %v2099 = vld [vmem:[%s353 + $0xa48] sm:$0xff]
        %v2100 = vld [vmem:[%s353 + $0xa50] sm:$0xff]
        %v2101 = vld [vmem:[%s353 + $0xa58] sm:$0xff]
        %v2102 = vld [vmem:[%s353 + $0xa60] sm:$0xff]
        %v2103 = vld [vmem:[%s353 + $0xa68] sm:$0xff]
        %v2104 = vld [vmem:[%s353 + $0xa70] sm:$0xff]
        %v2105 = vld [vmem:[%s353 + $0xa78] sm:$0xff]
        %v2106 = vld [vmem:[%s353 + $0xa80] sm:$0xff]
        %v2107 = vld [vmem:[%s353 + $0xa88] sm:$0xff]
        %v2108 = vld [vmem:[%s353 + $0xa90] sm:$0xff]
        %v2109 = vld [vmem:[%s353 + $0xa98] sm:$0xff]
        %v2110 = vld [vmem:[%s353 + $0xaa0] sm:$0xff]
        %v2111 = vld [vmem:[%s353 + $0xaa8] sm:$0xff]
        %v2112 = vld [vmem:[%s353 + $0xab0] sm:$0xff]
        %v2113 = vld [vmem:[%s353 + $0xab8] sm:$0xff]
        %v2114 = vld [vmem:[%s353 + $0xac0] sm:$0xff]
        %v2115 = vld [vmem:[%s353 + $0xac8] sm:$0xff]
        %v2116 = vld [vmem:[%s353 + $0xad0] sm:$0xff]
        %v2117 = vld [vmem:[%s353 + $0xad8] sm:$0xff]
        %v2118 = vld [vmem:[%s353 + $0xae0] sm:$0xff]
        %v2119 = vld [vmem:[%s353 + $0xae8] sm:$0xff]
        %v2120 = vld [vmem:[%s353 + $0xaf0] sm:$0xff]
        %v2121 = vld [vmem:[%s353 + $0xaf8] sm:$0xff]
        %v2122 = vld [vmem:[%s353 + $0xb00] sm:$0xff]
        %v2123 = vld [vmem:[%s353 + $0xb08] sm:$0xff]
        %v2124 = vld [vmem:[%s353 + $0xb10] sm:$0xff]
        %v2125 = vld [vmem:[%s353 + $0xb18] sm:$0xff]
        %v2126 = vld [vmem:[%s353 + $0xb20] sm:$0xff]
        %v2127 = vld [vmem:[%s353 + $0xb28] sm:$0xff]
        %v2128 = vld [vmem:[%s353 + $0xb30] sm:$0xff]
        %v2129 = vld [vmem:[%s353 + $0xb38] sm:$0xff]
        %v2130 = vld [vmem:[%s353 + $0xb40] sm:$0xff]
        %v2131 = vld [vmem:[%s353 + $0xb48] sm:$0xff]
        %v2132 = vld [vmem:[%s353 + $0xb50] sm:$0xff]
        %v2133 = vld [vmem:[%s353 + $0xb58] sm:$0xff]
        %v2134 = vld [vmem:[%s353 + $0xb60] sm:$0xff]
        %v2135 = vld [vmem:[%s353 + $0xb68] sm:$0xff]
        %v2136 = vld [vmem:[%s353 + $0xb70] sm:$0xff]
        %v2137 = vld [vmem:[%s353 + $0xb78] sm:$0xff]
        %v2138 = vld [vmem:[%s353 + $0xb80] sm:$0xff]
        %v2139 = vld [vmem:[%s353 + $0xb88] sm:$0xff]
        %v2140 = vld [vmem:[%s353 + $0xb90] sm:$0xff]
        %v2141 = vld [vmem:[%s353 + $0xb98] sm:$0xff]
        %v2142 = vld [vmem:[%s353 + $0xba0] sm:$0xff]
        %v2143 = vld [vmem:[%s353 + $0xba8] sm:$0xff]
        %v2144 = vld [vmem:[%s353 + $0xbb0] sm:$0xff]
        %v2145 = vld [vmem:[%s353 + $0xbb8] sm:$0xff]
        %v2146 = vld [vmem:[%s353 + $0xbc0] sm:$0xff]
        %v2147 = vld [vmem:[%s353 + $0xbc8] sm:$0xff]
        %v2148 = vld [vmem:[%s353 + $0xbd0] sm:$0xff]
        %v2149 = vld [vmem:[%s353 + $0xbd8] sm:$0xff]
        %v2150 = vld [vmem:[%s353 + $0xbe0] sm:$0xff]
        %v2151 = vld [vmem:[%s353 + $0xbe8] sm:$0xff]
        %v2152 = vld [vmem:[%s353 + $0xbf0] sm:$0xff]
        %v2153 = vld [vmem:[%s353 + $0xbf8] sm:$0xff]
        %v2154 = vld [vmem:[%s353 + $0xc00] sm:$0xff]
        %v2155 = vld [vmem:[%s353 + $0xc08] sm:$0xff]
        %v2156 = vld [vmem:[%s353 + $0xc10] sm:$0xff]
        %v2157 = vld [vmem:[%s353 + $0xc18] sm:$0xff]
        %v2158 = vld [vmem:[%s353 + $0xc20] sm:$0xff]
        %v2159 = vld [vmem:[%s353 + $0xc28] sm:$0xff]
        %v2160 = vld [vmem:[%s353 + $0xc30] sm:$0xff]
        %v2161 = vld [vmem:[%s353 + $0xc38] sm:$0xff]
        %v2162 = vld [vmem:[%s353 + $0xc40] sm:$0xff]
        %v2163 = vld [vmem:[%s353 + $0xc48] sm:$0xff]
        %v2164 = vld [vmem:[%s353 + $0xc50] sm:$0xff]
        %v2165 = vld [vmem:[%s353 + $0xc58] sm:$0xff]
        %v2166 = vld [vmem:[%s353 + $0xc60] sm:$0xff]
        %v2167 = vld [vmem:[%s353 + $0xc68] sm:$0xff]
        %v2168 = vld [vmem:[%s353 + $0xc70] sm:$0xff]
        %v2169 = vld [vmem:[%s353 + $0xc78] sm:$0xff]
        %v2170 = vld [vmem:[%s353 + $0xc80] sm:$0xff]
        %v2171 = vld [vmem:[%s353 + $0xc88] sm:$0xff]
        %v2172 = vld [vmem:[%s353 + $0xc90] sm:$0xff]
        %v2173 = vld [vmem:[%s353 + $0xc98] sm:$0xff]
        %v2174 = vld [vmem:[%s353 + $0xca0] sm:$0xff]
        %v2175 = vld [vmem:[%s353 + $0xca8] sm:$0xff]
        %v2176 = vld [vmem:[%s353 + $0xcb0] sm:$0xff]
        %v2177 = vld [vmem:[%s353 + $0xcb8] sm:$0xff]
        %v2178 = vld [vmem:[%s353 + $0xcc0] sm:$0xff]
        %v2179 = vld [vmem:[%s353 + $0xcc8] sm:$0xff]
        %v2180 = vld [vmem:[%s353 + $0xcd0] sm:$0xff]
        %v2181 = vld [vmem:[%s353 + $0xcd8] sm:$0xff]
        %v2182 = vld [vmem:[%s353 + $0xce0] sm:$0xff]
        %v2183 = vld [vmem:[%s353 + $0xce8] sm:$0xff]
        %v2184 = vld [vmem:[%s353 + $0xcf0] sm:$0xff]
        %v2185 = vld [vmem:[%s353 + $0xcf8] sm:$0xff]
        %v2186 = vld [vmem:[%s353 + $0xd00] sm:$0xff]
        %v2187 = vld [vmem:[%s353 + $0xd08] sm:$0xff]
        %v2188 = vld [vmem:[%s353 + $0xd10] sm:$0xff]
        %v2189 = vld [vmem:[%s353 + $0xd18] sm:$0xff]
        %v2190 = vld [vmem:[%s353 + $0xd20] sm:$0xff]
        %v2191 = vld [vmem:[%s353 + $0xd28] sm:$0xff]
        %v2192 = vld [vmem:[%s353 + $0xd30] sm:$0xff]
        %v2193 = vld [vmem:[%s353 + $0xd38] sm:$0xff]
        %v2194 = vld [vmem:[%s353 + $0xd40] sm:$0xff]
        %v2195 = vld [vmem:[%s353 + $0xd48] sm:$0xff]
        %v2196 = vld [vmem:[%s353 + $0xd50] sm:$0xff]
        %v2197 = vld [vmem:[%s353 + $0xd58] sm:$0xff]
        %v2198 = vld [vmem:[%s353 + $0xd60] sm:$0xff]
        %v2199 = vld [vmem:[%s353 + $0xd68] sm:$0xff]
        %v2200 = vld [vmem:[%s353 + $0xd70] sm:$0xff]
        %v2201 = vld [vmem:[%s353 + $0xd78] sm:$0xff]
        %v2202 = vld [vmem:[%s353 + $0xd80] sm:$0xff]
        %v2203 = vld [vmem:[%s353 + $0xd88] sm:$0xff]
        %v2204 = vld [vmem:[%s353 + $0xd90] sm:$0xff]
        %v2205 = vld [vmem:[%s353 + $0xd98] sm:$0xff]
        %v2206 = vld [vmem:[%s353 + $0xda0] sm:$0xff]
        %v2207 = vld [vmem:[%s353 + $0xda8] sm:$0xff]
        %v2208 = vld [vmem:[%s353 + $0xdb0] sm:$0xff]
        %v2209 = vld [vmem:[%s353 + $0xdb8] sm:$0xff]
        %v2210 = vld [vmem:[%s353 + $0xdc0] sm:$0xff]
        %v2211 = vld [vmem:[%s353 + $0xdc8] sm:$0xff]
        %v2212 = vld [vmem:[%s353 + $0xdd0] sm:$0xff]
        %v2213 = vld [vmem:[%s353 + $0xdd8] sm:$0xff]
        %v2214 = vld [vmem:[%s353 + $0xde0] sm:$0xff]
        %v2215 = vld [vmem:[%s353 + $0xde8] sm:$0xff]
        %v2216 = vld [vmem:[%s353 + $0xdf0] sm:$0xff]
        %v2217 = vld [vmem:[%s353 + $0xdf8] sm:$0xff]
        %v2218 = vld [vmem:[%s353 + $0xe00] sm:$0xff]
        %v2219 = vld [vmem:[%s353 + $0xe08] sm:$0xff]
        %v2220 = vld [vmem:[%s353 + $0xe10] sm:$0xff]
        %v2221 = vld [vmem:[%s353 + $0xe18] sm:$0xff]
        %v2222 = vld [vmem:[%s353 + $0xe20] sm:$0xff]
        %v2223 = vld [vmem:[%s353 + $0xe28] sm:$0xff]
        %v2224 = vld [vmem:[%s353 + $0xe30] sm:$0xff]
        %v2225 = vld [vmem:[%s353 + $0xe38] sm:$0xff]
        %v2226 = vld [vmem:[%s353 + $0xe40] sm:$0xff]
        %v2227 = vld [vmem:[%s353 + $0xe48] sm:$0xff]
        %v2228 = vld [vmem:[%s353 + $0xe50] sm:$0xff]
        %v2229 = vld [vmem:[%s353 + $0xe58] sm:$0xff]
        %v2230 = vld [vmem:[%s353 + $0xe60] sm:$0xff]
        %v2231 = vld [vmem:[%s353 + $0xe68] sm:$0xff]
        %v2232 = vld [vmem:[%s353 + $0xe70] sm:$0xff]
        %v2233 = vld [vmem:[%s353 + $0xe78] sm:$0xff]
        %v2234 = vld [vmem:[%s353 + $0xe80] sm:$0xff]
        %v2235 = vld [vmem:[%s353 + $0xe88] sm:$0xff]
        %v2236 = vld [vmem:[%s353 + $0xe90] sm:$0xff]
        %v2237 = vld [vmem:[%s353 + $0xe98] sm:$0xff]
        %v2238 = vld [vmem:[%s353 + $0xea0] sm:$0xff]
        %v2239 = vld [vmem:[%s353 + $0xea8] sm:$0xff]
        %v2240 = vld [vmem:[%s353 + $0xeb0] sm:$0xff]
        %v2241 = vld [vmem:[%s353 + $0xeb8] sm:$0xff]
        %v2242 = vld [vmem:[%s353 + $0xec0] sm:$0xff]
        %v2243 = vld [vmem:[%s353 + $0xec8] sm:$0xff]
        %v2244 = vld [vmem:[%s353 + $0xed0] sm:$0xff]
        %v2245 = vld [vmem:[%s353 + $0xed8] sm:$0xff]
        %v2246 = vld [vmem:[%s353 + $0xee0] sm:$0xff]
        %v2247 = vld [vmem:[%s353 + $0xee8] sm:$0xff]
        %v2248 = vld [vmem:[%s353 + $0xef0] sm:$0xff]
        %v2249 = vld [vmem:[%s353 + $0xef8] sm:$0xff]
        %v2250 = vld [vmem:[%s353 + $0xf00] sm:$0xff]
        %v2251 = vld [vmem:[%s353 + $0xf08] sm:$0xff]
        %v2252 = vld [vmem:[%s353 + $0xf10] sm:$0xff]
        %v2253 = vld [vmem:[%s353 + $0xf18] sm:$0xff]
        %v2254 = vld [vmem:[%s353 + $0xf20] sm:$0xff]
        %v2255 = vld [vmem:[%s353 + $0xf28] sm:$0xff]
        %v2256 = vld [vmem:[%s353 + $0xf30] sm:$0xff]
        %v2257 = vld [vmem:[%s353 + $0xf38] sm:$0xff]
        %v2258 = vld [vmem:[%s353 + $0xf40] sm:$0xff]
        %v2259 = vld [vmem:[%s353 + $0xf48] sm:$0xff]
        %v2260 = vld [vmem:[%s353 + $0xf50] sm:$0xff]
        %v2261 = vld [vmem:[%s353 + $0xf58] sm:$0xff]
        %v2262 = vld [vmem:[%s353 + $0xf60] sm:$0xff]
        %v2263 = vld [vmem:[%s353 + $0xf68] sm:$0xff]
        %v2264 = vld [vmem:[%s353 + $0xf70] sm:$0xff]
        %v2265 = vld [vmem:[%s353 + $0xf78] sm:$0xff]
        %v2266 = vld [vmem:[%s353 + $0xf80] sm:$0xff]
        %v2267 = vld [vmem:[%s353 + $0xf88] sm:$0xff]
        %v2268 = vld [vmem:[%s353 + $0xf90] sm:$0xff]
        %v2269 = vld [vmem:[%s353 + $0xf98] sm:$0xff]
        %v2270 = vld [vmem:[%s353 + $0xfa0] sm:$0xff]
        %v2271 = vld [vmem:[%s353 + $0xfa8] sm:$0xff]
        %v2272 = vld [vmem:[%s353 + $0xfb0] sm:$0xff]
        %v2273 = vld [vmem:[%s353 + $0xfb8] sm:$0xff]
        %v2274 = vld [vmem:[%s353 + $0xfc0] sm:$0xff]
        %v2275 = vld [vmem:[%s353 + $0xfc8] sm:$0xff]
        %v2276 = vld [vmem:[%s353 + $0xfd0] sm:$0xff]
        %v2277 = vld [vmem:[%s353 + $0xfd8] sm:$0xff]
        %v2278 = vld [vmem:[%s353 + $0xfe0] sm:$0xff]
        %v2279 = vld [vmem:[%s353 + $0xfe8] sm:$0xff]
        %v2280 = vld [vmem:[%s353 + $0xff0] sm:$0xff]
        %v2281 = vld [vmem:[%s353 + $0xff8] sm:$0xff]
        %v2282 = vld [vmem:[%s362] sm:$0xf]
        %v2284 = vlaneseq
        %v2285 = vshrl.u32 %v2284, 7
        %v2286 = vsub.s32 0, %v2285
        %v2287 = vrot.slane %v2282, %v2286
        %v2288 = vlaneseq
        %v2289 = vshrl.u32 %v2288, 7
        %v2290 = vsub.s32 1, %v2289
        %v2291 = vrot.slane %v2282, %v2290
        %v2292 = vlaneseq
        %v2293 = vshrl.u32 %v2292, 7
        %v2294 = vsub.s32 2, %v2293
        %v2295 = vrot.slane %v2282, %v2294
        %v2296 = vlaneseq
        %v2297 = vshrl.u32 %v2296, 7
        %v2298 = vsub.s32 3, %v2297
        %v2299 = vrot.slane %v2282, %v2298
        %v2816 = vunpack.c.l.b16 %v1770
        %v2817 = vunpack.c.h.b16 %v1770
        %v2818 = vunpack.c.l.b16 %v1771
        %v2819 = vunpack.c.h.b16 %v1771
        %v2820 = vunpack.c.l.b16 %v1772
        %v2821 = vunpack.c.h.b16 %v1772
        %v2822 = vunpack.c.l.b16 %v1773
        %v2823 = vunpack.c.h.b16 %v1773
        %v2824 = vunpack.c.l.b16 %v1774
        %v2825 = vunpack.c.h.b16 %v1774
        %v2826 = vunpack.c.l.b16 %v1775
        %v2827 = vunpack.c.h.b16 %v1775
        %v2828 = vunpack.c.l.b16 %v1776
        %v2829 = vunpack.c.h.b16 %v1776
        %v2830 = vunpack.c.l.b16 %v1777
        %v2831 = vunpack.c.h.b16 %v1777
        %v2832 = vunpack.c.l.b16 %v1778
        %v2833 = vunpack.c.h.b16 %v1778
        %v2834 = vunpack.c.l.b16 %v1779
        %v2835 = vunpack.c.h.b16 %v1779
        %v2836 = vunpack.c.l.b16 %v1780
        %v2837 = vunpack.c.h.b16 %v1780
        %v2838 = vunpack.c.l.b16 %v1781
        %v2839 = vunpack.c.h.b16 %v1781
        %v2840 = vunpack.c.l.b16 %v1782
        %v2841 = vunpack.c.h.b16 %v1782
        %v2842 = vunpack.c.l.b16 %v1783
        %v2843 = vunpack.c.h.b16 %v1783
        %v2844 = vunpack.c.l.b16 %v1784
        %v2845 = vunpack.c.h.b16 %v1784
        %v2846 = vunpack.c.l.b16 %v1785
        %v2847 = vunpack.c.h.b16 %v1785
        %v2848 = vunpack.c.l.b16 %v1786
        %v2849 = vunpack.c.h.b16 %v1786
        %v2850 = vunpack.c.l.b16 %v1787
        %v2851 = vunpack.c.h.b16 %v1787
        %v2852 = vunpack.c.l.b16 %v1788
        %v2853 = vunpack.c.h.b16 %v1788
        %v2854 = vunpack.c.l.b16 %v1789
        %v2855 = vunpack.c.h.b16 %v1789
        %v2856 = vunpack.c.l.b16 %v1790
        %v2857 = vunpack.c.h.b16 %v1790
        %v2858 = vunpack.c.l.b16 %v1791
        %v2859 = vunpack.c.h.b16 %v1791
        %v2860 = vunpack.c.l.b16 %v1792
        %v2861 = vunpack.c.h.b16 %v1792
        %v2862 = vunpack.c.l.b16 %v1793
        %v2863 = vunpack.c.h.b16 %v1793
        %v2864 = vunpack.c.l.b16 %v1794
        %v2865 = vunpack.c.h.b16 %v1794
        %v2866 = vunpack.c.l.b16 %v1795
        %v2867 = vunpack.c.h.b16 %v1795
        %v2868 = vunpack.c.l.b16 %v1796
        %v2869 = vunpack.c.h.b16 %v1796
        %v2870 = vunpack.c.l.b16 %v1797
        %v2871 = vunpack.c.h.b16 %v1797
        %v2872 = vunpack.c.l.b16 %v1798
        %v2873 = vunpack.c.h.b16 %v1798
        %v2874 = vunpack.c.l.b16 %v1799
        %v2875 = vunpack.c.h.b16 %v1799
        %v2876 = vunpack.c.l.b16 %v1800
        %v2877 = vunpack.c.h.b16 %v1800
        %v2878 = vunpack.c.l.b16 %v1801
        %v2879 = vunpack.c.h.b16 %v1801
        %v2880 = vunpack.c.l.b16 %v1802
        %v2881 = vunpack.c.h.b16 %v1802
        %v2882 = vunpack.c.l.b16 %v1803
        %v2883 = vunpack.c.h.b16 %v1803
        %v2884 = vunpack.c.l.b16 %v1804
        %v2885 = vunpack.c.h.b16 %v1804
        %v2886 = vunpack.c.l.b16 %v1805
        %v2887 = vunpack.c.h.b16 %v1805
        %v2888 = vunpack.c.l.b16 %v1806
        %v2889 = vunpack.c.h.b16 %v1806
        %v2890 = vunpack.c.l.b16 %v1807
        %v2891 = vunpack.c.h.b16 %v1807
        %v2892 = vunpack.c.l.b16 %v1808
        %v2893 = vunpack.c.h.b16 %v1808
        %v2894 = vunpack.c.l.b16 %v1809
        %v2895 = vunpack.c.h.b16 %v1809
        %v2896 = vunpack.c.l.b16 %v1810
        %v2897 = vunpack.c.h.b16 %v1810
        %v2898 = vunpack.c.l.b16 %v1811
        %v2899 = vunpack.c.h.b16 %v1811
        %v2900 = vunpack.c.l.b16 %v1812
        %v2901 = vunpack.c.h.b16 %v1812
        %v2902 = vunpack.c.l.b16 %v1813
        %v2903 = vunpack.c.h.b16 %v1813
        %v2904 = vunpack.c.l.b16 %v1814
        %v2905 = vunpack.c.h.b16 %v1814
        %v2906 = vunpack.c.l.b16 %v1815
        %v2907 = vunpack.c.h.b16 %v1815
        %v2908 = vunpack.c.l.b16 %v1816
        %v2909 = vunpack.c.h.b16 %v1816
        %v2910 = vunpack.c.l.b16 %v1817
        %v2911 = vunpack.c.h.b16 %v1817
        %v2912 = vunpack.c.l.b16 %v1818
        %v2913 = vunpack.c.h.b16 %v1818
        %v2914 = vunpack.c.l.b16 %v1819
        %v2915 = vunpack.c.h.b16 %v1819
        %v2916 = vunpack.c.l.b16 %v1820
        %v2917 = vunpack.c.h.b16 %v1820
        %v2918 = vunpack.c.l.b16 %v1821
        %v2919 = vunpack.c.h.b16 %v1821
        %v2920 = vunpack.c.l.b16 %v1822
        %v2921 = vunpack.c.h.b16 %v1822
        %v2922 = vunpack.c.l.b16 %v1823
        %v2923 = vunpack.c.h.b16 %v1823
        %v2924 = vunpack.c.l.b16 %v1824
        %v2925 = vunpack.c.h.b16 %v1824
        %v2926 = vunpack.c.l.b16 %v1825
        %v2927 = vunpack.c.h.b16 %v1825
        %v2928 = vunpack.c.l.b16 %v1826
        %v2929 = vunpack.c.h.b16 %v1826
        %v2930 = vunpack.c.l.b16 %v1827
        %v2931 = vunpack.c.h.b16 %v1827
        %v2932 = vunpack.c.l.b16 %v1828
        %v2933 = vunpack.c.h.b16 %v1828
        %v2934 = vunpack.c.l.b16 %v1829
        %v2935 = vunpack.c.h.b16 %v1829
        %v2936 = vunpack.c.l.b16 %v1830
        %v2937 = vunpack.c.h.b16 %v1830
        %v2938 = vunpack.c.l.b16 %v1831
        %v2939 = vunpack.c.h.b16 %v1831
        %v2940 = vunpack.c.l.b16 %v1832
        %v2941 = vunpack.c.h.b16 %v1832
        %v2942 = vunpack.c.l.b16 %v1833
        %v2943 = vunpack.c.h.b16 %v1833
        %v2944 = vunpack.c.l.b16 %v1834
        %v2945 = vunpack.c.h.b16 %v1834
        %v2946 = vunpack.c.l.b16 %v1835
        %v2947 = vunpack.c.h.b16 %v1835
        %v2948 = vunpack.c.l.b16 %v1836
        %v2949 = vunpack.c.h.b16 %v1836
        %v2950 = vunpack.c.l.b16 %v1837
        %v2951 = vunpack.c.h.b16 %v1837
        %v2952 = vunpack.c.l.b16 %v1838
        %v2953 = vunpack.c.h.b16 %v1838
        %v2954 = vunpack.c.l.b16 %v1839
        %v2955 = vunpack.c.h.b16 %v1839
        %v2956 = vunpack.c.l.b16 %v1840
        %v2957 = vunpack.c.h.b16 %v1840
        %v2958 = vunpack.c.l.b16 %v1841
        %v2959 = vunpack.c.h.b16 %v1841
        %v2960 = vunpack.c.l.b16 %v1842
        %v2961 = vunpack.c.h.b16 %v1842
        %v2962 = vunpack.c.l.b16 %v1843
        %v2963 = vunpack.c.h.b16 %v1843
        %v2964 = vunpack.c.l.b16 %v1844
        %v2965 = vunpack.c.h.b16 %v1844
        %v2966 = vunpack.c.l.b16 %v1845
        %v2967 = vunpack.c.h.b16 %v1845
        %v2968 = vunpack.c.l.b16 %v1846
        %v2969 = vunpack.c.h.b16 %v1846
        %v2970 = vunpack.c.l.b16 %v1847
        %v2971 = vunpack.c.h.b16 %v1847
        %v2972 = vunpack.c.l.b16 %v1848
        %v2973 = vunpack.c.h.b16 %v1848
        %v2974 = vunpack.c.l.b16 %v1849
        %v2975 = vunpack.c.h.b16 %v1849
        %v2976 = vunpack.c.l.b16 %v1850
        %v2977 = vunpack.c.h.b16 %v1850
        %v2978 = vunpack.c.l.b16 %v1851
        %v2979 = vunpack.c.h.b16 %v1851
        %v2980 = vunpack.c.l.b16 %v1852
        %v2981 = vunpack.c.h.b16 %v1852
        %v2982 = vunpack.c.l.b16 %v1853
        %v2983 = vunpack.c.h.b16 %v1853
        %v2984 = vunpack.c.l.b16 %v1854
        %v2985 = vunpack.c.h.b16 %v1854
        %v2986 = vunpack.c.l.b16 %v1855
        %v2987 = vunpack.c.h.b16 %v1855
        %v2988 = vunpack.c.l.b16 %v1856
        %v2989 = vunpack.c.h.b16 %v1856
        %v2990 = vunpack.c.l.b16 %v1857
        %v2991 = vunpack.c.h.b16 %v1857
        %v2992 = vunpack.c.l.b16 %v1858
        %v2993 = vunpack.c.h.b16 %v1858
        %v2994 = vunpack.c.l.b16 %v1859
        %v2995 = vunpack.c.h.b16 %v1859
        %v2996 = vunpack.c.l.b16 %v1860
        %v2997 = vunpack.c.h.b16 %v1860
        %v2998 = vunpack.c.l.b16 %v1861
        %v2999 = vunpack.c.h.b16 %v1861
        %v3000 = vunpack.c.l.b16 %v1862
        %v3001 = vunpack.c.h.b16 %v1862
        %v3002 = vunpack.c.l.b16 %v1863
        %v3003 = vunpack.c.h.b16 %v1863
        %v3004 = vunpack.c.l.b16 %v1864
        %v3005 = vunpack.c.h.b16 %v1864
        %v3006 = vunpack.c.l.b16 %v1865
        %v3007 = vunpack.c.h.b16 %v1865
        %v3008 = vunpack.c.l.b16 %v1866
        %v3009 = vunpack.c.h.b16 %v1866
        %v3010 = vunpack.c.l.b16 %v1867
        %v3011 = vunpack.c.h.b16 %v1867
        %v3012 = vunpack.c.l.b16 %v1868
        %v3013 = vunpack.c.h.b16 %v1868
        %v3014 = vunpack.c.l.b16 %v1869
        %v3015 = vunpack.c.h.b16 %v1869
        %v3016 = vunpack.c.l.b16 %v1870
        %v3017 = vunpack.c.h.b16 %v1870
        %v3018 = vunpack.c.l.b16 %v1871
        %v3019 = vunpack.c.h.b16 %v1871
        %v3020 = vunpack.c.l.b16 %v1872
        %v3021 = vunpack.c.h.b16 %v1872
        %v3022 = vunpack.c.l.b16 %v1873
        %v3023 = vunpack.c.h.b16 %v1873
        %v3024 = vunpack.c.l.b16 %v1874
        %v3025 = vunpack.c.h.b16 %v1874
        %v3026 = vunpack.c.l.b16 %v1875
        %v3027 = vunpack.c.h.b16 %v1875
        %v3028 = vunpack.c.l.b16 %v1876
        %v3029 = vunpack.c.h.b16 %v1876
        %v3030 = vunpack.c.l.b16 %v1877
        %v3031 = vunpack.c.h.b16 %v1877
        %v3032 = vunpack.c.l.b16 %v1878
        %v3033 = vunpack.c.h.b16 %v1878
        %v3034 = vunpack.c.l.b16 %v1879
        %v3035 = vunpack.c.h.b16 %v1879
        %v3036 = vunpack.c.l.b16 %v1880
        %v3037 = vunpack.c.h.b16 %v1880
        %v3038 = vunpack.c.l.b16 %v1881
        %v3039 = vunpack.c.h.b16 %v1881
        %v3040 = vunpack.c.l.b16 %v1882
        %v3041 = vunpack.c.h.b16 %v1882
        %v3042 = vunpack.c.l.b16 %v1883
        %v3043 = vunpack.c.h.b16 %v1883
        %v3044 = vunpack.c.l.b16 %v1884
        %v3045 = vunpack.c.h.b16 %v1884
        %v3046 = vunpack.c.l.b16 %v1885
        %v3047 = vunpack.c.h.b16 %v1885
        %v3048 = vunpack.c.l.b16 %v1886
        %v3049 = vunpack.c.h.b16 %v1886
        %v3050 = vunpack.c.l.b16 %v1887
        %v3051 = vunpack.c.h.b16 %v1887
        %v3052 = vunpack.c.l.b16 %v1888
        %v3053 = vunpack.c.h.b16 %v1888
        %v3054 = vunpack.c.l.b16 %v1889
        %v3055 = vunpack.c.h.b16 %v1889
        %v3056 = vunpack.c.l.b16 %v1890
        %v3057 = vunpack.c.h.b16 %v1890
        %v3058 = vunpack.c.l.b16 %v1891
        %v3059 = vunpack.c.h.b16 %v1891
        %v3060 = vunpack.c.l.b16 %v1892
        %v3061 = vunpack.c.h.b16 %v1892
        %v3062 = vunpack.c.l.b16 %v1893
        %v3063 = vunpack.c.h.b16 %v1893
        %v3064 = vunpack.c.l.b16 %v1894
        %v3065 = vunpack.c.h.b16 %v1894
        %v3066 = vunpack.c.l.b16 %v1895
        %v3067 = vunpack.c.h.b16 %v1895
        %v3068 = vunpack.c.l.b16 %v1896
        %v3069 = vunpack.c.h.b16 %v1896
        %v3070 = vunpack.c.l.b16 %v1897
        %v3071 = vunpack.c.h.b16 %v1897
        %v3072 = vunpack.c.l.b16 %v1898
        %v3073 = vunpack.c.h.b16 %v1898
        %v3074 = vunpack.c.l.b16 %v1899
        %v3075 = vunpack.c.h.b16 %v1899
        %v3076 = vunpack.c.l.b16 %v1900
        %v3077 = vunpack.c.h.b16 %v1900
        %v3078 = vunpack.c.l.b16 %v1901
        %v3079 = vunpack.c.h.b16 %v1901
        %v3080 = vunpack.c.l.b16 %v1902
        %v3081 = vunpack.c.h.b16 %v1902
        %v3082 = vunpack.c.l.b16 %v1903
        %v3083 = vunpack.c.h.b16 %v1903
        %v3084 = vunpack.c.l.b16 %v1904
        %v3085 = vunpack.c.h.b16 %v1904
        %v3086 = vunpack.c.l.b16 %v1905
        %v3087 = vunpack.c.h.b16 %v1905
        %v3088 = vunpack.c.l.b16 %v1906
        %v3089 = vunpack.c.h.b16 %v1906
        %v3090 = vunpack.c.l.b16 %v1907
        %v3091 = vunpack.c.h.b16 %v1907
        %v3092 = vunpack.c.l.b16 %v1908
        %v3093 = vunpack.c.h.b16 %v1908
        %v3094 = vunpack.c.l.b16 %v1909
        %v3095 = vunpack.c.h.b16 %v1909
        %v3096 = vunpack.c.l.b16 %v1910
        %v3097 = vunpack.c.h.b16 %v1910
        %v3098 = vunpack.c.l.b16 %v1911
        %v3099 = vunpack.c.h.b16 %v1911
        %v3100 = vunpack.c.l.b16 %v1912
        %v3101 = vunpack.c.h.b16 %v1912
        %v3102 = vunpack.c.l.b16 %v1913
        %v3103 = vunpack.c.h.b16 %v1913
        %v3104 = vunpack.c.l.b16 %v1914
        %v3105 = vunpack.c.h.b16 %v1914
        %v3106 = vunpack.c.l.b16 %v1915
        %v3107 = vunpack.c.h.b16 %v1915
        %v3108 = vunpack.c.l.b16 %v1916
        %v3109 = vunpack.c.h.b16 %v1916
        %v3110 = vunpack.c.l.b16 %v1917
        %v3111 = vunpack.c.h.b16 %v1917
        %v3112 = vunpack.c.l.b16 %v1918
        %v3113 = vunpack.c.h.b16 %v1918
        %v3114 = vunpack.c.l.b16 %v1919
        %v3115 = vunpack.c.h.b16 %v1919
        %v3116 = vunpack.c.l.b16 %v1920
        %v3117 = vunpack.c.h.b16 %v1920
        %v3118 = vunpack.c.l.b16 %v1921
        %v3119 = vunpack.c.h.b16 %v1921
        %v3120 = vunpack.c.l.b16 %v1922
        %v3121 = vunpack.c.h.b16 %v1922
        %v3122 = vunpack.c.l.b16 %v1923
        %v3123 = vunpack.c.h.b16 %v1923
        %v3124 = vunpack.c.l.b16 %v1924
        %v3125 = vunpack.c.h.b16 %v1924
        %v3126 = vunpack.c.l.b16 %v1925
        %v3127 = vunpack.c.h.b16 %v1925
        %v3128 = vunpack.c.l.b16 %v1926
        %v3129 = vunpack.c.h.b16 %v1926
        %v3130 = vunpack.c.l.b16 %v1927
        %v3131 = vunpack.c.h.b16 %v1927
        %v3132 = vunpack.c.l.b16 %v1928
        %v3133 = vunpack.c.h.b16 %v1928
        %v3134 = vunpack.c.l.b16 %v1929
        %v3135 = vunpack.c.h.b16 %v1929
        %v3136 = vunpack.c.l.b16 %v1930
        %v3137 = vunpack.c.h.b16 %v1930
        %v3138 = vunpack.c.l.b16 %v1931
        %v3139 = vunpack.c.h.b16 %v1931
        %v3140 = vunpack.c.l.b16 %v1932
        %v3141 = vunpack.c.h.b16 %v1932
        %v3142 = vunpack.c.l.b16 %v1933
        %v3143 = vunpack.c.h.b16 %v1933
        %v3144 = vunpack.c.l.b16 %v1934
        %v3145 = vunpack.c.h.b16 %v1934
        %v3146 = vunpack.c.l.b16 %v1935
        %v3147 = vunpack.c.h.b16 %v1935
        %v3148 = vunpack.c.l.b16 %v1936
        %v3149 = vunpack.c.h.b16 %v1936
        %v3150 = vunpack.c.l.b16 %v1937
        %v3151 = vunpack.c.h.b16 %v1937
        %v3152 = vunpack.c.l.b16 %v1938
        %v3153 = vunpack.c.h.b16 %v1938
        %v3154 = vunpack.c.l.b16 %v1939
        %v3155 = vunpack.c.h.b16 %v1939
        %v3156 = vunpack.c.l.b16 %v1940
        %v3157 = vunpack.c.h.b16 %v1940
        %v3158 = vunpack.c.l.b16 %v1941
        %v3159 = vunpack.c.h.b16 %v1941
        %v3160 = vunpack.c.l.b16 %v1942
        %v3161 = vunpack.c.h.b16 %v1942
        %v3162 = vunpack.c.l.b16 %v1943
        %v3163 = vunpack.c.h.b16 %v1943
        %v3164 = vunpack.c.l.b16 %v1944
        %v3165 = vunpack.c.h.b16 %v1944
        %v3166 = vunpack.c.l.b16 %v1945
        %v3167 = vunpack.c.h.b16 %v1945
        %v3168 = vunpack.c.l.b16 %v1946
        %v3169 = vunpack.c.h.b16 %v1946
        %v3170 = vunpack.c.l.b16 %v1947
        %v3171 = vunpack.c.h.b16 %v1947
        %v3172 = vunpack.c.l.b16 %v1948
        %v3173 = vunpack.c.h.b16 %v1948
        %v3174 = vunpack.c.l.b16 %v1949
        %v3175 = vunpack.c.h.b16 %v1949
        %v3176 = vunpack.c.l.b16 %v1950
        %v3177 = vunpack.c.h.b16 %v1950
        %v3178 = vunpack.c.l.b16 %v1951
        %v3179 = vunpack.c.h.b16 %v1951
        %v3180 = vunpack.c.l.b16 %v1952
        %v3181 = vunpack.c.h.b16 %v1952
        %v3182 = vunpack.c.l.b16 %v1953
        %v3183 = vunpack.c.h.b16 %v1953
        %v3184 = vunpack.c.l.b16 %v1954
        %v3185 = vunpack.c.h.b16 %v1954
        %v3186 = vunpack.c.l.b16 %v1955
        %v3187 = vunpack.c.h.b16 %v1955
        %v3188 = vunpack.c.l.b16 %v1956
        %v3189 = vunpack.c.h.b16 %v1956
        %v3190 = vunpack.c.l.b16 %v1957
        %v3191 = vunpack.c.h.b16 %v1957
        %v3192 = vunpack.c.l.b16 %v1958
        %v3193 = vunpack.c.h.b16 %v1958
        %v3194 = vunpack.c.l.b16 %v1959
        %v3195 = vunpack.c.h.b16 %v1959
        %v3196 = vunpack.c.l.b16 %v1960
        %v3197 = vunpack.c.h.b16 %v1960
        %v3198 = vunpack.c.l.b16 %v1961
        %v3199 = vunpack.c.h.b16 %v1961
        %v3200 = vunpack.c.l.b16 %v1962
        %v3201 = vunpack.c.h.b16 %v1962
        %v3202 = vunpack.c.l.b16 %v1963
        %v3203 = vunpack.c.h.b16 %v1963
        %v3204 = vunpack.c.l.b16 %v1964
        %v3205 = vunpack.c.h.b16 %v1964
        %v3206 = vunpack.c.l.b16 %v1965
        %v3207 = vunpack.c.h.b16 %v1965
        %v3208 = vunpack.c.l.b16 %v1966
        %v3209 = vunpack.c.h.b16 %v1966
        %v3210 = vunpack.c.l.b16 %v1967
        %v3211 = vunpack.c.h.b16 %v1967
        %v3212 = vunpack.c.l.b16 %v1968
        %v3213 = vunpack.c.h.b16 %v1968
        %v3214 = vunpack.c.l.b16 %v1969
        %v3215 = vunpack.c.h.b16 %v1969
        %v3216 = vunpack.c.l.b16 %v1970
        %v3217 = vunpack.c.h.b16 %v1970
        %v3218 = vunpack.c.l.b16 %v1971
        %v3219 = vunpack.c.h.b16 %v1971
        %v3220 = vunpack.c.l.b16 %v1972
        %v3221 = vunpack.c.h.b16 %v1972
        %v3222 = vunpack.c.l.b16 %v1973
        %v3223 = vunpack.c.h.b16 %v1973
        %v3224 = vunpack.c.l.b16 %v1974
        %v3225 = vunpack.c.h.b16 %v1974
        %v3226 = vunpack.c.l.b16 %v1975
        %v3227 = vunpack.c.h.b16 %v1975
        %v3228 = vunpack.c.l.b16 %v1976
        %v3229 = vunpack.c.h.b16 %v1976
        %v3230 = vunpack.c.l.b16 %v1977
        %v3231 = vunpack.c.h.b16 %v1977
        %v3232 = vunpack.c.l.b16 %v1978
        %v3233 = vunpack.c.h.b16 %v1978
        %v3234 = vunpack.c.l.b16 %v1979
        %v3235 = vunpack.c.h.b16 %v1979
        %v3236 = vunpack.c.l.b16 %v1980
        %v3237 = vunpack.c.h.b16 %v1980
        %v3238 = vunpack.c.l.b16 %v1981
        %v3239 = vunpack.c.h.b16 %v1981
        %v3240 = vunpack.c.l.b16 %v1982
        %v3241 = vunpack.c.h.b16 %v1982
        %v3242 = vunpack.c.l.b16 %v1983
        %v3243 = vunpack.c.h.b16 %v1983
        %v3244 = vunpack.c.l.b16 %v1984
        %v3245 = vunpack.c.h.b16 %v1984
        %v3246 = vunpack.c.l.b16 %v1985
        %v3247 = vunpack.c.h.b16 %v1985
        %v3248 = vunpack.c.l.b16 %v1986
        %v3249 = vunpack.c.h.b16 %v1986
        %v3250 = vunpack.c.l.b16 %v1987
        %v3251 = vunpack.c.h.b16 %v1987
        %v3252 = vunpack.c.l.b16 %v1988
        %v3253 = vunpack.c.h.b16 %v1988
        %v3254 = vunpack.c.l.b16 %v1989
        %v3255 = vunpack.c.h.b16 %v1989
        %v3256 = vunpack.c.l.b16 %v1990
        %v3257 = vunpack.c.h.b16 %v1990
        %v3258 = vunpack.c.l.b16 %v1991
        %v3259 = vunpack.c.h.b16 %v1991
        %v3260 = vunpack.c.l.b16 %v1992
        %v3261 = vunpack.c.h.b16 %v1992
        %v3262 = vunpack.c.l.b16 %v1993
        %v3263 = vunpack.c.h.b16 %v1993
        %v3264 = vunpack.c.l.b16 %v1994
        %v3265 = vunpack.c.h.b16 %v1994
        %v3266 = vunpack.c.l.b16 %v1995
        %v3267 = vunpack.c.h.b16 %v1995
        %v3268 = vunpack.c.l.b16 %v1996
        %v3269 = vunpack.c.h.b16 %v1996
        %v3270 = vunpack.c.l.b16 %v1997
        %v3271 = vunpack.c.h.b16 %v1997
        %v3272 = vunpack.c.l.b16 %v1998
        %v3273 = vunpack.c.h.b16 %v1998
        %v3274 = vunpack.c.l.b16 %v1999
        %v3275 = vunpack.c.h.b16 %v1999
        %v3276 = vunpack.c.l.b16 %v2000
        %v3277 = vunpack.c.h.b16 %v2000
        %v3278 = vunpack.c.l.b16 %v2001
        %v3279 = vunpack.c.h.b16 %v2001
        %v3280 = vunpack.c.l.b16 %v2002
        %v3281 = vunpack.c.h.b16 %v2002
        %v3282 = vunpack.c.l.b16 %v2003
        %v3283 = vunpack.c.h.b16 %v2003
        %v3284 = vunpack.c.l.b16 %v2004
        %v3285 = vunpack.c.h.b16 %v2004
        %v3286 = vunpack.c.l.b16 %v2005
        %v3287 = vunpack.c.h.b16 %v2005
        %v3288 = vunpack.c.l.b16 %v2006
        %v3289 = vunpack.c.h.b16 %v2006
        %v3290 = vunpack.c.l.b16 %v2007
        %v3291 = vunpack.c.h.b16 %v2007
        %v3292 = vunpack.c.l.b16 %v2008
        %v3293 = vunpack.c.h.b16 %v2008
        %v3294 = vunpack.c.l.b16 %v2009
        %v3295 = vunpack.c.h.b16 %v2009
        %v3296 = vunpack.c.l.b16 %v2010
        %v3297 = vunpack.c.h.b16 %v2010
        %v3298 = vunpack.c.l.b16 %v2011
        %v3299 = vunpack.c.h.b16 %v2011
        %v3300 = vunpack.c.l.b16 %v2012
        %v3301 = vunpack.c.h.b16 %v2012
        %v3302 = vunpack.c.l.b16 %v2013
        %v3303 = vunpack.c.h.b16 %v2013
        %v3304 = vunpack.c.l.b16 %v2014
        %v3305 = vunpack.c.h.b16 %v2014
        %v3306 = vunpack.c.l.b16 %v2015
        %v3307 = vunpack.c.h.b16 %v2015
        %v3308 = vunpack.c.l.b16 %v2016
        %v3309 = vunpack.c.h.b16 %v2016
        %v3310 = vunpack.c.l.b16 %v2017
        %v3311 = vunpack.c.h.b16 %v2017
        %v3312 = vunpack.c.l.b16 %v2018
        %v3313 = vunpack.c.h.b16 %v2018
        %v3314 = vunpack.c.l.b16 %v2019
        %v3315 = vunpack.c.h.b16 %v2019
        %v3316 = vunpack.c.l.b16 %v2020
        %v3317 = vunpack.c.h.b16 %v2020
        %v3318 = vunpack.c.l.b16 %v2021
        %v3319 = vunpack.c.h.b16 %v2021
        %v3320 = vunpack.c.l.b16 %v2022
        %v3321 = vunpack.c.h.b16 %v2022
        %v3322 = vunpack.c.l.b16 %v2023
        %v3323 = vunpack.c.h.b16 %v2023
        %v3324 = vunpack.c.l.b16 %v2024
        %v3325 = vunpack.c.h.b16 %v2024
        %v3326 = vunpack.c.l.b16 %v2025
        %v3327 = vunpack.c.h.b16 %v2025
        %v3328 = vunpack.c.l.b16 %v2026
        %v3329 = vunpack.c.h.b16 %v2026
        %v3330 = vunpack.c.l.b16 %v2027
        %v3331 = vunpack.c.h.b16 %v2027
        %v3332 = vunpack.c.l.b16 %v2028
        %v3333 = vunpack.c.h.b16 %v2028
        %v3334 = vunpack.c.l.b16 %v2029
        %v3335 = vunpack.c.h.b16 %v2029
        %v3336 = vunpack.c.l.b16 %v2030
        %v3337 = vunpack.c.h.b16 %v2030
        %v3338 = vunpack.c.l.b16 %v2031
        %v3339 = vunpack.c.h.b16 %v2031
        %v3340 = vunpack.c.l.b16 %v2032
        %v3341 = vunpack.c.h.b16 %v2032
        %v3342 = vunpack.c.l.b16 %v2033
        %v3343 = vunpack.c.h.b16 %v2033
        %v3344 = vunpack.c.l.b16 %v2034
        %v3345 = vunpack.c.h.b16 %v2034
        %v3346 = vunpack.c.l.b16 %v2035
        %v3347 = vunpack.c.h.b16 %v2035
        %v3348 = vunpack.c.l.b16 %v2036
        %v3349 = vunpack.c.h.b16 %v2036
        %v3350 = vunpack.c.l.b16 %v2037
        %v3351 = vunpack.c.h.b16 %v2037
        %v3352 = vunpack.c.l.b16 %v2038
        %v3353 = vunpack.c.h.b16 %v2038
        %v3354 = vunpack.c.l.b16 %v2039
        %v3355 = vunpack.c.h.b16 %v2039
        %v3356 = vunpack.c.l.b16 %v2040
        %v3357 = vunpack.c.h.b16 %v2040
        %v3358 = vunpack.c.l.b16 %v2041
        %v3359 = vunpack.c.h.b16 %v2041
        %v3360 = vunpack.c.l.b16 %v2042
        %v3361 = vunpack.c.h.b16 %v2042
        %v3362 = vunpack.c.l.b16 %v2043
        %v3363 = vunpack.c.h.b16 %v2043
        %v3364 = vunpack.c.l.b16 %v2044
        %v3365 = vunpack.c.h.b16 %v2044
        %v3366 = vunpack.c.l.b16 %v2045
        %v3367 = vunpack.c.h.b16 %v2045
        %v3368 = vunpack.c.l.b16 %v2046
        %v3369 = vunpack.c.h.b16 %v2046
        %v3370 = vunpack.c.l.b16 %v2047
        %v3371 = vunpack.c.h.b16 %v2047
        %v3372 = vunpack.c.l.b16 %v2048
        %v3373 = vunpack.c.h.b16 %v2048
        %v3374 = vunpack.c.l.b16 %v2049
        %v3375 = vunpack.c.h.b16 %v2049
        %v3376 = vunpack.c.l.b16 %v2050
        %v3377 = vunpack.c.h.b16 %v2050
        %v3378 = vunpack.c.l.b16 %v2051
        %v3379 = vunpack.c.h.b16 %v2051
        %v3380 = vunpack.c.l.b16 %v2052
        %v3381 = vunpack.c.h.b16 %v2052
        %v3382 = vunpack.c.l.b16 %v2053
        %v3383 = vunpack.c.h.b16 %v2053
        %v3384 = vunpack.c.l.b16 %v2054
        %v3385 = vunpack.c.h.b16 %v2054
        %v3386 = vunpack.c.l.b16 %v2055
        %v3387 = vunpack.c.h.b16 %v2055
        %v3388 = vunpack.c.l.b16 %v2056
        %v3389 = vunpack.c.h.b16 %v2056
        %v3390 = vunpack.c.l.b16 %v2057
        %v3391 = vunpack.c.h.b16 %v2057
        %v3392 = vunpack.c.l.b16 %v2058
        %v3393 = vunpack.c.h.b16 %v2058
        %v3394 = vunpack.c.l.b16 %v2059
        %v3395 = vunpack.c.h.b16 %v2059
        %v3396 = vunpack.c.l.b16 %v2060
        %v3397 = vunpack.c.h.b16 %v2060
        %v3398 = vunpack.c.l.b16 %v2061
        %v3399 = vunpack.c.h.b16 %v2061
        %v3400 = vunpack.c.l.b16 %v2062
        %v3401 = vunpack.c.h.b16 %v2062
        %v3402 = vunpack.c.l.b16 %v2063
        %v3403 = vunpack.c.h.b16 %v2063
        %v3404 = vunpack.c.l.b16 %v2064
        %v3405 = vunpack.c.h.b16 %v2064
        %v3406 = vunpack.c.l.b16 %v2065
        %v3407 = vunpack.c.h.b16 %v2065
        %v3408 = vunpack.c.l.b16 %v2066
        %v3409 = vunpack.c.h.b16 %v2066
        %v3410 = vunpack.c.l.b16 %v2067
        %v3411 = vunpack.c.h.b16 %v2067
        %v3412 = vunpack.c.l.b16 %v2068
        %v3413 = vunpack.c.h.b16 %v2068
        %v3414 = vunpack.c.l.b16 %v2069
        %v3415 = vunpack.c.h.b16 %v2069
        %v3416 = vunpack.c.l.b16 %v2070
        %v3417 = vunpack.c.h.b16 %v2070
        %v3418 = vunpack.c.l.b16 %v2071
        %v3419 = vunpack.c.h.b16 %v2071
        %v3420 = vunpack.c.l.b16 %v2072
        %v3421 = vunpack.c.h.b16 %v2072
        %v3422 = vunpack.c.l.b16 %v2073
        %v3423 = vunpack.c.h.b16 %v2073
        %v3424 = vunpack.c.l.b16 %v2074
        %v3425 = vunpack.c.h.b16 %v2074
        %v3426 = vunpack.c.l.b16 %v2075
        %v3427 = vunpack.c.h.b16 %v2075
        %v3428 = vunpack.c.l.b16 %v2076
        %v3429 = vunpack.c.h.b16 %v2076
        %v3430 = vunpack.c.l.b16 %v2077
        %v3431 = vunpack.c.h.b16 %v2077
        %v3432 = vunpack.c.l.b16 %v2078
        %v3433 = vunpack.c.h.b16 %v2078
        %v3434 = vunpack.c.l.b16 %v2079
        %v3435 = vunpack.c.h.b16 %v2079
        %v3436 = vunpack.c.l.b16 %v2080
        %v3437 = vunpack.c.h.b16 %v2080
        %v3438 = vunpack.c.l.b16 %v2081
        %v3439 = vunpack.c.h.b16 %v2081
        %v3440 = vunpack.c.l.b16 %v2082
        %v3441 = vunpack.c.h.b16 %v2082
        %v3442 = vunpack.c.l.b16 %v2083
        %v3443 = vunpack.c.h.b16 %v2083
        %v3444 = vunpack.c.l.b16 %v2084
        %v3445 = vunpack.c.h.b16 %v2084
        %v3446 = vunpack.c.l.b16 %v2085
        %v3447 = vunpack.c.h.b16 %v2085
        %v3448 = vunpack.c.l.b16 %v2086
        %v3449 = vunpack.c.h.b16 %v2086
        %v3450 = vunpack.c.l.b16 %v2087
        %v3451 = vunpack.c.h.b16 %v2087
        %v3452 = vunpack.c.l.b16 %v2088
        %v3453 = vunpack.c.h.b16 %v2088
        %v3454 = vunpack.c.l.b16 %v2089
        %v3455 = vunpack.c.h.b16 %v2089
        %v3456 = vunpack.c.l.b16 %v2090
        %v3457 = vunpack.c.h.b16 %v2090
        %v3458 = vunpack.c.l.b16 %v2091
        %v3459 = vunpack.c.h.b16 %v2091
        %v3460 = vunpack.c.l.b16 %v2092
        %v3461 = vunpack.c.h.b16 %v2092
        %v3462 = vunpack.c.l.b16 %v2093
        %v3463 = vunpack.c.h.b16 %v2093
        %v3464 = vunpack.c.l.b16 %v2094
        %v3465 = vunpack.c.h.b16 %v2094
        %v3466 = vunpack.c.l.b16 %v2095
        %v3467 = vunpack.c.h.b16 %v2095
        %v3468 = vunpack.c.l.b16 %v2096
        %v3469 = vunpack.c.h.b16 %v2096
        %v3470 = vunpack.c.l.b16 %v2097
        %v3471 = vunpack.c.h.b16 %v2097
        %v3472 = vunpack.c.l.b16 %v2098
        %v3473 = vunpack.c.h.b16 %v2098
        %v3474 = vunpack.c.l.b16 %v2099
        %v3475 = vunpack.c.h.b16 %v2099
        %v3476 = vunpack.c.l.b16 %v2100
        %v3477 = vunpack.c.h.b16 %v2100
        %v3478 = vunpack.c.l.b16 %v2101
        %v3479 = vunpack.c.h.b16 %v2101
        %v3480 = vunpack.c.l.b16 %v2102
        %v3481 = vunpack.c.h.b16 %v2102
        %v3482 = vunpack.c.l.b16 %v2103
        %v3483 = vunpack.c.h.b16 %v2103
        %v3484 = vunpack.c.l.b16 %v2104
        %v3485 = vunpack.c.h.b16 %v2104
        %v3486 = vunpack.c.l.b16 %v2105
        %v3487 = vunpack.c.h.b16 %v2105
        %v3488 = vunpack.c.l.b16 %v2106
        %v3489 = vunpack.c.h.b16 %v2106
        %v3490 = vunpack.c.l.b16 %v2107
        %v3491 = vunpack.c.h.b16 %v2107
        %v3492 = vunpack.c.l.b16 %v2108
        %v3493 = vunpack.c.h.b16 %v2108
        %v3494 = vunpack.c.l.b16 %v2109
        %v3495 = vunpack.c.h.b16 %v2109
        %v3496 = vunpack.c.l.b16 %v2110
        %v3497 = vunpack.c.h.b16 %v2110
        %v3498 = vunpack.c.l.b16 %v2111
        %v3499 = vunpack.c.h.b16 %v2111
        %v3500 = vunpack.c.l.b16 %v2112
        %v3501 = vunpack.c.h.b16 %v2112
        %v3502 = vunpack.c.l.b16 %v2113
        %v3503 = vunpack.c.h.b16 %v2113
        %v3504 = vunpack.c.l.b16 %v2114
        %v3505 = vunpack.c.h.b16 %v2114
        %v3506 = vunpack.c.l.b16 %v2115
        %v3507 = vunpack.c.h.b16 %v2115
        %v3508 = vunpack.c.l.b16 %v2116
        %v3509 = vunpack.c.h.b16 %v2116
        %v3510 = vunpack.c.l.b16 %v2117
        %v3511 = vunpack.c.h.b16 %v2117
        %v3512 = vunpack.c.l.b16 %v2118
        %v3513 = vunpack.c.h.b16 %v2118
        %v3514 = vunpack.c.l.b16 %v2119
        %v3515 = vunpack.c.h.b16 %v2119
        %v3516 = vunpack.c.l.b16 %v2120
        %v3517 = vunpack.c.h.b16 %v2120
        %v3518 = vunpack.c.l.b16 %v2121
        %v3519 = vunpack.c.h.b16 %v2121
        %v3520 = vunpack.c.l.b16 %v2122
        %v3521 = vunpack.c.h.b16 %v2122
        %v3522 = vunpack.c.l.b16 %v2123
        %v3523 = vunpack.c.h.b16 %v2123
        %v3524 = vunpack.c.l.b16 %v2124
        %v3525 = vunpack.c.h.b16 %v2124
        %v3526 = vunpack.c.l.b16 %v2125
        %v3527 = vunpack.c.h.b16 %v2125
        %v3528 = vunpack.c.l.b16 %v2126
        %v3529 = vunpack.c.h.b16 %v2126
        %v3530 = vunpack.c.l.b16 %v2127
        %v3531 = vunpack.c.h.b16 %v2127
        %v3532 = vunpack.c.l.b16 %v2128
        %v3533 = vunpack.c.h.b16 %v2128
        %v3534 = vunpack.c.l.b16 %v2129
        %v3535 = vunpack.c.h.b16 %v2129
        %v3536 = vunpack.c.l.b16 %v2130
        %v3537 = vunpack.c.h.b16 %v2130
        %v3538 = vunpack.c.l.b16 %v2131
        %v3539 = vunpack.c.h.b16 %v2131
        %v3540 = vunpack.c.l.b16 %v2132
        %v3541 = vunpack.c.h.b16 %v2132
        %v3542 = vunpack.c.l.b16 %v2133
        %v3543 = vunpack.c.h.b16 %v2133
        %v3544 = vunpack.c.l.b16 %v2134
        %v3545 = vunpack.c.h.b16 %v2134
        %v3546 = vunpack.c.l.b16 %v2135
        %v3547 = vunpack.c.h.b16 %v2135
        %v3548 = vunpack.c.l.b16 %v2136
        %v3549 = vunpack.c.h.b16 %v2136
        %v3550 = vunpack.c.l.b16 %v2137
        %v3551 = vunpack.c.h.b16 %v2137
        %v3552 = vunpack.c.l.b16 %v2138
        %v3553 = vunpack.c.h.b16 %v2138
        %v3554 = vunpack.c.l.b16 %v2139
        %v3555 = vunpack.c.h.b16 %v2139
        %v3556 = vunpack.c.l.b16 %v2140
        %v3557 = vunpack.c.h.b16 %v2140
        %v3558 = vunpack.c.l.b16 %v2141
        %v3559 = vunpack.c.h.b16 %v2141
        %v3560 = vunpack.c.l.b16 %v2142
        %v3561 = vunpack.c.h.b16 %v2142
        %v3562 = vunpack.c.l.b16 %v2143
        %v3563 = vunpack.c.h.b16 %v2143
        %v3564 = vunpack.c.l.b16 %v2144
        %v3565 = vunpack.c.h.b16 %v2144
        %v3566 = vunpack.c.l.b16 %v2145
        %v3567 = vunpack.c.h.b16 %v2145
        %v3568 = vunpack.c.l.b16 %v2146
        %v3569 = vunpack.c.h.b16 %v2146
        %v3570 = vunpack.c.l.b16 %v2147
        %v3571 = vunpack.c.h.b16 %v2147
        %v3572 = vunpack.c.l.b16 %v2148
        %v3573 = vunpack.c.h.b16 %v2148
        %v3574 = vunpack.c.l.b16 %v2149
        %v3575 = vunpack.c.h.b16 %v2149
        %v3576 = vunpack.c.l.b16 %v2150
        %v3577 = vunpack.c.h.b16 %v2150
        %v3578 = vunpack.c.l.b16 %v2151
        %v3579 = vunpack.c.h.b16 %v2151
        %v3580 = vunpack.c.l.b16 %v2152
        %v3581 = vunpack.c.h.b16 %v2152
        %v3582 = vunpack.c.l.b16 %v2153
        %v3583 = vunpack.c.h.b16 %v2153
        %v3584 = vunpack.c.l.b16 %v2154
        %v3585 = vunpack.c.h.b16 %v2154
        %v3586 = vunpack.c.l.b16 %v2155
        %v3587 = vunpack.c.h.b16 %v2155
        %v3588 = vunpack.c.l.b16 %v2156
        %v3589 = vunpack.c.h.b16 %v2156
        %v3590 = vunpack.c.l.b16 %v2157
        %v3591 = vunpack.c.h.b16 %v2157
        %v3592 = vunpack.c.l.b16 %v2158
        %v3593 = vunpack.c.h.b16 %v2158
        %v3594 = vunpack.c.l.b16 %v2159
        %v3595 = vunpack.c.h.b16 %v2159
        %v3596 = vunpack.c.l.b16 %v2160
        %v3597 = vunpack.c.h.b16 %v2160
        %v3598 = vunpack.c.l.b16 %v2161
        %v3599 = vunpack.c.h.b16 %v2161
        %v3600 = vunpack.c.l.b16 %v2162
        %v3601 = vunpack.c.h.b16 %v2162
        %v3602 = vunpack.c.l.b16 %v2163
        %v3603 = vunpack.c.h.b16 %v2163
        %v3604 = vunpack.c.l.b16 %v2164
        %v3605 = vunpack.c.h.b16 %v2164
        %v3606 = vunpack.c.l.b16 %v2165
        %v3607 = vunpack.c.h.b16 %v2165
        %v3608 = vunpack.c.l.b16 %v2166
        %v3609 = vunpack.c.h.b16 %v2166
        %v3610 = vunpack.c.l.b16 %v2167
        %v3611 = vunpack.c.h.b16 %v2167
        %v3612 = vunpack.c.l.b16 %v2168
        %v3613 = vunpack.c.h.b16 %v2168
        %v3614 = vunpack.c.l.b16 %v2169
        %v3615 = vunpack.c.h.b16 %v2169
        %v3616 = vunpack.c.l.b16 %v2170
        %v3617 = vunpack.c.h.b16 %v2170
        %v3618 = vunpack.c.l.b16 %v2171
        %v3619 = vunpack.c.h.b16 %v2171
        %v3620 = vunpack.c.l.b16 %v2172
        %v3621 = vunpack.c.h.b16 %v2172
        %v3622 = vunpack.c.l.b16 %v2173
        %v3623 = vunpack.c.h.b16 %v2173
        %v3624 = vunpack.c.l.b16 %v2174
        %v3625 = vunpack.c.h.b16 %v2174
        %v3626 = vunpack.c.l.b16 %v2175
        %v3627 = vunpack.c.h.b16 %v2175
        %v3628 = vunpack.c.l.b16 %v2176
        %v3629 = vunpack.c.h.b16 %v2176
        %v3630 = vunpack.c.l.b16 %v2177
        %v3631 = vunpack.c.h.b16 %v2177
        %v3632 = vunpack.c.l.b16 %v2178
        %v3633 = vunpack.c.h.b16 %v2178
        %v3634 = vunpack.c.l.b16 %v2179
        %v3635 = vunpack.c.h.b16 %v2179
        %v3636 = vunpack.c.l.b16 %v2180
        %v3637 = vunpack.c.h.b16 %v2180
        %v3638 = vunpack.c.l.b16 %v2181
        %v3639 = vunpack.c.h.b16 %v2181
        %v3640 = vunpack.c.l.b16 %v2182
        %v3641 = vunpack.c.h.b16 %v2182
        %v3642 = vunpack.c.l.b16 %v2183
        %v3643 = vunpack.c.h.b16 %v2183
        %v3644 = vunpack.c.l.b16 %v2184
        %v3645 = vunpack.c.h.b16 %v2184
        %v3646 = vunpack.c.l.b16 %v2185
        %v3647 = vunpack.c.h.b16 %v2185
        %v3648 = vunpack.c.l.b16 %v2186
        %v3649 = vunpack.c.h.b16 %v2186
        %v3650 = vunpack.c.l.b16 %v2187
        %v3651 = vunpack.c.h.b16 %v2187
        %v3652 = vunpack.c.l.b16 %v2188
        %v3653 = vunpack.c.h.b16 %v2188
        %v3654 = vunpack.c.l.b16 %v2189
        %v3655 = vunpack.c.h.b16 %v2189
        %v3656 = vunpack.c.l.b16 %v2190
        %v3657 = vunpack.c.h.b16 %v2190
        %v3658 = vunpack.c.l.b16 %v2191
        %v3659 = vunpack.c.h.b16 %v2191
        %v3660 = vunpack.c.l.b16 %v2192
        %v3661 = vunpack.c.h.b16 %v2192
        %v3662 = vunpack.c.l.b16 %v2193
        %v3663 = vunpack.c.h.b16 %v2193
        %v3664 = vunpack.c.l.b16 %v2194
        %v3665 = vunpack.c.h.b16 %v2194
        %v3666 = vunpack.c.l.b16 %v2195
        %v3667 = vunpack.c.h.b16 %v2195
        %v3668 = vunpack.c.l.b16 %v2196
        %v3669 = vunpack.c.h.b16 %v2196
        %v3670 = vunpack.c.l.b16 %v2197
        %v3671 = vunpack.c.h.b16 %v2197
        %v3672 = vunpack.c.l.b16 %v2198
        %v3673 = vunpack.c.h.b16 %v2198
        %v3674 = vunpack.c.l.b16 %v2199
        %v3675 = vunpack.c.h.b16 %v2199
        %v3676 = vunpack.c.l.b16 %v2200
        %v3677 = vunpack.c.h.b16 %v2200
        %v3678 = vunpack.c.l.b16 %v2201
        %v3679 = vunpack.c.h.b16 %v2201
        %v3680 = vunpack.c.l.b16 %v2202
        %v3681 = vunpack.c.h.b16 %v2202
        %v3682 = vunpack.c.l.b16 %v2203
        %v3683 = vunpack.c.h.b16 %v2203
        %v3684 = vunpack.c.l.b16 %v2204
        %v3685 = vunpack.c.h.b16 %v2204
        %v3686 = vunpack.c.l.b16 %v2205
        %v3687 = vunpack.c.h.b16 %v2205
        %v3688 = vunpack.c.l.b16 %v2206
        %v3689 = vunpack.c.h.b16 %v2206
        %v3690 = vunpack.c.l.b16 %v2207
        %v3691 = vunpack.c.h.b16 %v2207
        %v3692 = vunpack.c.l.b16 %v2208
        %v3693 = vunpack.c.h.b16 %v2208
        %v3694 = vunpack.c.l.b16 %v2209
        %v3695 = vunpack.c.h.b16 %v2209
        %v3696 = vunpack.c.l.b16 %v2210
        %v3697 = vunpack.c.h.b16 %v2210
        %v3698 = vunpack.c.l.b16 %v2211
        %v3699 = vunpack.c.h.b16 %v2211
        %v3700 = vunpack.c.l.b16 %v2212
        %v3701 = vunpack.c.h.b16 %v2212
        %v3702 = vunpack.c.l.b16 %v2213
        %v3703 = vunpack.c.h.b16 %v2213
        %v3704 = vunpack.c.l.b16 %v2214
        %v3705 = vunpack.c.h.b16 %v2214
        %v3706 = vunpack.c.l.b16 %v2215
        %v3707 = vunpack.c.h.b16 %v2215
        %v3708 = vunpack.c.l.b16 %v2216
        %v3709 = vunpack.c.h.b16 %v2216
        %v3710 = vunpack.c.l.b16 %v2217
        %v3711 = vunpack.c.h.b16 %v2217
        %v3712 = vunpack.c.l.b16 %v2218
        %v3713 = vunpack.c.h.b16 %v2218
        %v3714 = vunpack.c.l.b16 %v2219
        %v3715 = vunpack.c.h.b16 %v2219
        %v3716 = vunpack.c.l.b16 %v2220
        %v3717 = vunpack.c.h.b16 %v2220
        %v3718 = vunpack.c.l.b16 %v2221
        %v3719 = vunpack.c.h.b16 %v2221
        %v3720 = vunpack.c.l.b16 %v2222
        %v3721 = vunpack.c.h.b16 %v2222
        %v3722 = vunpack.c.l.b16 %v2223
        %v3723 = vunpack.c.h.b16 %v2223
        %v3724 = vunpack.c.l.b16 %v2224
        %v3725 = vunpack.c.h.b16 %v2224
        %v3726 = vunpack.c.l.b16 %v2225
        %v3727 = vunpack.c.h.b16 %v2225
        %v3728 = vunpack.c.l.b16 %v2226
        %v3729 = vunpack.c.h.b16 %v2226
        %v3730 = vunpack.c.l.b16 %v2227
        %v3731 = vunpack.c.h.b16 %v2227
        %v3732 = vunpack.c.l.b16 %v2228
        %v3733 = vunpack.c.h.b16 %v2228
        %v3734 = vunpack.c.l.b16 %v2229
        %v3735 = vunpack.c.h.b16 %v2229
        %v3736 = vunpack.c.l.b16 %v2230
        %v3737 = vunpack.c.h.b16 %v2230
        %v3738 = vunpack.c.l.b16 %v2231
        %v3739 = vunpack.c.h.b16 %v2231
        %v3740 = vunpack.c.l.b16 %v2232
        %v3741 = vunpack.c.h.b16 %v2232
        %v3742 = vunpack.c.l.b16 %v2233
        %v3743 = vunpack.c.h.b16 %v2233
        %v3744 = vunpack.c.l.b16 %v2234
        %v3745 = vunpack.c.h.b16 %v2234
        %v3746 = vunpack.c.l.b16 %v2235
        %v3747 = vunpack.c.h.b16 %v2235
        %v3748 = vunpack.c.l.b16 %v2236
        %v3749 = vunpack.c.h.b16 %v2236
        %v3750 = vunpack.c.l.b16 %v2237
        %v3751 = vunpack.c.h.b16 %v2237
        %v3752 = vunpack.c.l.b16 %v2238
        %v3753 = vunpack.c.h.b16 %v2238
        %v3754 = vunpack.c.l.b16 %v2239
        %v3755 = vunpack.c.h.b16 %v2239
        %v3756 = vunpack.c.l.b16 %v2240
        %v3757 = vunpack.c.h.b16 %v2240
        %v3758 = vunpack.c.l.b16 %v2241
        %v3759 = vunpack.c.h.b16 %v2241
        %v3760 = vunpack.c.l.b16 %v2242
        %v3761 = vunpack.c.h.b16 %v2242
        %v3762 = vunpack.c.l.b16 %v2243
        %v3763 = vunpack.c.h.b16 %v2243
        %v3764 = vunpack.c.l.b16 %v2244
        %v3765 = vunpack.c.h.b16 %v2244
        %v3766 = vunpack.c.l.b16 %v2245
        %v3767 = vunpack.c.h.b16 %v2245
        %v3768 = vunpack.c.l.b16 %v2246
        %v3769 = vunpack.c.h.b16 %v2246
        %v3770 = vunpack.c.l.b16 %v2247
        %v3771 = vunpack.c.h.b16 %v2247
        %v3772 = vunpack.c.l.b16 %v2248
        %v3773 = vunpack.c.h.b16 %v2248
        %v3774 = vunpack.c.l.b16 %v2249
        %v3775 = vunpack.c.h.b16 %v2249
        %v3776 = vunpack.c.l.b16 %v2250
        %v3777 = vunpack.c.h.b16 %v2250
        %v3778 = vunpack.c.l.b16 %v2251
        %v3779 = vunpack.c.h.b16 %v2251
        %v3780 = vunpack.c.l.b16 %v2252
        %v3781 = vunpack.c.h.b16 %v2252
        %v3782 = vunpack.c.l.b16 %v2253
        %v3783 = vunpack.c.h.b16 %v2253
        %v3784 = vunpack.c.l.b16 %v2254
        %v3785 = vunpack.c.h.b16 %v2254
        %v3786 = vunpack.c.l.b16 %v2255
        %v3787 = vunpack.c.h.b16 %v2255
        %v3788 = vunpack.c.l.b16 %v2256
        %v3789 = vunpack.c.h.b16 %v2256
        %v3790 = vunpack.c.l.b16 %v2257
        %v3791 = vunpack.c.h.b16 %v2257
        %v3792 = vunpack.c.l.b16 %v2258
        %v3793 = vunpack.c.h.b16 %v2258
        %v3794 = vunpack.c.l.b16 %v2259
        %v3795 = vunpack.c.h.b16 %v2259
        %v3796 = vunpack.c.l.b16 %v2260
        %v3797 = vunpack.c.h.b16 %v2260
        %v3798 = vunpack.c.l.b16 %v2261
        %v3799 = vunpack.c.h.b16 %v2261
        %v3800 = vunpack.c.l.b16 %v2262
        %v3801 = vunpack.c.h.b16 %v2262
        %v3802 = vunpack.c.l.b16 %v2263
        %v3803 = vunpack.c.h.b16 %v2263
        %v3804 = vunpack.c.l.b16 %v2264
        %v3805 = vunpack.c.h.b16 %v2264
        %v3806 = vunpack.c.l.b16 %v2265
        %v3807 = vunpack.c.h.b16 %v2265
        %v3808 = vunpack.c.l.b16 %v2266
        %v3809 = vunpack.c.h.b16 %v2266
        %v3810 = vunpack.c.l.b16 %v2267
        %v3811 = vunpack.c.h.b16 %v2267
        %v3812 = vunpack.c.l.b16 %v2268
        %v3813 = vunpack.c.h.b16 %v2268
        %v3814 = vunpack.c.l.b16 %v2269
        %v3815 = vunpack.c.h.b16 %v2269
        %v3816 = vunpack.c.l.b16 %v2270
        %v3817 = vunpack.c.h.b16 %v2270
        %v3818 = vunpack.c.l.b16 %v2271
        %v3819 = vunpack.c.h.b16 %v2271
        %v3820 = vunpack.c.l.b16 %v2272
        %v3821 = vunpack.c.h.b16 %v2272
        %v3822 = vunpack.c.l.b16 %v2273
        %v3823 = vunpack.c.h.b16 %v2273
        %v3824 = vunpack.c.l.b16 %v2274
        %v3825 = vunpack.c.h.b16 %v2274
        %v3826 = vunpack.c.l.b16 %v2275
        %v3827 = vunpack.c.h.b16 %v2275
        %v3828 = vunpack.c.l.b16 %v2276
        %v3829 = vunpack.c.h.b16 %v2276
        %v3830 = vunpack.c.l.b16 %v2277
        %v3831 = vunpack.c.h.b16 %v2277
        %v3832 = vunpack.c.l.b16 %v2278
        %v3833 = vunpack.c.h.b16 %v2278
        %v3834 = vunpack.c.l.b16 %v2279
        %v3835 = vunpack.c.h.b16 %v2279
        %v3836 = vunpack.c.l.b16 %v2280
        %v3837 = vunpack.c.h.b16 %v2280
        %v3838 = vunpack.c.l.b16 %v2281
        %v3839 = vunpack.c.h.b16 %v2281
        %v3840 = vpack.c.b16 %v2820, %v2816
        %v3841 = vpack.c.b16 %v2821, %v2817
        %v3842 = vpack.c.b16 %v2822, %v2818
        %v3843 = vpack.c.b16 %v2823, %v2819
        %v3844 = vpack.c.b16 %v2828, %v2824
        %v3845 = vpack.c.b16 %v2829, %v2825
        %v3846 = vpack.c.b16 %v2830, %v2826
        %v3847 = vpack.c.b16 %v2831, %v2827
        %v3848 = vpack.c.b16 %v2836, %v2832
        %v3849 = vpack.c.b16 %v2837, %v2833
        %v3850 = vpack.c.b16 %v2838, %v2834
        %v3851 = vpack.c.b16 %v2839, %v2835
        %v3852 = vpack.c.b16 %v2844, %v2840
        %v3853 = vpack.c.b16 %v2845, %v2841
        %v3854 = vpack.c.b16 %v2846, %v2842
        %v3855 = vpack.c.b16 %v2847, %v2843
        %v3856 = vpack.c.b16 %v2852, %v2848
        %v3857 = vpack.c.b16 %v2853, %v2849
        %v3858 = vpack.c.b16 %v2854, %v2850
        %v3859 = vpack.c.b16 %v2855, %v2851
        %v3860 = vpack.c.b16 %v2860, %v2856
        %v3861 = vpack.c.b16 %v2861, %v2857
        %v3862 = vpack.c.b16 %v2862, %v2858
        %v3863 = vpack.c.b16 %v2863, %v2859
        %v3864 = vpack.c.b16 %v2868, %v2864
        %v3865 = vpack.c.b16 %v2869, %v2865
        %v3866 = vpack.c.b16 %v2870, %v2866
        %v3867 = vpack.c.b16 %v2871, %v2867
        %v3868 = vpack.c.b16 %v2876, %v2872
        %v3869 = vpack.c.b16 %v2877, %v2873
        %v3870 = vpack.c.b16 %v2878, %v2874
        %v3871 = vpack.c.b16 %v2879, %v2875
        %v3872 = vpack.c.b16 %v2884, %v2880
        %v3873 = vpack.c.b16 %v2885, %v2881
        %v3874 = vpack.c.b16 %v2886, %v2882
        %v3875 = vpack.c.b16 %v2887, %v2883
        %v3876 = vpack.c.b16 %v2892, %v2888
        %v3877 = vpack.c.b16 %v2893, %v2889
        %v3878 = vpack.c.b16 %v2894, %v2890
        %v3879 = vpack.c.b16 %v2895, %v2891
        %v3880 = vpack.c.b16 %v2900, %v2896
        %v3881 = vpack.c.b16 %v2901, %v2897
        %v3882 = vpack.c.b16 %v2902, %v2898
        %v3883 = vpack.c.b16 %v2903, %v2899
        %v3884 = vpack.c.b16 %v2908, %v2904
        %v3885 = vpack.c.b16 %v2909, %v2905
        %v3886 = vpack.c.b16 %v2910, %v2906
        %v3887 = vpack.c.b16 %v2911, %v2907
        %v3888 = vpack.c.b16 %v2916, %v2912
        %v3889 = vpack.c.b16 %v2917, %v2913
        %v3890 = vpack.c.b16 %v2918, %v2914
        %v3891 = vpack.c.b16 %v2919, %v2915
        %v3892 = vpack.c.b16 %v2924, %v2920
        %v3893 = vpack.c.b16 %v2925, %v2921
        %v3894 = vpack.c.b16 %v2926, %v2922
        %v3895 = vpack.c.b16 %v2927, %v2923
        %v3896 = vpack.c.b16 %v2932, %v2928
        %v3897 = vpack.c.b16 %v2933, %v2929
        %v3898 = vpack.c.b16 %v2934, %v2930
        %v3899 = vpack.c.b16 %v2935, %v2931
        %v3900 = vpack.c.b16 %v2940, %v2936
        %v3901 = vpack.c.b16 %v2941, %v2937
        %v3902 = vpack.c.b16 %v2942, %v2938
        %v3903 = vpack.c.b16 %v2943, %v2939
        %v3904 = vpack.c.b16 %v2948, %v2944
        %v3905 = vpack.c.b16 %v2949, %v2945
        %v3906 = vpack.c.b16 %v2950, %v2946
        %v3907 = vpack.c.b16 %v2951, %v2947
        %v3908 = vpack.c.b16 %v2956, %v2952
        %v3909 = vpack.c.b16 %v2957, %v2953
        %v3910 = vpack.c.b16 %v2958, %v2954
        %v3911 = vpack.c.b16 %v2959, %v2955
        %v3912 = vpack.c.b16 %v2964, %v2960
        %v3913 = vpack.c.b16 %v2965, %v2961
        %v3914 = vpack.c.b16 %v2966, %v2962
        %v3915 = vpack.c.b16 %v2967, %v2963
        %v3916 = vpack.c.b16 %v2972, %v2968
        %v3917 = vpack.c.b16 %v2973, %v2969
        %v3918 = vpack.c.b16 %v2974, %v2970
        %v3919 = vpack.c.b16 %v2975, %v2971
        %v3920 = vpack.c.b16 %v2980, %v2976
        %v3921 = vpack.c.b16 %v2981, %v2977
        %v3922 = vpack.c.b16 %v2982, %v2978
        %v3923 = vpack.c.b16 %v2983, %v2979
        %v3924 = vpack.c.b16 %v2988, %v2984
        %v3925 = vpack.c.b16 %v2989, %v2985
        %v3926 = vpack.c.b16 %v2990, %v2986
        %v3927 = vpack.c.b16 %v2991, %v2987
        %v3928 = vpack.c.b16 %v2996, %v2992
        %v3929 = vpack.c.b16 %v2997, %v2993
        %v3930 = vpack.c.b16 %v2998, %v2994
        %v3931 = vpack.c.b16 %v2999, %v2995
        %v3932 = vpack.c.b16 %v3004, %v3000
        %v3933 = vpack.c.b16 %v3005, %v3001
        %v3934 = vpack.c.b16 %v3006, %v3002
        %v3935 = vpack.c.b16 %v3007, %v3003
        %v3936 = vpack.c.b16 %v3012, %v3008
        %v3937 = vpack.c.b16 %v3013, %v3009
        %v3938 = vpack.c.b16 %v3014, %v3010
        %v3939 = vpack.c.b16 %v3015, %v3011
        %v3940 = vpack.c.b16 %v3020, %v3016
        %v3941 = vpack.c.b16 %v3021, %v3017
        %v3942 = vpack.c.b16 %v3022, %v3018
        %v3943 = vpack.c.b16 %v3023, %v3019
        %v3944 = vpack.c.b16 %v3028, %v3024
        %v3945 = vpack.c.b16 %v3029, %v3025
        %v3946 = vpack.c.b16 %v3030, %v3026
        %v3947 = vpack.c.b16 %v3031, %v3027
        %v3948 = vpack.c.b16 %v3036, %v3032
        %v3949 = vpack.c.b16 %v3037, %v3033
        %v3950 = vpack.c.b16 %v3038, %v3034
        %v3951 = vpack.c.b16 %v3039, %v3035
        %v3952 = vpack.c.b16 %v3044, %v3040
        %v3953 = vpack.c.b16 %v3045, %v3041
        %v3954 = vpack.c.b16 %v3046, %v3042
        %v3955 = vpack.c.b16 %v3047, %v3043
        %v3956 = vpack.c.b16 %v3052, %v3048
        %v3957 = vpack.c.b16 %v3053, %v3049
        %v3958 = vpack.c.b16 %v3054, %v3050
        %v3959 = vpack.c.b16 %v3055, %v3051
        %v3960 = vpack.c.b16 %v3060, %v3056
        %v3961 = vpack.c.b16 %v3061, %v3057
        %v3962 = vpack.c.b16 %v3062, %v3058
        %v3963 = vpack.c.b16 %v3063, %v3059
        %v3964 = vpack.c.b16 %v3068, %v3064
        %v3965 = vpack.c.b16 %v3069, %v3065
        %v3966 = vpack.c.b16 %v3070, %v3066
        %v3967 = vpack.c.b16 %v3071, %v3067
        %v3968 = vpack.c.b16 %v3076, %v3072
        %v3969 = vpack.c.b16 %v3077, %v3073
        %v3970 = vpack.c.b16 %v3078, %v3074
        %v3971 = vpack.c.b16 %v3079, %v3075
        %v3972 = vpack.c.b16 %v3084, %v3080
        %v3973 = vpack.c.b16 %v3085, %v3081
        %v3974 = vpack.c.b16 %v3086, %v3082
        %v3975 = vpack.c.b16 %v3087, %v3083
        %v3976 = vpack.c.b16 %v3092, %v3088
        %v3977 = vpack.c.b16 %v3093, %v3089
        %v3978 = vpack.c.b16 %v3094, %v3090
        %v3979 = vpack.c.b16 %v3095, %v3091
        %v3980 = vpack.c.b16 %v3100, %v3096
        %v3981 = vpack.c.b16 %v3101, %v3097
        %v3982 = vpack.c.b16 %v3102, %v3098
        %v3983 = vpack.c.b16 %v3103, %v3099
        %v3984 = vpack.c.b16 %v3108, %v3104
        %v3985 = vpack.c.b16 %v3109, %v3105
        %v3986 = vpack.c.b16 %v3110, %v3106
        %v3987 = vpack.c.b16 %v3111, %v3107
        %v3988 = vpack.c.b16 %v3116, %v3112
        %v3989 = vpack.c.b16 %v3117, %v3113
        %v3990 = vpack.c.b16 %v3118, %v3114
        %v3991 = vpack.c.b16 %v3119, %v3115
        %v3992 = vpack.c.b16 %v3124, %v3120
        %v3993 = vpack.c.b16 %v3125, %v3121
        %v3994 = vpack.c.b16 %v3126, %v3122
        %v3995 = vpack.c.b16 %v3127, %v3123
        %v3996 = vpack.c.b16 %v3132, %v3128
        %v3997 = vpack.c.b16 %v3133, %v3129
        %v3998 = vpack.c.b16 %v3134, %v3130
        %v3999 = vpack.c.b16 %v3135, %v3131
        %v4000 = vpack.c.b16 %v3140, %v3136
        %v4001 = vpack.c.b16 %v3141, %v3137
        %v4002 = vpack.c.b16 %v3142, %v3138
        %v4003 = vpack.c.b16 %v3143, %v3139
        %v4004 = vpack.c.b16 %v3148, %v3144
        %v4005 = vpack.c.b16 %v3149, %v3145
        %v4006 = vpack.c.b16 %v3150, %v3146
        %v4007 = vpack.c.b16 %v3151, %v3147
        %v4008 = vpack.c.b16 %v3156, %v3152
        %v4009 = vpack.c.b16 %v3157, %v3153
        %v4010 = vpack.c.b16 %v3158, %v3154
        %v4011 = vpack.c.b16 %v3159, %v3155
        %v4012 = vpack.c.b16 %v3164, %v3160
        %v4013 = vpack.c.b16 %v3165, %v3161
        %v4014 = vpack.c.b16 %v3166, %v3162
        %v4015 = vpack.c.b16 %v3167, %v3163
        %v4016 = vpack.c.b16 %v3172, %v3168
        %v4017 = vpack.c.b16 %v3173, %v3169
        %v4018 = vpack.c.b16 %v3174, %v3170
        %v4019 = vpack.c.b16 %v3175, %v3171
        %v4020 = vpack.c.b16 %v3180, %v3176
        %v4021 = vpack.c.b16 %v3181, %v3177
        %v4022 = vpack.c.b16 %v3182, %v3178
        %v4023 = vpack.c.b16 %v3183, %v3179
        %v4024 = vpack.c.b16 %v3188, %v3184
        %v4025 = vpack.c.b16 %v3189, %v3185
        %v4026 = vpack.c.b16 %v3190, %v3186
        %v4027 = vpack.c.b16 %v3191, %v3187
        %v4028 = vpack.c.b16 %v3196, %v3192
        %v4029 = vpack.c.b16 %v3197, %v3193
        %v4030 = vpack.c.b16 %v3198, %v3194
        %v4031 = vpack.c.b16 %v3199, %v3195
        %v4032 = vpack.c.b16 %v3204, %v3200
        %v4033 = vpack.c.b16 %v3205, %v3201
        %v4034 = vpack.c.b16 %v3206, %v3202
        %v4035 = vpack.c.b16 %v3207, %v3203
        %v4036 = vpack.c.b16 %v3212, %v3208
        %v4037 = vpack.c.b16 %v3213, %v3209
        %v4038 = vpack.c.b16 %v3214, %v3210
        %v4039 = vpack.c.b16 %v3215, %v3211
        %v4040 = vpack.c.b16 %v3220, %v3216
        %v4041 = vpack.c.b16 %v3221, %v3217
        %v4042 = vpack.c.b16 %v3222, %v3218
        %v4043 = vpack.c.b16 %v3223, %v3219
        %v4044 = vpack.c.b16 %v3228, %v3224
        %v4045 = vpack.c.b16 %v3229, %v3225
        %v4046 = vpack.c.b16 %v3230, %v3226
        %v4047 = vpack.c.b16 %v3231, %v3227
        %v4048 = vpack.c.b16 %v3236, %v3232
        %v4049 = vpack.c.b16 %v3237, %v3233
        %v4050 = vpack.c.b16 %v3238, %v3234
        %v4051 = vpack.c.b16 %v3239, %v3235
        %v4052 = vpack.c.b16 %v3244, %v3240
        %v4053 = vpack.c.b16 %v3245, %v3241
        %v4054 = vpack.c.b16 %v3246, %v3242
        %v4055 = vpack.c.b16 %v3247, %v3243
        %v4056 = vpack.c.b16 %v3252, %v3248
        %v4057 = vpack.c.b16 %v3253, %v3249
        %v4058 = vpack.c.b16 %v3254, %v3250
        %v4059 = vpack.c.b16 %v3255, %v3251
        %v4060 = vpack.c.b16 %v3260, %v3256
        %v4061 = vpack.c.b16 %v3261, %v3257
        %v4062 = vpack.c.b16 %v3262, %v3258
        %v4063 = vpack.c.b16 %v3263, %v3259
        %v4064 = vpack.c.b16 %v3268, %v3264
        %v4065 = vpack.c.b16 %v3269, %v3265
        %v4066 = vpack.c.b16 %v3270, %v3266
        %v4067 = vpack.c.b16 %v3271, %v3267
        %v4068 = vpack.c.b16 %v3276, %v3272
        %v4069 = vpack.c.b16 %v3277, %v3273
        %v4070 = vpack.c.b16 %v3278, %v3274
        %v4071 = vpack.c.b16 %v3279, %v3275
        %v4072 = vpack.c.b16 %v3284, %v3280
        %v4073 = vpack.c.b16 %v3285, %v3281
        %v4074 = vpack.c.b16 %v3286, %v3282
        %v4075 = vpack.c.b16 %v3287, %v3283
        %v4076 = vpack.c.b16 %v3292, %v3288
        %v4077 = vpack.c.b16 %v3293, %v3289
        %v4078 = vpack.c.b16 %v3294, %v3290
        %v4079 = vpack.c.b16 %v3295, %v3291
        %v4080 = vpack.c.b16 %v3300, %v3296
        %v4081 = vpack.c.b16 %v3301, %v3297
        %v4082 = vpack.c.b16 %v3302, %v3298
        %v4083 = vpack.c.b16 %v3303, %v3299
        %v4084 = vpack.c.b16 %v3308, %v3304
        %v4085 = vpack.c.b16 %v3309, %v3305
        %v4086 = vpack.c.b16 %v3310, %v3306
        %v4087 = vpack.c.b16 %v3311, %v3307
        %v4088 = vpack.c.b16 %v3316, %v3312
        %v4089 = vpack.c.b16 %v3317, %v3313
        %v4090 = vpack.c.b16 %v3318, %v3314
        %v4091 = vpack.c.b16 %v3319, %v3315
        %v4092 = vpack.c.b16 %v3324, %v3320
        %v4093 = vpack.c.b16 %v3325, %v3321
        %v4094 = vpack.c.b16 %v3326, %v3322
        %v4095 = vpack.c.b16 %v3327, %v3323
        %v4096 = vpack.c.b16 %v3332, %v3328
        %v4097 = vpack.c.b16 %v3333, %v3329
        %v4098 = vpack.c.b16 %v3334, %v3330
        %v4099 = vpack.c.b16 %v3335, %v3331
        %v4100 = vpack.c.b16 %v3340, %v3336
        %v4101 = vpack.c.b16 %v3341, %v3337
        %v4102 = vpack.c.b16 %v3342, %v3338
        %v4103 = vpack.c.b16 %v3343, %v3339
        %v4104 = vpack.c.b16 %v3348, %v3344
        %v4105 = vpack.c.b16 %v3349, %v3345
        %v4106 = vpack.c.b16 %v3350, %v3346
        %v4107 = vpack.c.b16 %v3351, %v3347
        %v4108 = vpack.c.b16 %v3356, %v3352
        %v4109 = vpack.c.b16 %v3357, %v3353
        %v4110 = vpack.c.b16 %v3358, %v3354
        %v4111 = vpack.c.b16 %v3359, %v3355
        %v4112 = vpack.c.b16 %v3364, %v3360
        %v4113 = vpack.c.b16 %v3365, %v3361
        %v4114 = vpack.c.b16 %v3366, %v3362
        %v4115 = vpack.c.b16 %v3367, %v3363
        %v4116 = vpack.c.b16 %v3372, %v3368
        %v4117 = vpack.c.b16 %v3373, %v3369
        %v4118 = vpack.c.b16 %v3374, %v3370
        %v4119 = vpack.c.b16 %v3375, %v3371
        %v4120 = vpack.c.b16 %v3380, %v3376
        %v4121 = vpack.c.b16 %v3381, %v3377
        %v4122 = vpack.c.b16 %v3382, %v3378
        %v4123 = vpack.c.b16 %v3383, %v3379
        %v4124 = vpack.c.b16 %v3388, %v3384
        %v4125 = vpack.c.b16 %v3389, %v3385
        %v4126 = vpack.c.b16 %v3390, %v3386
        %v4127 = vpack.c.b16 %v3391, %v3387
        %v4128 = vpack.c.b16 %v3396, %v3392
        %v4129 = vpack.c.b16 %v3397, %v3393
        %v4130 = vpack.c.b16 %v3398, %v3394
        %v4131 = vpack.c.b16 %v3399, %v3395
        %v4132 = vpack.c.b16 %v3404, %v3400
        %v4133 = vpack.c.b16 %v3405, %v3401
        %v4134 = vpack.c.b16 %v3406, %v3402
        %v4135 = vpack.c.b16 %v3407, %v3403
        %v4136 = vpack.c.b16 %v3412, %v3408
        %v4137 = vpack.c.b16 %v3413, %v3409
        %v4138 = vpack.c.b16 %v3414, %v3410
        %v4139 = vpack.c.b16 %v3415, %v3411
        %v4140 = vpack.c.b16 %v3420, %v3416
        %v4141 = vpack.c.b16 %v3421, %v3417
        %v4142 = vpack.c.b16 %v3422, %v3418
        %v4143 = vpack.c.b16 %v3423, %v3419
        %v4144 = vpack.c.b16 %v3428, %v3424
        %v4145 = vpack.c.b16 %v3429, %v3425
        %v4146 = vpack.c.b16 %v3430, %v3426
        %v4147 = vpack.c.b16 %v3431, %v3427
        %v4148 = vpack.c.b16 %v3436, %v3432
        %v4149 = vpack.c.b16 %v3437, %v3433
        %v4150 = vpack.c.b16 %v3438, %v3434
        %v4151 = vpack.c.b16 %v3439, %v3435
        %v4152 = vpack.c.b16 %v3444, %v3440
        %v4153 = vpack.c.b16 %v3445, %v3441
        %v4154 = vpack.c.b16 %v3446, %v3442
        %v4155 = vpack.c.b16 %v3447, %v3443
        %v4156 = vpack.c.b16 %v3452, %v3448
        %v4157 = vpack.c.b16 %v3453, %v3449
        %v4158 = vpack.c.b16 %v3454, %v3450
        %v4159 = vpack.c.b16 %v3455, %v3451
        %v4160 = vpack.c.b16 %v3460, %v3456
        %v4161 = vpack.c.b16 %v3461, %v3457
        %v4162 = vpack.c.b16 %v3462, %v3458
        %v4163 = vpack.c.b16 %v3463, %v3459
        %v4164 = vpack.c.b16 %v3468, %v3464
        %v4165 = vpack.c.b16 %v3469, %v3465
        %v4166 = vpack.c.b16 %v3470, %v3466
        %v4167 = vpack.c.b16 %v3471, %v3467
        %v4168 = vpack.c.b16 %v3476, %v3472
        %v4169 = vpack.c.b16 %v3477, %v3473
        %v4170 = vpack.c.b16 %v3478, %v3474
        %v4171 = vpack.c.b16 %v3479, %v3475
        %v4172 = vpack.c.b16 %v3484, %v3480
        %v4173 = vpack.c.b16 %v3485, %v3481
        %v4174 = vpack.c.b16 %v3486, %v3482
        %v4175 = vpack.c.b16 %v3487, %v3483
        %v4176 = vpack.c.b16 %v3492, %v3488
        %v4177 = vpack.c.b16 %v3493, %v3489
        %v4178 = vpack.c.b16 %v3494, %v3490
        %v4179 = vpack.c.b16 %v3495, %v3491
        %v4180 = vpack.c.b16 %v3500, %v3496
        %v4181 = vpack.c.b16 %v3501, %v3497
        %v4182 = vpack.c.b16 %v3502, %v3498
        %v4183 = vpack.c.b16 %v3503, %v3499
        %v4184 = vpack.c.b16 %v3508, %v3504
        %v4185 = vpack.c.b16 %v3509, %v3505
        %v4186 = vpack.c.b16 %v3510, %v3506
        %v4187 = vpack.c.b16 %v3511, %v3507
        %v4188 = vpack.c.b16 %v3516, %v3512
        %v4189 = vpack.c.b16 %v3517, %v3513
        %v4190 = vpack.c.b16 %v3518, %v3514
        %v4191 = vpack.c.b16 %v3519, %v3515
        %v4192 = vpack.c.b16 %v3524, %v3520
        %v4193 = vpack.c.b16 %v3525, %v3521
        %v4194 = vpack.c.b16 %v3526, %v3522
        %v4195 = vpack.c.b16 %v3527, %v3523
        %v4196 = vpack.c.b16 %v3532, %v3528
        %v4197 = vpack.c.b16 %v3533, %v3529
        %v4198 = vpack.c.b16 %v3534, %v3530
        %v4199 = vpack.c.b16 %v3535, %v3531
        %v4200 = vpack.c.b16 %v3540, %v3536
        %v4201 = vpack.c.b16 %v3541, %v3537
        %v4202 = vpack.c.b16 %v3542, %v3538
        %v4203 = vpack.c.b16 %v3543, %v3539
        %v4204 = vpack.c.b16 %v3548, %v3544
        %v4205 = vpack.c.b16 %v3549, %v3545
        %v4206 = vpack.c.b16 %v3550, %v3546
        %v4207 = vpack.c.b16 %v3551, %v3547
        %v4208 = vpack.c.b16 %v3556, %v3552
        %v4209 = vpack.c.b16 %v3557, %v3553
        %v4210 = vpack.c.b16 %v3558, %v3554
        %v4211 = vpack.c.b16 %v3559, %v3555
        %v4212 = vpack.c.b16 %v3564, %v3560
        %v4213 = vpack.c.b16 %v3565, %v3561
        %v4214 = vpack.c.b16 %v3566, %v3562
        %v4215 = vpack.c.b16 %v3567, %v3563
        %v4216 = vpack.c.b16 %v3572, %v3568
        %v4217 = vpack.c.b16 %v3573, %v3569
        %v4218 = vpack.c.b16 %v3574, %v3570
        %v4219 = vpack.c.b16 %v3575, %v3571
        %v4220 = vpack.c.b16 %v3580, %v3576
        %v4221 = vpack.c.b16 %v3581, %v3577
        %v4222 = vpack.c.b16 %v3582, %v3578
        %v4223 = vpack.c.b16 %v3583, %v3579
        %v4224 = vpack.c.b16 %v3588, %v3584
        %v4225 = vpack.c.b16 %v3589, %v3585
        %v4226 = vpack.c.b16 %v3590, %v3586
        %v4227 = vpack.c.b16 %v3591, %v3587
        %v4228 = vpack.c.b16 %v3596, %v3592
        %v4229 = vpack.c.b16 %v3597, %v3593
        %v4230 = vpack.c.b16 %v3598, %v3594
        %v4231 = vpack.c.b16 %v3599, %v3595
        %v4232 = vpack.c.b16 %v3604, %v3600
        %v4233 = vpack.c.b16 %v3605, %v3601
        %v4234 = vpack.c.b16 %v3606, %v3602
        %v4235 = vpack.c.b16 %v3607, %v3603
        %v4236 = vpack.c.b16 %v3612, %v3608
        %v4237 = vpack.c.b16 %v3613, %v3609
        %v4238 = vpack.c.b16 %v3614, %v3610
        %v4239 = vpack.c.b16 %v3615, %v3611
        %v4240 = vpack.c.b16 %v3620, %v3616
        %v4241 = vpack.c.b16 %v3621, %v3617
        %v4242 = vpack.c.b16 %v3622, %v3618
        %v4243 = vpack.c.b16 %v3623, %v3619
        %v4244 = vpack.c.b16 %v3628, %v3624
        %v4245 = vpack.c.b16 %v3629, %v3625
        %v4246 = vpack.c.b16 %v3630, %v3626
        %v4247 = vpack.c.b16 %v3631, %v3627
        %v4248 = vpack.c.b16 %v3636, %v3632
        %v4249 = vpack.c.b16 %v3637, %v3633
        %v4250 = vpack.c.b16 %v3638, %v3634
        %v4251 = vpack.c.b16 %v3639, %v3635
        %v4252 = vpack.c.b16 %v3644, %v3640
        %v4253 = vpack.c.b16 %v3645, %v3641
        %v4254 = vpack.c.b16 %v3646, %v3642
        %v4255 = vpack.c.b16 %v3647, %v3643
        %v4256 = vpack.c.b16 %v3652, %v3648
        %v4257 = vpack.c.b16 %v3653, %v3649
        %v4258 = vpack.c.b16 %v3654, %v3650
        %v4259 = vpack.c.b16 %v3655, %v3651
        %v4260 = vpack.c.b16 %v3660, %v3656
        %v4261 = vpack.c.b16 %v3661, %v3657
        %v4262 = vpack.c.b16 %v3662, %v3658
        %v4263 = vpack.c.b16 %v3663, %v3659
        %v4264 = vpack.c.b16 %v3668, %v3664
        %v4265 = vpack.c.b16 %v3669, %v3665
        %v4266 = vpack.c.b16 %v3670, %v3666
        %v4267 = vpack.c.b16 %v3671, %v3667
        %v4268 = vpack.c.b16 %v3676, %v3672
        %v4269 = vpack.c.b16 %v3677, %v3673
        %v4270 = vpack.c.b16 %v3678, %v3674
        %v4271 = vpack.c.b16 %v3679, %v3675
        %v4272 = vpack.c.b16 %v3684, %v3680
        %v4273 = vpack.c.b16 %v3685, %v3681
        %v4274 = vpack.c.b16 %v3686, %v3682
        %v4275 = vpack.c.b16 %v3687, %v3683
        %v4276 = vpack.c.b16 %v3692, %v3688
        %v4277 = vpack.c.b16 %v3693, %v3689
        %v4278 = vpack.c.b16 %v3694, %v3690
        %v4279 = vpack.c.b16 %v3695, %v3691
        %v4280 = vpack.c.b16 %v3700, %v3696
        %v4281 = vpack.c.b16 %v3701, %v3697
        %v4282 = vpack.c.b16 %v3702, %v3698
        %v4283 = vpack.c.b16 %v3703, %v3699
        %v4284 = vpack.c.b16 %v3708, %v3704
        %v4285 = vpack.c.b16 %v3709, %v3705
        %v4286 = vpack.c.b16 %v3710, %v3706
        %v4287 = vpack.c.b16 %v3711, %v3707
        %v4288 = vpack.c.b16 %v3716, %v3712
        %v4289 = vpack.c.b16 %v3717, %v3713
        %v4290 = vpack.c.b16 %v3718, %v3714
        %v4291 = vpack.c.b16 %v3719, %v3715
        %v4292 = vpack.c.b16 %v3724, %v3720
        %v4293 = vpack.c.b16 %v3725, %v3721
        %v4294 = vpack.c.b16 %v3726, %v3722
        %v4295 = vpack.c.b16 %v3727, %v3723
        %v4296 = vpack.c.b16 %v3732, %v3728
        %v4297 = vpack.c.b16 %v3733, %v3729
        %v4298 = vpack.c.b16 %v3734, %v3730
        %v4299 = vpack.c.b16 %v3735, %v3731
        %v4300 = vpack.c.b16 %v3740, %v3736
        %v4301 = vpack.c.b16 %v3741, %v3737
        %v4302 = vpack.c.b16 %v3742, %v3738
        %v4303 = vpack.c.b16 %v3743, %v3739
        %v4304 = vpack.c.b16 %v3748, %v3744
        %v4305 = vpack.c.b16 %v3749, %v3745
        %v4306 = vpack.c.b16 %v3750, %v3746
        %v4307 = vpack.c.b16 %v3751, %v3747
        %v4308 = vpack.c.b16 %v3756, %v3752
        %v4309 = vpack.c.b16 %v3757, %v3753
        %v4310 = vpack.c.b16 %v3758, %v3754
        %v4311 = vpack.c.b16 %v3759, %v3755
        %v4312 = vpack.c.b16 %v3764, %v3760
        %v4313 = vpack.c.b16 %v3765, %v3761
        %v4314 = vpack.c.b16 %v3766, %v3762
        %v4315 = vpack.c.b16 %v3767, %v3763
        %v4316 = vpack.c.b16 %v3772, %v3768
        %v4317 = vpack.c.b16 %v3773, %v3769
        %v4318 = vpack.c.b16 %v3774, %v3770
        %v4319 = vpack.c.b16 %v3775, %v3771
        %v4320 = vpack.c.b16 %v3780, %v3776
        %v4321 = vpack.c.b16 %v3781, %v3777
        %v4322 = vpack.c.b16 %v3782, %v3778
        %v4323 = vpack.c.b16 %v3783, %v3779
        %v4324 = vpack.c.b16 %v3788, %v3784
        %v4325 = vpack.c.b16 %v3789, %v3785
        %v4326 = vpack.c.b16 %v3790, %v3786
        %v4327 = vpack.c.b16 %v3791, %v3787
        %v4328 = vpack.c.b16 %v3796, %v3792
        %v4329 = vpack.c.b16 %v3797, %v3793
        %v4330 = vpack.c.b16 %v3798, %v3794
        %v4331 = vpack.c.b16 %v3799, %v3795
        %v4332 = vpack.c.b16 %v3804, %v3800
        %v4333 = vpack.c.b16 %v3805, %v3801
        %v4334 = vpack.c.b16 %v3806, %v3802
        %v4335 = vpack.c.b16 %v3807, %v3803
        %v4336 = vpack.c.b16 %v3812, %v3808
        %v4337 = vpack.c.b16 %v3813, %v3809
        %v4338 = vpack.c.b16 %v3814, %v3810
        %v4339 = vpack.c.b16 %v3815, %v3811
        %v4340 = vpack.c.b16 %v3820, %v3816
        %v4341 = vpack.c.b16 %v3821, %v3817
        %v4342 = vpack.c.b16 %v3822, %v3818
        %v4343 = vpack.c.b16 %v3823, %v3819
        %v4344 = vpack.c.b16 %v3828, %v3824
        %v4345 = vpack.c.b16 %v3829, %v3825
        %v4346 = vpack.c.b16 %v3830, %v3826
        %v4347 = vpack.c.b16 %v3831, %v3827
        %v4348 = vpack.c.b16 %v3836, %v3832
        %v4349 = vpack.c.b16 %v3837, %v3833
        %v4350 = vpack.c.b16 %v3838, %v3834
        %v4351 = vpack.c.b16 %v3839, %v3835
        %4864 = vmatprep.subr.bf16.mxu0 %v3841
        %4865 = vmatpush1.bf16.msra.mxu0 %v3840
        %4866 = vmatprep.subr.bf16.mxu0 %v3845
        %4867 = vmatpush1.bf16.msra.mxu0 %v3844
        %4868 = vmatprep.subr.bf16.mxu0 %v3849
        %4869 = vmatpush1.bf16.msra.mxu0 %v3848
        %4870 = vmatprep.subr.bf16.mxu0 %v3853
        %4871 = vmatpush1.bf16.msra.mxu0 %v3852
        %4872 = vmatprep.subr.bf16.mxu0 %v3857
        %4873 = vmatpush1.bf16.msra.mxu0 %v3856
        %4874 = vmatprep.subr.bf16.mxu0 %v3861
        %4875 = vmatpush1.bf16.msra.mxu0 %v3860
        %4876 = vmatprep.subr.bf16.mxu0 %v3865
        %4877 = vmatpush1.bf16.msra.mxu0 %v3864
        %4878 = vmatprep.subr.bf16.mxu0 %v3869
        %4879 = vmatpush1.bf16.msra.mxu0 %v3868
        %4880 = vmatprep.subr.bf16.mxu0 %v3873
        %4881 = vmatpush1.bf16.msra.mxu0 %v3872
        %4882 = vmatprep.subr.bf16.mxu0 %v3877
        %4883 = vmatpush1.bf16.msra.mxu0 %v3876
        %4884 = vmatprep.subr.bf16.mxu0 %v3881
        %4885 = vmatpush1.bf16.msra.mxu0 %v3880
        %4886 = vmatprep.subr.bf16.mxu0 %v3885
        %4887 = vmatpush1.bf16.msra.mxu0 %v3884
        %4888 = vmatprep.subr.bf16.mxu0 %v3889
        %4889 = vmatpush1.bf16.msra.mxu0 %v3888
        %4890 = vmatprep.subr.bf16.mxu0 %v3893
        %4891 = vmatpush1.bf16.msra.mxu0 %v3892
        %4892 = vmatprep.subr.bf16.mxu0 %v3897
        %4893 = vmatpush1.bf16.msra.mxu0 %v3896
        %4894 = vmatprep.subr.bf16.mxu0 %v3901
        %4895 = vmatpush1.bf16.msra.mxu0 %v3900
        %4896 = vmatprep.mubr.bf16.mxu0 %v1755
        %4897 = vmatmul.mubr.bf16.gmra.mrb[0].mxu0 %v1754
        %v4898 = vpop.f32.mrb[0].mxu0
        %v4899 = vadd.f32 %v2287, %v4898
        %v4900 = vpop.f32.mrb[0].mxu0
        %v4901 = vadd.f32 %v2291, %v4900
        %v4902 = vpop.f32.mrb[0].mxu0
        %v4903 = vpop.f32.mrb[0].mxu0
        %4904 = vdwg.mxu0
        %4905 = vmatprep.subr.bf16.mxu0 %v3905
        %4906 = vmatpush1.bf16.msra.mxu0 %v3904
        %4907 = vmatprep.subr.bf16.mxu0 %v3909
        %4908 = vmatpush1.bf16.msra.mxu0 %v3908
        %4909 = vmatprep.subr.bf16.mxu0 %v3913
        %4910 = vmatpush1.bf16.msra.mxu0 %v3912
        %4911 = vmatprep.subr.bf16.mxu0 %v3917
        %4912 = vmatpush1.bf16.msra.mxu0 %v3916
        %4913 = vmatprep.subr.bf16.mxu0 %v3921
        %4914 = vmatpush1.bf16.msra.mxu0 %v3920
        %4915 = vmatprep.subr.bf16.mxu0 %v3925
        %4916 = vmatpush1.bf16.msra.mxu0 %v3924
        %4917 = vmatprep.subr.bf16.mxu0 %v3929
        %4918 = vmatpush1.bf16.msra.mxu0 %v3928
        %4919 = vmatprep.subr.bf16.mxu0 %v3933
        %4920 = vmatpush1.bf16.msra.mxu0 %v3932
        %4921 = vmatprep.subr.bf16.mxu0 %v3937
        %4922 = vmatpush1.bf16.msra.mxu0 %v3936
        %4923 = vmatprep.subr.bf16.mxu0 %v3941
        %4924 = vmatpush1.bf16.msra.mxu0 %v3940
        %4925 = vmatprep.subr.bf16.mxu0 %v3945
        %4926 = vmatpush1.bf16.msra.mxu0 %v3944
        %4927 = vmatprep.subr.bf16.mxu0 %v3949
        %4928 = vmatpush1.bf16.msra.mxu0 %v3948
        %4929 = vmatprep.subr.bf16.mxu0 %v3953
        %4930 = vmatpush1.bf16.msra.mxu0 %v3952
        %4931 = vmatprep.subr.bf16.mxu0 %v3957
        %4932 = vmatpush1.bf16.msra.mxu0 %v3956
        %4933 = vmatprep.subr.bf16.mxu0 %v3961
        %4934 = vmatpush1.bf16.msra.mxu0 %v3960
        %4935 = vmatprep.subr.bf16.mxu0 %v3965
        %4936 = vmatpush1.bf16.msra.mxu0 %v3964
        %4937 = vmatprep.mubr.bf16.mxu0 %v1757
        %4938 = vmatmul.mubr.bf16.gmra.mrb[0].mxu0 %v1756
        %v4939 = vpop.f32.mrb[0].mxu0
        %v4940 = vadd.f32 %v4899, %v4939
        %v4941 = vpop.f32.mrb[0].mxu0
        %v4942 = vadd.f32 %v4901, %v4941
        %v4943 = vpop.f32.mrb[0].mxu0
        %v4944 = vpop.f32.mrb[0].mxu0
        %4945 = vdwg.mxu0
        %4946 = vmatprep.subr.bf16.mxu0 %v3969
        %4947 = vmatpush1.bf16.msra.mxu0 %v3968
        %4948 = vmatprep.subr.bf16.mxu0 %v3973
        %4949 = vmatpush1.bf16.msra.mxu0 %v3972
        %4950 = vmatprep.subr.bf16.mxu0 %v3977
        %4951 = vmatpush1.bf16.msra.mxu0 %v3976
        %4952 = vmatprep.subr.bf16.mxu0 %v3981
        %4953 = vmatpush1.bf16.msra.mxu0 %v3980
        %4954 = vmatprep.subr.bf16.mxu0 %v3985
        %4955 = vmatpush1.bf16.msra.mxu0 %v3984
        %4956 = vmatprep.subr.bf16.mxu0 %v3989
        %4957 = vmatpush1.bf16.msra.mxu0 %v3988
        %4958 = vmatprep.subr.bf16.mxu0 %v3993
        %4959 = vmatpush1.bf16.msra.mxu0 %v3992
        %4960 = vmatprep.subr.bf16.mxu0 %v3997
        %4961 = vmatpush1.bf16.msra.mxu0 %v3996
        %4962 = vmatprep.subr.bf16.mxu0 %v4001
        %4963 = vmatpush1.bf16.msra.mxu0 %v4000
        %4964 = vmatprep.subr.bf16.mxu0 %v4005
        %4965 = vmatpush1.bf16.msra.mxu0 %v4004
        %4966 = vmatprep.subr.bf16.mxu0 %v4009
        %4967 = vmatpush1.bf16.msra.mxu0 %v4008
        %4968 = vmatprep.subr.bf16.mxu0 %v4013
        %4969 = vmatpush1.bf16.msra.mxu0 %v4012
        %4970 = vmatprep.subr.bf16.mxu0 %v4017
        %4971 = vmatpush1.bf16.msra.mxu0 %v4016
        %4972 = vmatprep.subr.bf16.mxu0 %v4021
        %4973 = vmatpush1.bf16.msra.mxu0 %v4020
        %4974 = vmatprep.subr.bf16.mxu0 %v4025
        %4975 = vmatpush1.bf16.msra.mxu0 %v4024
        %4976 = vmatprep.subr.bf16.mxu0 %v4029
        %4977 = vmatpush1.bf16.msra.mxu0 %v4028
        %4978 = vmatprep.mubr.bf16.mxu0 %v1759
        %4979 = vmatmul.mubr.bf16.gmra.mrb[0].mxu0 %v1758
        %v4980 = vpop.f32.mrb[0].mxu0
        %v4981 = vadd.f32 %v4940, %v4980
        %v4982 = vpop.f32.mrb[0].mxu0
        %v4983 = vadd.f32 %v4942, %v4982
        %v4984 = vpop.f32.mrb[0].mxu0
        %v4985 = vpop.f32.mrb[0].mxu0
        %4986 = vdwg.mxu0
        %4987 = vmatprep.subr.bf16.mxu0 %v4033
        %4988 = vmatpush1.bf16.msra.mxu0 %v4032
        %4989 = vmatprep.subr.bf16.mxu0 %v4037
        %4990 = vmatpush1.bf16.msra.mxu0 %v4036
        %4991 = vmatprep.subr.bf16.mxu0 %v4041
        %4992 = vmatpush1.bf16.msra.mxu0 %v4040
        %4993 = vmatprep.subr.bf16.mxu0 %v4045
        %4994 = vmatpush1.bf16.msra.mxu0 %v4044
        %4995 = vmatprep.subr.bf16.mxu0 %v4049
        %4996 = vmatpush1.bf16.msra.mxu0 %v4048
        %4997 = vmatprep.subr.bf16.mxu0 %v4053
        %4998 = vmatpush1.bf16.msra.mxu0 %v4052
        %4999 = vmatprep.subr.bf16.mxu0 %v4057
        %5000 = vmatpush1.bf16.msra.mxu0 %v4056
        %5001 = vmatprep.subr.bf16.mxu0 %v4061
        %5002 = vmatpush1.bf16.msra.mxu0 %v4060
        %5003 = vmatprep.subr.bf16.mxu0 %v4065
        %5004 = vmatpush1.bf16.msra.mxu0 %v4064
        %5005 = vmatprep.subr.bf16.mxu0 %v4069
        %5006 = vmatpush1.bf16.msra.mxu0 %v4068
        %5007 = vmatprep.subr.bf16.mxu0 %v4073
        %5008 = vmatpush1.bf16.msra.mxu0 %v4072
        %5009 = vmatprep.subr.bf16.mxu0 %v4077
        %5010 = vmatpush1.bf16.msra.mxu0 %v4076
        %5011 = vmatprep.subr.bf16.mxu0 %v4081
        %5012 = vmatpush1.bf16.msra.mxu0 %v4080
        %5013 = vmatprep.subr.bf16.mxu0 %v4085
        %5014 = vmatpush1.bf16.msra.mxu0 %v4084
        %5015 = vmatprep.subr.bf16.mxu0 %v4089
        %5016 = vmatpush1.bf16.msra.mxu0 %v4088
        %5017 = vmatprep.subr.bf16.mxu0 %v4093
        %5018 = vmatpush1.bf16.msra.mxu0 %v4092
        %5019 = vmatprep.mubr.bf16.mxu0 %v1761
        %5020 = vmatmul.mubr.bf16.gmra.mrb[0].mxu0 %v1760
        %v5021 = vpop.f32.mrb[0].mxu0
        %v5022 = vadd.f32 %v4981, %v5021
        %v5023 = vpop.f32.mrb[0].mxu0
        %v5024 = vadd.f32 %v4983, %v5023
        %v5025 = vpop.f32.mrb[0].mxu0
        %v5026 = vpop.f32.mrb[0].mxu0
        %5027 = vdwg.mxu0
        %5028 = vmatprep.subr.bf16.mxu0 %v4097
        %5029 = vmatpush1.bf16.msra.mxu0 %v4096
        %5030 = vmatprep.subr.bf16.mxu0 %v4101
        %5031 = vmatpush1.bf16.msra.mxu0 %v4100
        %5032 = vmatprep.subr.bf16.mxu0 %v4105
        %5033 = vmatpush1.bf16.msra.mxu0 %v4104
        %5034 = vmatprep.subr.bf16.mxu0 %v4109
        %5035 = vmatpush1.bf16.msra.mxu0 %v4108
        %5036 = vmatprep.subr.bf16.mxu0 %v4113
        %5037 = vmatpush1.bf16.msra.mxu0 %v4112
        %5038 = vmatprep.subr.bf16.mxu0 %v4117
        %5039 = vmatpush1.bf16.msra.mxu0 %v4116
        %5040 = vmatprep.subr.bf16.mxu0 %v4121
        %5041 = vmatpush1.bf16.msra.mxu0 %v4120
        %5042 = vmatprep.subr.bf16.mxu0 %v4125
        %5043 = vmatpush1.bf16.msra.mxu0 %v4124
        %5044 = vmatprep.subr.bf16.mxu0 %v4129
        %5045 = vmatpush1.bf16.msra.mxu0 %v4128
        %5046 = vmatprep.subr.bf16.mxu0 %v4133
        %5047 = vmatpush1.bf16.msra.mxu0 %v4132
        %5048 = vmatprep.subr.bf16.mxu0 %v4137
        %5049 = vmatpush1.bf16.msra.mxu0 %v4136
        %5050 = vmatprep.subr.bf16.mxu0 %v4141
        %5051 = vmatpush1.bf16.msra.mxu0 %v4140
        %5052 = vmatprep.subr.bf16.mxu0 %v4145
        %5053 = vmatpush1.bf16.msra.mxu0 %v4144
        %5054 = vmatprep.subr.bf16.mxu0 %v4149
        %5055 = vmatpush1.bf16.msra.mxu0 %v4148
        %5056 = vmatprep.subr.bf16.mxu0 %v4153
        %5057 = vmatpush1.bf16.msra.mxu0 %v4152
        %5058 = vmatprep.subr.bf16.mxu0 %v4157
        %5059 = vmatpush1.bf16.msra.mxu0 %v4156
        %5060 = vmatprep.mubr.bf16.mxu0 %v1763
        %5061 = vmatmul.mubr.bf16.gmra.mrb[0].mxu0 %v1762
        %v5062 = vpop.f32.mrb[0].mxu0
        %v5063 = vadd.f32 %v5022, %v5062
        %v5064 = vpop.f32.mrb[0].mxu0
        %v5065 = vadd.f32 %v5024, %v5064
        %v5066 = vpop.f32.mrb[0].mxu0
        %v5067 = vpop.f32.mrb[0].mxu0
        %5068 = vdwg.mxu0
        %5069 = vmatprep.subr.bf16.mxu0 %v4161
        %5070 = vmatpush1.bf16.msra.mxu0 %v4160
        %5071 = vmatprep.subr.bf16.mxu0 %v4165
        %5072 = vmatpush1.bf16.msra.mxu0 %v4164
        %5073 = vmatprep.subr.bf16.mxu0 %v4169
        %5074 = vmatpush1.bf16.msra.mxu0 %v4168
        %5075 = vmatprep.subr.bf16.mxu0 %v4173
        %5076 = vmatpush1.bf16.msra.mxu0 %v4172
        %5077 = vmatprep.subr.bf16.mxu0 %v4177
        %5078 = vmatpush1.bf16.msra.mxu0 %v4176
        %5079 = vmatprep.subr.bf16.mxu0 %v4181
        %5080 = vmatpush1.bf16.msra.mxu0 %v4180
        %5081 = vmatprep.subr.bf16.mxu0 %v4185
        %5082 = vmatpush1.bf16.msra.mxu0 %v4184
        %5083 = vmatprep.subr.bf16.mxu0 %v4189
        %5084 = vmatpush1.bf16.msra.mxu0 %v4188
        %5085 = vmatprep.subr.bf16.mxu0 %v4193
        %5086 = vmatpush1.bf16.msra.mxu0 %v4192
        %5087 = vmatprep.subr.bf16.mxu0 %v4197
        %5088 = vmatpush1.bf16.msra.mxu0 %v4196
        %5089 = vmatprep.subr.bf16.mxu0 %v4201
        %5090 = vmatpush1.bf16.msra.mxu0 %v4200
        %5091 = vmatprep.subr.bf16.mxu0 %v4205
        %5092 = vmatpush1.bf16.msra.mxu0 %v4204
        %5093 = vmatprep.subr.bf16.mxu0 %v4209
        %5094 = vmatpush1.bf16.msra.mxu0 %v4208
        %5095 = vmatprep.subr.bf16.mxu0 %v4213
        %5096 = vmatpush1.bf16.msra.mxu0 %v4212
        %5097 = vmatprep.subr.bf16.mxu0 %v4217
        %5098 = vmatpush1.bf16.msra.mxu0 %v4216
        %5099 = vmatprep.subr.bf16.mxu0 %v4221
        %5100 = vmatpush1.bf16.msra.mxu0 %v4220
        %5101 = vmatprep.mubr.bf16.mxu0 %v1765
        %5102 = vmatmul.mubr.bf16.gmra.mrb[0].mxu0 %v1764
        %v5103 = vpop.f32.mrb[0].mxu0
        %v5104 = vadd.f32 %v5063, %v5103
        %v5105 = vpop.f32.mrb[0].mxu0
        %v5106 = vadd.f32 %v5065, %v5105
        %v5107 = vpop.f32.mrb[0].mxu0
        %v5108 = vpop.f32.mrb[0].mxu0
        %5109 = vdwg.mxu0
        %5110 = vmatprep.subr.bf16.mxu0 %v4225
        %5111 = vmatpush1.bf16.msra.mxu0 %v4224
        %5112 = vmatprep.subr.bf16.mxu0 %v4229
        %5113 = vmatpush1.bf16.msra.mxu0 %v4228
        %5114 = vmatprep.subr.bf16.mxu0 %v4233
        %5115 = vmatpush1.bf16.msra.mxu0 %v4232
        %5116 = vmatprep.subr.bf16.mxu0 %v4237
        %5117 = vmatpush1.bf16.msra.mxu0 %v4236
        %5118 = vmatprep.subr.bf16.mxu0 %v4241
        %5119 = vmatpush1.bf16.msra.mxu0 %v4240
        %5120 = vmatprep.subr.bf16.mxu0 %v4245
        %5121 = vmatpush1.bf16.msra.mxu0 %v4244
        %5122 = vmatprep.subr.bf16.mxu0 %v4249
        %5123 = vmatpush1.bf16.msra.mxu0 %v4248
        %5124 = vmatprep.subr.bf16.mxu0 %v4253
        %5125 = vmatpush1.bf16.msra.mxu0 %v4252
        %5126 = vmatprep.subr.bf16.mxu0 %v4257
        %5127 = vmatpush1.bf16.msra.mxu0 %v4256
        %5128 = vmatprep.subr.bf16.mxu0 %v4261
        %5129 = vmatpush1.bf16.msra.mxu0 %v4260
        %5130 = vmatprep.subr.bf16.mxu0 %v4265
        %5131 = vmatpush1.bf16.msra.mxu0 %v4264
        %5132 = vmatprep.subr.bf16.mxu0 %v4269
        %5133 = vmatpush1.bf16.msra.mxu0 %v4268
        %5134 = vmatprep.subr.bf16.mxu0 %v4273
        %5135 = vmatpush1.bf16.msra.mxu0 %v4272
        %5136 = vmatprep.subr.bf16.mxu0 %v4277
        %5137 = vmatpush1.bf16.msra.mxu0 %v4276
        %5138 = vmatprep.subr.bf16.mxu0 %v4281
        %5139 = vmatpush1.bf16.msra.mxu0 %v4280
        %5140 = vmatprep.subr.bf16.mxu0 %v4285
        %5141 = vmatpush1.bf16.msra.mxu0 %v4284
        %5142 = vmatprep.mubr.bf16.mxu0 %v1767
        %5143 = vmatmul.mubr.bf16.gmra.mrb[0].mxu0 %v1766
        %v5144 = vpop.f32.mrb[0].mxu0
        %v5145 = vadd.f32 %v5104, %v5144
        %v5146 = vpop.f32.mrb[0].mxu0
        %v5147 = vadd.f32 %v5106, %v5146
        %v5148 = vpop.f32.mrb[0].mxu0
        %v5149 = vpop.f32.mrb[0].mxu0
        %5150 = vdwg.mxu0
        %5151 = vmatprep.subr.bf16.mxu0 %v4289
        %5152 = vmatpush1.bf16.msra.mxu0 %v4288
        %5153 = vmatprep.subr.bf16.mxu0 %v4293
        %5154 = vmatpush1.bf16.msra.mxu0 %v4292
        %5155 = vmatprep.subr.bf16.mxu0 %v4297
        %5156 = vmatpush1.bf16.msra.mxu0 %v4296
        %5157 = vmatprep.subr.bf16.mxu0 %v4301
        %5158 = vmatpush1.bf16.msra.mxu0 %v4300
        %5159 = vmatprep.subr.bf16.mxu0 %v4305
        %5160 = vmatpush1.bf16.msra.mxu0 %v4304
        %5161 = vmatprep.subr.bf16.mxu0 %v4309
        %5162 = vmatpush1.bf16.msra.mxu0 %v4308
        %5163 = vmatprep.subr.bf16.mxu0 %v4313
        %5164 = vmatpush1.bf16.msra.mxu0 %v4312
        %5165 = vmatprep.subr.bf16.mxu0 %v4317
        %5166 = vmatpush1.bf16.msra.mxu0 %v4316
        %5167 = vmatprep.subr.bf16.mxu0 %v4321
        %5168 = vmatpush1.bf16.msra.mxu0 %v4320
        %5169 = vmatprep.subr.bf16.mxu0 %v4325
        %5170 = vmatpush1.bf16.msra.mxu0 %v4324
        %5171 = vmatprep.subr.bf16.mxu0 %v4329
        %5172 = vmatpush1.bf16.msra.mxu0 %v4328
        %5173 = vmatprep.subr.bf16.mxu0 %v4333
        %5174 = vmatpush1.bf16.msra.mxu0 %v4332
        %5175 = vmatprep.subr.bf16.mxu0 %v4337
        %5176 = vmatpush1.bf16.msra.mxu0 %v4336
        %5177 = vmatprep.subr.bf16.mxu0 %v4341
        %5178 = vmatpush1.bf16.msra.mxu0 %v4340
        %5179 = vmatprep.subr.bf16.mxu0 %v4345
        %5180 = vmatpush1.bf16.msra.mxu0 %v4344
        %5181 = vmatprep.subr.bf16.mxu0 %v4349
        %5182 = vmatpush1.bf16.msra.mxu0 %v4348
        %5183 = vmatprep.mubr.bf16.mxu0 %v1769
        %5184 = vmatmul.mubr.bf16.gmra.mrb[0].mxu0 %v1768
        %v5185 = vpop.f32.mrb[0].mxu0
        %v5186 = vadd.f32 %v5145, %v5185
        %v5187 = vpop.f32.mrb[0].mxu0
        %v5188 = vadd.f32 %v5147, %v5187
        %v5189 = vpop.f32.mrb[0].mxu0
        %v5190 = vpop.f32.mrb[0].mxu0
        %5191 = vdwg.mxu0
        %5192 = vmatprep.subr.bf16.mxu0 %v3843
        %5193 = vmatpush1.bf16.msra.mxu0 %v3842
        %5194 = vmatprep.subr.bf16.mxu0 %v3847
        %5195 = vmatpush1.bf16.msra.mxu0 %v3846
        %5196 = vmatprep.subr.bf16.mxu0 %v3851
        %5197 = vmatpush1.bf16.msra.mxu0 %v3850
        %5198 = vmatprep.subr.bf16.mxu0 %v3855
        %5199 = vmatpush1.bf16.msra.mxu0 %v3854
        %5200 = vmatprep.subr.bf16.mxu0 %v3859
        %5201 = vmatpush1.bf16.msra.mxu0 %v3858
        %5202 = vmatprep.subr.bf16.mxu0 %v3863
        %5203 = vmatpush1.bf16.msra.mxu0 %v3862
        %5204 = vmatprep.subr.bf16.mxu0 %v3867
        %5205 = vmatpush1.bf16.msra.mxu0 %v3866
        %5206 = vmatprep.subr.bf16.mxu0 %v3871
        %5207 = vmatpush1.bf16.msra.mxu0 %v3870
        %5208 = vmatprep.subr.bf16.mxu0 %v3875
        %5209 = vmatpush1.bf16.msra.mxu0 %v3874
        %5210 = vmatprep.subr.bf16.mxu0 %v3879
        %5211 = vmatpush1.bf16.msra.mxu0 %v3878
        %5212 = vmatprep.subr.bf16.mxu0 %v3883
        %5213 = vmatpush1.bf16.msra.mxu0 %v3882
        %5214 = vmatprep.subr.bf16.mxu0 %v3887
        %5215 = vmatpush1.bf16.msra.mxu0 %v3886
        %5216 = vmatprep.subr.bf16.mxu0 %v3891
        %5217 = vmatpush1.bf16.msra.mxu0 %v3890
        %5218 = vmatprep.subr.bf16.mxu0 %v3895
        %5219 = vmatpush1.bf16.msra.mxu0 %v3894
        %5220 = vmatprep.subr.bf16.mxu0 %v3899
        %5221 = vmatpush1.bf16.msra.mxu0 %v3898
        %5222 = vmatprep.subr.bf16.mxu0 %v3903
        %5223 = vmatpush1.bf16.msra.mxu0 %v3902
        %5224 = vmatprep.mubr.bf16.mxu0 %v1755
        %5225 = vmatmul.mubr.bf16.gmra.mrb[0].mxu0 %v1754
        %v5226 = vpop.f32.mrb[0].mxu0
        %v5227 = vadd.f32 %v2295, %v5226
        %v5228 = vpop.f32.mrb[0].mxu0
        %v5229 = vadd.f32 %v2299, %v5228
        %v5230 = vpop.f32.mrb[0].mxu0
        %v5231 = vpop.f32.mrb[0].mxu0
        %5232 = vdwg.mxu0
        %5233 = vmatprep.subr.bf16.mxu0 %v3907
        %5234 = vmatpush1.bf16.msra.mxu0 %v3906
        %5235 = vmatprep.subr.bf16.mxu0 %v3911
        %5236 = vmatpush1.bf16.msra.mxu0 %v3910
        %5237 = vmatprep.subr.bf16.mxu0 %v3915
        %5238 = vmatpush1.bf16.msra.mxu0 %v3914
        %5239 = vmatprep.subr.bf16.mxu0 %v3919
        %5240 = vmatpush1.bf16.msra.mxu0 %v3918
        %5241 = vmatprep.subr.bf16.mxu0 %v3923
        %5242 = vmatpush1.bf16.msra.mxu0 %v3922
        %5243 = vmatprep.subr.bf16.mxu0 %v3927
        %5244 = vmatpush1.bf16.msra.mxu0 %v3926
        %5245 = vmatprep.subr.bf16.mxu0 %v3931
        %5246 = vmatpush1.bf16.msra.mxu0 %v3930
        %5247 = vmatprep.subr.bf16.mxu0 %v3935
        %5248 = vmatpush1.bf16.msra.mxu0 %v3934
        %5249 = vmatprep.subr.bf16.mxu0 %v3939
        %5250 = vmatpush1.bf16.msra.mxu0 %v3938
        %5251 = vmatprep.subr.bf16.mxu0 %v3943
        %5252 = vmatpush1.bf16.msra.mxu0 %v3942
        %5253 = vmatprep.subr.bf16.mxu0 %v3947
        %5254 = vmatpush1.bf16.msra.mxu0 %v3946
        %5255 = vmatprep.subr.bf16.mxu0 %v3951
        %5256 = vmatpush1.bf16.msra.mxu0 %v3950
        %5257 = vmatprep.subr.bf16.mxu0 %v3955
        %5258 = vmatpush1.bf16.msra.mxu0 %v3954
        %5259 = vmatprep.subr.bf16.mxu0 %v3959
        %5260 = vmatpush1.bf16.msra.mxu0 %v3958
        %5261 = vmatprep.subr.bf16.mxu0 %v3963
        %5262 = vmatpush1.bf16.msra.mxu0 %v3962
        %5263 = vmatprep.subr.bf16.mxu0 %v3967
        %5264 = vmatpush1.bf16.msra.mxu0 %v3966
        %5265 = vmatprep.mubr.bf16.mxu0 %v1757
        %5266 = vmatmul.mubr.bf16.gmra.mrb[0].mxu0 %v1756
        %v5267 = vpop.f32.mrb[0].mxu0
        %v5268 = vadd.f32 %v5227, %v5267
        %v5269 = vpop.f32.mrb[0].mxu0
        %v5270 = vadd.f32 %v5229, %v5269
        %v5271 = vpop.f32.mrb[0].mxu0
        %v5272 = vpop.f32.mrb[0].mxu0
        %5273 = vdwg.mxu0
        %5274 = vmatprep.subr.bf16.mxu0 %v3971
        %5275 = vmatpush1.bf16.msra.mxu0 %v3970
        %5276 = vmatprep.subr.bf16.mxu0 %v3975
        %5277 = vmatpush1.bf16.msra.mxu0 %v3974
        %5278 = vmatprep.subr.bf16.mxu0 %v3979
        %5279 = vmatpush1.bf16.msra.mxu0 %v3978
        %5280 = vmatprep.subr.bf16.mxu0 %v3983
        %5281 = vmatpush1.bf16.msra.mxu0 %v3982
        %5282 = vmatprep.subr.bf16.mxu0 %v3987
        %5283 = vmatpush1.bf16.msra.mxu0 %v3986
        %5284 = vmatprep.subr.bf16.mxu0 %v3991
        %5285 = vmatpush1.bf16.msra.mxu0 %v3990
        %5286 = vmatprep.subr.bf16.mxu0 %v3995
        %5287 = vmatpush1.bf16.msra.mxu0 %v3994
        %5288 = vmatprep.subr.bf16.mxu0 %v3999
        %5289 = vmatpush1.bf16.msra.mxu0 %v3998
        %5290 = vmatprep.subr.bf16.mxu0 %v4003
        %5291 = vmatpush1.bf16.msra.mxu0 %v4002
        %5292 = vmatprep.subr.bf16.mxu0 %v4007
        %5293 = vmatpush1.bf16.msra.mxu0 %v4006
        %5294 = vmatprep.subr.bf16.mxu0 %v4011
        %5295 = vmatpush1.bf16.msra.mxu0 %v4010
        %5296 = vmatprep.subr.bf16.mxu0 %v4015
        %5297 = vmatpush1.bf16.msra.mxu0 %v4014
        %5298 = vmatprep.subr.bf16.mxu0 %v4019
        %5299 = vmatpush1.bf16.msra.mxu0 %v4018
        %5300 = vmatprep.subr.bf16.mxu0 %v4023
        %5301 = vmatpush1.bf16.msra.mxu0 %v4022
        %5302 = vmatprep.subr.bf16.mxu0 %v4027
        %5303 = vmatpush1.bf16.msra.mxu0 %v4026
        %5304 = vmatprep.subr.bf16.mxu0 %v4031
        %5305 = vmatpush1.bf16.msra.mxu0 %v4030
        %5306 = vmatprep.mubr.bf16.mxu0 %v1759
        %5307 = vmatmul.mubr.bf16.gmra.mrb[0].mxu0 %v1758
        %v5308 = vpop.f32.mrb[0].mxu0
        %v5309 = vadd.f32 %v5268, %v5308
        %v5310 = vpop.f32.mrb[0].mxu0
        %v5311 = vadd.f32 %v5270, %v5310
        %v5312 = vpop.f32.mrb[0].mxu0
        %v5313 = vpop.f32.mrb[0].mxu0
        %5314 = vdwg.mxu0
        %5315 = vmatprep.subr.bf16.mxu0 %v4035
        %5316 = vmatpush1.bf16.msra.mxu0 %v4034
        %5317 = vmatprep.subr.bf16.mxu0 %v4039
        %5318 = vmatpush1.bf16.msra.mxu0 %v4038
        %5319 = vmatprep.subr.bf16.mxu0 %v4043
        %5320 = vmatpush1.bf16.msra.mxu0 %v4042
        %5321 = vmatprep.subr.bf16.mxu0 %v4047
        %5322 = vmatpush1.bf16.msra.mxu0 %v4046
        %5323 = vmatprep.subr.bf16.mxu0 %v4051
        %5324 = vmatpush1.bf16.msra.mxu0 %v4050
        %5325 = vmatprep.subr.bf16.mxu0 %v4055
        %5326 = vmatpush1.bf16.msra.mxu0 %v4054
        %5327 = vmatprep.subr.bf16.mxu0 %v4059
        %5328 = vmatpush1.bf16.msra.mxu0 %v4058
        %5329 = vmatprep.subr.bf16.mxu0 %v4063
        %5330 = vmatpush1.bf16.msra.mxu0 %v4062
        %5331 = vmatprep.subr.bf16.mxu0 %v4067
        %5332 = vmatpush1.bf16.msra.mxu0 %v4066
        %5333 = vmatprep.subr.bf16.mxu0 %v4071
        %5334 = vmatpush1.bf16.msra.mxu0 %v4070
        %5335 = vmatprep.subr.bf16.mxu0 %v4075
        %5336 = vmatpush1.bf16.msra.mxu0 %v4074
        %5337 = vmatprep.subr.bf16.mxu0 %v4079
        %5338 = vmatpush1.bf16.msra.mxu0 %v4078
        %5339 = vmatprep.subr.bf16.mxu0 %v4083
        %5340 = vmatpush1.bf16.msra.mxu0 %v4082
        %5341 = vmatprep.subr.bf16.mxu0 %v4087
        %5342 = vmatpush1.bf16.msra.mxu0 %v4086
        %5343 = vmatprep.subr.bf16.mxu0 %v4091
        %5344 = vmatpush1.bf16.msra.mxu0 %v4090
        %5345 = vmatprep.subr.bf16.mxu0 %v4095
        %5346 = vmatpush1.bf16.msra.mxu0 %v4094
        %5347 = vmatprep.mubr.bf16.mxu0 %v1761
        %5348 = vmatmul.mubr.bf16.gmra.mrb[0].mxu0 %v1760
        %v5349 = vpop.f32.mrb[0].mxu0
        %v5350 = vadd.f32 %v5309, %v5349
        %v5351 = vpop.f32.mrb[0].mxu0
        %v5352 = vadd.f32 %v5311, %v5351
        %v5353 = vpop.f32.mrb[0].mxu0
        %v5354 = vpop.f32.mrb[0].mxu0
        %5355 = vdwg.mxu0
        %5356 = vmatprep.subr.bf16.mxu0 %v4099
        %5357 = vmatpush1.bf16.msra.mxu0 %v4098
        %5358 = vmatprep.subr.bf16.mxu0 %v4103
        %5359 = vmatpush1.bf16.msra.mxu0 %v4102
        %5360 = vmatprep.subr.bf16.mxu0 %v4107
        %5361 = vmatpush1.bf16.msra.mxu0 %v4106
        %5362 = vmatprep.subr.bf16.mxu0 %v4111
        %5363 = vmatpush1.bf16.msra.mxu0 %v4110
        %5364 = vmatprep.subr.bf16.mxu0 %v4115
        %5365 = vmatpush1.bf16.msra.mxu0 %v4114
        %5366 = vmatprep.subr.bf16.mxu0 %v4119
        %5367 = vmatpush1.bf16.msra.mxu0 %v4118
        %5368 = vmatprep.subr.bf16.mxu0 %v4123
        %5369 = vmatpush1.bf16.msra.mxu0 %v4122
        %5370 = vmatprep.subr.bf16.mxu0 %v4127
        %5371 = vmatpush1.bf16.msra.mxu0 %v4126
        %5372 = vmatprep.subr.bf16.mxu0 %v4131
        %5373 = vmatpush1.bf16.msra.mxu0 %v4130
        %5374 = vmatprep.subr.bf16.mxu0 %v4135
        %5375 = vmatpush1.bf16.msra.mxu0 %v4134
        %5376 = vmatprep.subr.bf16.mxu0 %v4139
        %5377 = vmatpush1.bf16.msra.mxu0 %v4138
        %5378 = vmatprep.subr.bf16.mxu0 %v4143
        %5379 = vmatpush1.bf16.msra.mxu0 %v4142
        %5380 = vmatprep.subr.bf16.mxu0 %v4147
        %5381 = vmatpush1.bf16.msra.mxu0 %v4146
        %5382 = vmatprep.subr.bf16.mxu0 %v4151
        %5383 = vmatpush1.bf16.msra.mxu0 %v4150
        %5384 = vmatprep.subr.bf16.mxu0 %v4155
        %5385 = vmatpush1.bf16.msra.mxu0 %v4154
        %5386 = vmatprep.subr.bf16.mxu0 %v4159
        %5387 = vmatpush1.bf16.msra.mxu0 %v4158
        %5388 = vmatprep.mubr.bf16.mxu0 %v1763
        %5389 = vmatmul.mubr.bf16.gmra.mrb[0].mxu0 %v1762
        %v5390 = vpop.f32.mrb[0].mxu0
        %v5391 = vadd.f32 %v5350, %v5390
        %v5392 = vpop.f32.mrb[0].mxu0
        %v5393 = vadd.f32 %v5352, %v5392
        %v5394 = vpop.f32.mrb[0].mxu0
        %v5395 = vpop.f32.mrb[0].mxu0
        %5396 = vdwg.mxu0
        %5397 = vmatprep.subr.bf16.mxu0 %v4163
        %5398 = vmatpush1.bf16.msra.mxu0 %v4162
        %5399 = vmatprep.subr.bf16.mxu0 %v4167
        %5400 = vmatpush1.bf16.msra.mxu0 %v4166
        %5401 = vmatprep.subr.bf16.mxu0 %v4171
        %5402 = vmatpush1.bf16.msra.mxu0 %v4170
        %5403 = vmatprep.subr.bf16.mxu0 %v4175
        %5404 = vmatpush1.bf16.msra.mxu0 %v4174
        %5405 = vmatprep.subr.bf16.mxu0 %v4179
        %5406 = vmatpush1.bf16.msra.mxu0 %v4178
        %5407 = vmatprep.subr.bf16.mxu0 %v4183
        %5408 = vmatpush1.bf16.msra.mxu0 %v4182
        %5409 = vmatprep.subr.bf16.mxu0 %v4187
        %5410 = vmatpush1.bf16.msra.mxu0 %v4186
        %5411 = vmatprep.subr.bf16.mxu0 %v4191
        %5412 = vmatpush1.bf16.msra.mxu0 %v4190
        %5413 = vmatprep.subr.bf16.mxu0 %v4195
        %5414 = vmatpush1.bf16.msra.mxu0 %v4194
        %5415 = vmatprep.subr.bf16.mxu0 %v4199
        %5416 = vmatpush1.bf16.msra.mxu0 %v4198
        %5417 = vmatprep.subr.bf16.mxu0 %v4203
        %5418 = vmatpush1.bf16.msra.mxu0 %v4202
        %5419 = vmatprep.subr.bf16.mxu0 %v4207
        %5420 = vmatpush1.bf16.msra.mxu0 %v4206
        %5421 = vmatprep.subr.bf16.mxu0 %v4211
        %5422 = vmatpush1.bf16.msra.mxu0 %v4210
        %5423 = vmatprep.subr.bf16.mxu0 %v4215
        %5424 = vmatpush1.bf16.msra.mxu0 %v4214
        %5425 = vmatprep.subr.bf16.mxu0 %v4219
        %5426 = vmatpush1.bf16.msra.mxu0 %v4218
        %5427 = vmatprep.subr.bf16.mxu0 %v4223
        %5428 = vmatpush1.bf16.msra.mxu0 %v4222
        %5429 = vmatprep.mubr.bf16.mxu0 %v1765
        %5430 = vmatmul.mubr.bf16.gmra.mrb[0].mxu0 %v1764
        %v5431 = vpop.f32.mrb[0].mxu0
        %v5432 = vadd.f32 %v5391, %v5431
        %v5433 = vpop.f32.mrb[0].mxu0
        %v5434 = vadd.f32 %v5393, %v5433
        %v5435 = vpop.f32.mrb[0].mxu0
        %v5436 = vpop.f32.mrb[0].mxu0
        %5437 = vdwg.mxu0
        %5438 = vmatprep.subr.bf16.mxu0 %v4227
        %5439 = vmatpush1.bf16.msra.mxu0 %v4226
        %5440 = vmatprep.subr.bf16.mxu0 %v4231
        %5441 = vmatpush1.bf16.msra.mxu0 %v4230
        %5442 = vmatprep.subr.bf16.mxu0 %v4235
        %5443 = vmatpush1.bf16.msra.mxu0 %v4234
        %5444 = vmatprep.subr.bf16.mxu0 %v4239
        %5445 = vmatpush1.bf16.msra.mxu0 %v4238
        %5446 = vmatprep.subr.bf16.mxu0 %v4243
        %5447 = vmatpush1.bf16.msra.mxu0 %v4242
        %5448 = vmatprep.subr.bf16.mxu0 %v4247
        %5449 = vmatpush1.bf16.msra.mxu0 %v4246
        %5450 = vmatprep.subr.bf16.mxu0 %v4251
        %5451 = vmatpush1.bf16.msra.mxu0 %v4250
        %5452 = vmatprep.subr.bf16.mxu0 %v4255
        %5453 = vmatpush1.bf16.msra.mxu0 %v4254
        %5454 = vmatprep.subr.bf16.mxu0 %v4259
        %5455 = vmatpush1.bf16.msra.mxu0 %v4258
        %5456 = vmatprep.subr.bf16.mxu0 %v4263
        %5457 = vmatpush1.bf16.msra.mxu0 %v4262
        %5458 = vmatprep.subr.bf16.mxu0 %v4267
        %5459 = vmatpush1.bf16.msra.mxu0 %v4266
        %5460 = vmatprep.subr.bf16.mxu0 %v4271
        %5461 = vmatpush1.bf16.msra.mxu0 %v4270
        %5462 = vmatprep.subr.bf16.mxu0 %v4275
        %5463 = vmatpush1.bf16.msra.mxu0 %v4274
        %5464 = vmatprep.subr.bf16.mxu0 %v4279
        %5465 = vmatpush1.bf16.msra.mxu0 %v4278
        %5466 = vmatprep.subr.bf16.mxu0 %v4283
        %5467 = vmatpush1.bf16.msra.mxu0 %v4282
        %5468 = vmatprep.subr.bf16.mxu0 %v4287
        %5469 = vmatpush1.bf16.msra.mxu0 %v4286
        %5470 = vmatprep.mubr.bf16.mxu0 %v1767
        %5471 = vmatmul.mubr.bf16.gmra.mrb[0].mxu0 %v1766
        %v5472 = vpop.f32.mrb[0].mxu0
        %v5473 = vadd.f32 %v5432, %v5472
        %v5474 = vpop.f32.mrb[0].mxu0
        %v5475 = vadd.f32 %v5434, %v5474
        %v5476 = vpop.f32.mrb[0].mxu0
        %v5477 = vpop.f32.mrb[0].mxu0
        %5478 = vdwg.mxu0
        %5479 = vmatprep.subr.bf16.mxu0 %v4291
        %5480 = vmatpush1.bf16.msra.mxu0 %v4290
        %5481 = vmatprep.subr.bf16.mxu0 %v4295
        %5482 = vmatpush1.bf16.msra.mxu0 %v4294
        %5483 = vmatprep.subr.bf16.mxu0 %v4299
        %5484 = vmatpush1.bf16.msra.mxu0 %v4298
        %5485 = vmatprep.subr.bf16.mxu0 %v4303
        %5486 = vmatpush1.bf16.msra.mxu0 %v4302
        %5487 = vmatprep.subr.bf16.mxu0 %v4307
        %5488 = vmatpush1.bf16.msra.mxu0 %v4306
        %5489 = vmatprep.subr.bf16.mxu0 %v4311
        %5490 = vmatpush1.bf16.msra.mxu0 %v4310
        %5491 = vmatprep.subr.bf16.mxu0 %v4315
        %5492 = vmatpush1.bf16.msra.mxu0 %v4314
        %5493 = vmatprep.subr.bf16.mxu0 %v4319
        %5494 = vmatpush1.bf16.msra.mxu0 %v4318
        %5495 = vmatprep.subr.bf16.mxu0 %v4323
        %5496 = vmatpush1.bf16.msra.mxu0 %v4322
        %5497 = vmatprep.subr.bf16.mxu0 %v4327
        %5498 = vmatpush1.bf16.msra.mxu0 %v4326
        %5499 = vmatprep.subr.bf16.mxu0 %v4331
        %5500 = vmatpush1.bf16.msra.mxu0 %v4330
        %5501 = vmatprep.subr.bf16.mxu0 %v4335
        %5502 = vmatpush1.bf16.msra.mxu0 %v4334
        %5503 = vmatprep.subr.bf16.mxu0 %v4339
        %5504 = vmatpush1.bf16.msra.mxu0 %v4338
        %5505 = vmatprep.subr.bf16.mxu0 %v4343
        %5506 = vmatpush1.bf16.msra.mxu0 %v4342
        %5507 = vmatprep.subr.bf16.mxu0 %v4347
        %5508 = vmatpush1.bf16.msra.mxu0 %v4346
        %5509 = vmatprep.subr.bf16.mxu0 %v4351
        %5510 = vmatpush1.bf16.msra.mxu0 %v4350
        %5511 = vmatprep.mubr.bf16.mxu0 %v1769
        %5512 = vmatmul.mubr.bf16.gmra.mrb[0].mxu0 %v1768
        %v5513 = vpop.f32.mrb[0].mxu0
        %v5514 = vadd.f32 %v5473, %v5513
        %v5515 = vpop.f32.mrb[0].mxu0
        %v5516 = vadd.f32 %v5475, %v5515
        %v5517 = vpop.f32.mrb[0].mxu0
        %v5518 = vpop.f32.mrb[0].mxu0
        %5519 = vdwg.mxu0
        %vm5520 = vcmp.gt.f32.partialorder %v5186, 0.0
        %vm5521 = vcmp.gt.f32.partialorder %v5188, 0.0
        %vm5522 = vcmp.gt.f32.partialorder %v5514, 0.0
        %vm5523 = vcmp.gt.f32.partialorder %v5516, 0.0
        %v5524 = vmul.f32 %v5186, 1.442695
        %v5525 = vpow.pop %v5524
        %v5526 = vmul.f32 %v5188, 1.442695
        %v5527 = vpow.pop %v5526
        %v5528 = vmul.f32 %v5514, 1.442695
        %v5529 = vpow.pop %v5528
        %v5530 = vmul.f32 %v5516, 1.442695
        %v5531 = vpow.pop %v5530
        %v5532 = vsub.f32 %v5525, 1.0
        %v5533 = vsub.f32 %v5527, 1.0
        %v5534 = vsub.f32 %v5529, 1.0
        %v5535 = vsub.f32 %v5531, 1.0
        %v5536 = vmul.f32 %v5532, 1.6732632
        %v5537 = vmul.f32 %v5533, 1.6732632
        %v5538 = vmul.f32 %v5534, 1.6732632
        %v5539 = vmul.f32 %v5535, 1.6732632
        %v5540 = vsel %vm5520, %v5186, %v5536
        %v5541 = vsel %vm5521, %v5188, %v5537
        %v5542 = vsel %vm5522, %v5514, %v5538
        %v5543 = vsel %vm5523, %v5516, %v5539
        %v5544 = vmul.f32 %v5540, 1.050701
        %v5545 = vmul.f32 %v5541, 1.050701
        %v5546 = vmul.f32 %v5542, 1.050701
        %v5547 = vmul.f32 %v5543, 1.050701
        %v5548 = vld [vmem:[%s371] sm:$0xf]
        %v5550 = vlaneseq
        %v5551 = vshrl.u32 %v5550, 7
        %v5552 = vsub.s32 0, %v5551
        %v5553 = vrot.slane %v5548, %v5552
        %v5554 = vlaneseq
        %v5555 = vshrl.u32 %v5554, 7
        %v5556 = vsub.s32 1, %v5555
        %v5557 = vrot.slane %v5548, %v5556
        %v5558 = vlaneseq
        %v5559 = vshrl.u32 %v5558, 7
        %v5560 = vsub.s32 2, %v5559
        %v5561 = vrot.slane %v5548, %v5560
        %v5562 = vlaneseq
        %v5563 = vshrl.u32 %v5562, 7
        %v5564 = vsub.s32 3, %v5563
        %v5565 = vrot.slane %v5548, %v5564
        %v5570 = vmul.f32 %v5544, %v5553
        %v5571 = vmul.f32 %v5545, %v5557
        %v5572 = vmul.f32 %v5546, %v5561
        %v5573 = vmul.f32 %v5547, %v5565
        %v5574 = vadd.f32 %v5570, %v5571
        %v5575 = vadd.f32 %v5574, %v5572
        %v5576 = vadd.f32 %v5575, %v5573
        %5577 = vadd.xlane.f32.xlu0 %v5576
        %v5578 = vpop.xlane.xlu0 %5577
        %v5579 = vld [vmem:[%s421] sm:$0xff]
        %v5580 = vadd.f32 %v5579, %v5578
        %vm5581 = vcmask 7168
        %5582 = vst.msk [vmem:[%s421] sm:$0xff] %vm5581, %v5580
        %p5583 = scmp.lt.s32.totalorder %s29, 1
        %s5584 = scalar_select %p5583, %s29, 1
        %s5585 = smul.addr %s5584, 8
        %s5586 = scalar_lea.vmem %s6, %s5585
        // Predicated region
        $region73: #{tpu_custom_call.1} parent=43 // pred_check
          %p5587 = pneg %p208
        $region74: #{tpu_custom_call.1} parent=43 // pred_check_branch
          %5589 = sbr.rel (%p5587) target = $region76
        $region75: #{tpu_custom_call.1} parent=43 // pred_region
          _
        $region76: #{tpu_custom_call.1} parent=43 // pred_fallthru
          _
      $region44: #{tpu_custom_call.1} parent=5 // pred_fallthru
        _
      %p5590 = scmp.le.s32.totalorder 2, %s20
      // Predicated region
      $region77: #{tpu_custom_call.1} parent=5 // pred_check
        %p5591 = pneg %p5590
      $region78: #{tpu_custom_call.1} parent=5 // pred_check_branch
        %5593 = sbr.rel (%p5591) target = $region80
      $region79: #{tpu_custom_call.1} parent=5 // pred_region
        %s5594 = ssub.s32 %s20, 2
        // Predicated region
        $region81: #{tpu_custom_call.1} parent=79 // pred_check
          %p5595 = pneg %p214
        $region82: #{tpu_custom_call.1} parent=79 // pred_check_branch
          %5597 = sbr.rel (%p5595) target = $region84
        $region83: #{tpu_custom_call.1} parent=79 // pred_region
          %p5598 = scmp.lt.s32.totalorder %s31, 1
          %s5599 = scalar_select %p5598, %s31, 1
          %s5600 = smul.addr %s5599, 8
          %s5601 = scalar_lea.vmem %s6, %s5600
        $region84: #{tpu_custom_call.1} parent=79 // pred_fallthru
          _
      $region80: #{tpu_custom_call.1} parent=5 // pred_fallthru
        _
    $region6: #{tpu_custom_call.1} parent=1 // loop_footer
      %s24 = sadd.s32 1, %s20
    $region7: #{tpu_custom_call.1} parent=1 // loop_footer_branch
      %19 = sbr.rel target = $region3
    $region8: #{tpu_custom_call.1} parent=1 // loop_exit
      _
    %5602 = vsyncpa [#allocation4], 1
    %s5603 = scalar_lea.sflag [#allocation4], 1
    %5604 = vsyncpa %s5603, 1
    %5605 = vsyncpa [#allocation6], 1
    %5606 = vsyncpa [#allocation9], 1
    %s5607 = scalar_lea.sflag [#allocation9], 1
    %5608 = vsyncpa %s5607, 1
    %5609 = vsyncpa [#allocation12], 1
    %s5610 = scalar_lea.sflag [#allocation12], 1
    %5611 = vsyncpa %s5610, 1

</llo_original>
